<compile_context>
chip_gen: v5e
topology: v5e:2x2
jax: 0.10.0
libtpu: 0.0.40
codegen_flags: <defaults>
</compile_context>

<pallas_src>
import functools
import math

import jax
import jax.numpy as jnp
from jax.experimental import pallas as pl
from jax.experimental.pallas import tpu as pltpu


_INV_SQRT2 = 1.0 / math.sqrt(2.0)


def _gelu(v, approximate):
    if approximate:
        # tanh GELU lands in the EUP slot (frees VALU on v6e/v7x after bf16).
        return jax.nn.gelu(v, approximate=True)
    # nn.GELU() default = exact erf-based GELU.
    return 0.5 * v * (1.0 + jax.lax.erf(v * _INV_SQRT2))


# ---------------------------------------------------------------- kernels ---

def _mlp_resident_kernel(x_ref, w1_ref, w2_ref, o_ref, *, approximate_gelu):
    """Both weight matrices VMEM-resident; one row-tile of x/out per step."""
    cdt = w1_ref.dtype                       # MXU operand dtype (bf16 default)
    x = x_ref[...].astype(cdt)
    h = jnp.dot(x, w1_ref[...], preferred_element_type=jnp.float32)
    h = _gelu(h, approximate_gelu)
    y = jnp.dot(h.astype(cdt), w2_ref[...], preferred_element_type=jnp.float32)
    o_ref[...] = y.astype(o_ref.dtype)


def _mlp_ktiled_kernel(x_ref, w1_ref, w2_ref, o_ref, acc_ref, *,
                       approximate_gelu):
    """Hidden-axis tiled fallback: accumulate y over hidden chunks in f32."""
    k = pl.program_id(1)

    @pl.when(k == 0)
    def _():
        acc_ref[...] = jnp.zeros_like(acc_ref)

    cdt = w1_ref.dtype
    x = x_ref[...].astype(cdt)
    h = jnp.dot(x, w1_ref[...], preferred_element_type=jnp.float32)
    h = _gelu(h, approximate_gelu)
    acc_ref[...] += jnp.dot(h.astype(cdt), w2_ref[...],
                            preferred_element_type=jnp.float32)

    @pl.when(k == pl.num_programs(1) - 1)
    def _():
        o_ref[...] = acc_ref[...].astype(o_ref.dtype)


# ---------------------------------------------------------------- wrapper ---

def _pick_row_tile(m):
    for tm in (512, 256, 128, 64, 32, 16, 8):
        if tm <= m and m % tm == 0:
            return tm
    return m                                   # tiny / ragged -> single block


def _pick_hidden_tile(hidden):
    for tk in (512, 256, 128):
        if tk <= hidden and hidden % tk == 0:
            return tk
    return hidden


def _vmem_budget(terms):
    need = int(sum(terms) * 1.5) + (1 << 20)   # 50% headroom + 1 MiB slack
    return max(16 << 20, min(need, 64 << 20))  # clamp to v7x physical VMEM


def mlp_forward(x, w1, w2, *, compute_dtype=jnp.bfloat16,
                approximate_gelu=False, row_tile=None, hidden_tile=None,
                force_ktiled=False):
    """MLP forward.

    x  : (..., dim)
    w1 : (dim, hidden)  == torch weight1.T   (Linear dim -> hidden, no bias)
    w2 : (hidden, dim)  == torch weight2.T   (Linear hidden -> dim, no bias)
    Dropout (p=0.0 / inference) is the identity and therefore omitted.
    """
    dim = x.shape[-1]
    hidden = w1.shape[1]
    assert w1.shape == (dim, hidden) and w2.shape == (hidden, dim)

    lead = x.shape[:-1]
    m = math.prod(lead) if lead else 1
    x2 = x.reshape(m, dim)

    tm = row_tile if row_tile is not None else _pick_row_tile(m)
    assert m % tm == 0, "row count must be a multiple of the row tile"
    grid_rows = m // tm
    # Only shard across TensorCores when each core gets a real pipeline.
    row_sem = "parallel" if grid_rows >= 8 else "arbitrary"

    # In production these would already live in HBM as bf16.
    w1c = w1.astype(compute_dtype)
    w2c = w2.astype(compute_dtype)
    wbytes = jnp.dtype(compute_dtype).itemsize
    xbytes = x.dtype.itemsize
    obytes = x.dtype.itemsize

    flops = 4 * m * dim * hidden
    bytes_accessed = m * dim * (xbytes + obytes) + 2 * dim * hidden * wbytes
    cost = pl.CostEstimate(flops=flops, transcendentals=m * hidden,
                           bytes_accessed=bytes_accessed)

    kernel_kw = dict(approximate_gelu=approximate_gelu)
    weight_bytes = 2 * dim * hidden * wbytes
    use_resident = (not force_ktiled) and weight_bytes <= (20 << 20)

    if use_resident:
        vmem_limit = _vmem_budget([
            2 * tm * dim * xbytes,          # double-buffered x tiles
            2 * tm * dim * obytes,          # double-buffered out tiles
            2 * weight_bytes,               # resident weights (conservative)
            tm * hidden * 4,                # h in f32
            tm * hidden * wbytes,           # h cast to compute dtype
            tm * dim * 4,                   # y before cast
        ])
        out = pl.pallas_call(
            functools.partial(_mlp_resident_kernel, **kernel_kw),
            out_shape=jax.ShapeDtypeStruct((m, dim), x.dtype),
            grid=(grid_rows,),
            in_specs=[
                pl.BlockSpec((tm, dim), lambda i: (i, 0)),      # stream x rows
                pl.BlockSpec((dim, hidden), lambda i: (0, 0)),  # resident W1
                pl.BlockSpec((hidden, dim), lambda i: (0, 0)),  # resident W2
            ],
            out_specs=pl.BlockSpec((tm, dim), lambda i: (i, 0)),
            compiler_params=pltpu.CompilerParams(
                dimension_semantics=(row_sem,),
                vmem_limit_bytes=vmem_limit),
            cost_estimate=cost,
        )(x2, w1c, w2c)
    else:
        tk = hidden_tile if hidden_tile is not None else _pick_hidden_tile(hidden)
        assert hidden % tk == 0, "hidden must be a multiple of the hidden tile"
        vmem_limit = _vmem_budget([
            2 * tm * dim * xbytes,
            2 * tm * dim * obytes,
            2 * dim * tk * wbytes,          # double-buffered W1 chunk
            2 * tk * dim * wbytes,          # double-buffered W2 chunk
            tm * dim * 4,                   # f32 accumulator scratch
            tm * tk * 4,                    # h in f32
            tm * tk * wbytes,               # h cast
        ])
        out = pl.pallas_call(
            functools.partial(_mlp_ktiled_kernel, **kernel_kw),
            out_shape=jax.ShapeDtypeStruct((m, dim), x.dtype),
            grid=(grid_rows, hidden // tk),           # reduction axis last
            in_specs=[
                pl.BlockSpec((tm, dim), lambda i, k: (i, 0)),
                pl.BlockSpec((dim, tk), lambda i, k: (0, k)),
                pl.BlockSpec((tk, dim), lambda i, k: (k, 0)),
            ],
            out_specs=pl.BlockSpec((tm, dim), lambda i, k: (i, 0)),
            scratch_shapes=[pltpu.VMEM((tm, dim), jnp.float32)],
            compiler_params=pltpu.CompilerParams(
                dimension_semantics=(row_sem, "arbitrary"),
                vmem_limit_bytes=vmem_limit),
            cost_estimate=cost,
        )(x2, w1c, w2c)

    return out.reshape(*lead, dim)


def mlp_ref(x, w1, w2):
    """Pure-JAX reference (exact GELU, highest-precision matmul)."""
    h = jax.nn.gelu(
        jnp.dot(x, w1, precision=jax.lax.Precision.HIGHEST), approximate=False)
    return jnp.dot(h, w2, precision=jax.lax.Precision.HIGHEST)


if __name__ == "__main__":
    # Lane-dense small shapes: B x S tokens of width dim, hidden = 2*dim.
    B, S, DIM, HIDDEN = 2, 128, 128, 256

    key = jax.random.PRNGKey(0)
    kx, k1, k2 = jax.random.split(key, 3)

    x = jax.random.normal(kx, (B, S, DIM), jnp.float32)

    # trunc_normal_(std=0.02, a=-0.02, b=0.02); PyTorch Linear weight is
    # (out, in).  Store pre-transposed to (in, out) so the kernel does x @ W.
    w1_torch = 0.02 * jax.random.truncated_normal(
        k1, -1.0, 1.0, (HIDDEN, DIM), jnp.float32)   # (out, in)
    w2_torch = 0.02 * jax.random.truncated_normal(
        k2, -1.0, 1.0, (DIM, HIDDEN), jnp.float32)   # (out, in)
    w1 = w1_torch.T   # (DIM, HIDDEN)
    w2 = w2_torch.T   # (HIDDEN, DIM)

    ref = mlp_ref(x, w1, w2)

    # 1) f32 path, exact GELU: proves bit-level-close correctness.
    out_f32 = jax.block_until_ready(
        mlp_forward(x, w1, w2, compute_dtype=jnp.float32))
    assert out_f32.shape == (B, S, DIM)
    assert jnp.allclose(out_f32, ref, atol=1e-4, rtol=1e-4), "f32 path mismatch"

    # 2) bf16 operands (default fast path), exact GELU, resident weights.
    out_bf16 = jax.block_until_ready(mlp_forward(x, w1, w2))
    assert jnp.allclose(out_bf16, ref, atol=1e-3, rtol=2e-2), "bf16 path mismatch"

    # 3) Forced hidden-axis (K) tiled fallback (v7x VMEM-limited regime),
    #    exercising the f32 accumulator + pl.when init/finalize path.
    out_kt = jax.block_until_ready(
        mlp_forward(x, w1, w2, force_ktiled=True, hidden_tile=128))
    assert jnp.allclose(out_kt, ref, atol=1e-3, rtol=2e-2), "K-tiled path mismatch"

    # 4) tanh-approximate GELU option (EUP slot); slightly different numerics.
    out_tanh = jax.block_until_ready(
        mlp_forward(x, w1, w2, approximate_gelu=True))
    assert jnp.allclose(out_tanh, ref, atol=2e-3, rtol=3e-2), "tanh-GELU mismatch"

    print("KERNEL_OK")
</pallas_src>

<mosaic_0001>
module attributes {stable_mosaic.version = 11 : i64} {
  func.func @_mlp_resident_kernel(%arg0: i32, %arg1: memref<256x128xf32, #tpu.memory_space<vmem>>, %arg2: memref<128x256xf32, #tpu.memory_space<vmem>>, %arg3: memref<256x128xf32, #tpu.memory_space<vmem>>, %arg4: memref<256x128xf32, #tpu.memory_space<vmem>>) attributes {dimension_semantics = [#tpu.dimension_semantics<arbitrary>], iteration_bounds = array<i64: 1>, scalar_prefetch = 0 : i64, scratch_operands = 0 : i64, tpu.core_type = #tpu.core_type<tc>, window_params = [{transform_indices = @transform_0, window_bounds = array<i64: 256, 128>}, {pipeline_mode = #tpu.pipeline_mode<synchronous>, transform_indices = @transform_1, window_bounds = array<i64: 128, 256>}, {pipeline_mode = #tpu.pipeline_mode<synchronous>, transform_indices = @transform_2, window_bounds = array<i64: 256, 128>}, {transform_indices = @transform_3, window_bounds = array<i64: 256, 128>}]} {
    %c0 = arith.constant 0 : index
    %c0_0 = arith.constant 0 : index
    %0 = vector.load %arg1[%c0, %c0_0] : memref<256x128xf32, #tpu.memory_space<vmem>>, vector<256x128xf32>
    %c0_1 = arith.constant 0 : index
    %c0_2 = arith.constant 0 : index
    %1 = vector.load %arg2[%c0_1, %c0_2] : memref<128x256xf32, #tpu.memory_space<vmem>>, vector<128x256xf32>
    %cst = arith.constant dense<0.000000e+00> : vector<256x256xf32>
    %2 = tpu.matmul %0, %1, %cst {dimension_numbers = #tpu.dot_dimension_numbers<[1], [0], [0], [1], [0, 0, 1, 1], [], []>} : vector<256x128xf32>, vector<128x256xf32>, vector<256x256xf32> -> vector<256x256xf32>
    %cst_3 = arith.constant 5.000000e-01 : f32
    %3 = vector.broadcast %cst_3 : f32 to vector<256x256xf32>
    %4 = arith.mulf %3, %2 : vector<256x256xf32>
    %cst_4 = arith.constant 0.707106769 : f32
    %5 = vector.broadcast %cst_4 : f32 to vector<256x256xf32>
    %6 = arith.mulf %2, %5 : vector<256x256xf32>
    %7 = math.erf %6 : vector<256x256xf32>
    %cst_5 = arith.constant 1.000000e+00 : f32
    %8 = vector.broadcast %cst_5 : f32 to vector<256x256xf32>
    %9 = arith.addf %8, %7 : vector<256x256xf32>
    %10 = arith.mulf %4, %9 : vector<256x256xf32>
    %c0_6 = arith.constant 0 : index
    %c0_7 = arith.constant 0 : index
    %11 = vector.load %arg3[%c0_6, %c0_7] : memref<256x128xf32, #tpu.memory_space<vmem>>, vector<256x128xf32>
    %cst_8 = arith.constant dense<0.000000e+00> : vector<256x128xf32>
    %12 = tpu.matmul %10, %11, %cst_8 {dimension_numbers = #tpu.dot_dimension_numbers<[1], [0], [0], [1], [0, 0, 1, 1], [], []>} : vector<256x256xf32>, vector<256x128xf32>, vector<256x128xf32> -> vector<256x128xf32>
    %c0_9 = arith.constant 0 : index
    %c0_10 = arith.constant 0 : index
    %13 = vector.load %arg4[%c0_9, %c0_10] : memref<256x128xf32, #tpu.memory_space<vmem>>, vector<256x128xf32>
    tpu.vector_store %arg4[%c0_9, %c0_10], %12 {strides = array<i32>} : memref<256x128xf32, #tpu.memory_space<vmem>>, vector<256x128xf32>,
    return
  }
  func.func @transform_0(%arg0: i32) -> (i32, i32) {
    %c0_i32 = arith.constant 0 : i32
    %c0_i32_0 = arith.constant 0 : i32
    return %arg0, %c0_i32 : i32, i32
  }
  func.func @transform_1(%arg0: i32) -> (i32, i32) {
    %c0_i32 = arith.constant 0 : i32
    %c0_i32_0 = arith.constant 0 : i32
    %c0_i32_1 = arith.constant 0 : i32
    return %c0_i32, %c0_i32_0 : i32, i32
  }
  func.func @transform_2(%arg0: i32) -> (i32, i32) {
    %c0_i32 = arith.constant 0 : i32
    %c0_i32_0 = arith.constant 0 : i32
    %c0_i32_1 = arith.constant 0 : i32
    return %c0_i32, %c0_i32_0 : i32, i32
  }
  func.func @transform_3(%arg0: i32) -> (i32, i32) {
    %c0_i32 = arith.constant 0 : i32
    %c0_i32_0 = arith.constant 0 : i32
    return %arg0, %c0_i32 : i32, i32
  }
}

</mosaic_0001>

<llo_original>
// kernel: tpu_custom_call.1
$region0: #{tpu_custom_call.1}
  #allocation0 [shape = 'u32[]', space=smem, size = 0x4, offset = 0x4, fixed_abs, tag = 'smem constant byte address 0x4 - core index']
  #allocation1 [shape = 'u32[72,128]{1,0:T(1,128)}', space=vmem, size = 0x9000, scoped, tag = 'internal scratch']
  %s0 = inlined_call_operand.hbm [shape: f32[256,128], index: 0, kind: input, shape index: {}]
  %s1 = inlined_call_operand.hbm [shape: f32[128,256], index: 1, kind: input, shape index: {}]
  %s2 = inlined_call_operand.hbm [shape: f32[256,128], index: 2, kind: input, shape index: {}]
  %s3 = inlined_call_operand.hbm [shape: f32[256,128], index: 3, kind: output, shape index: {}]
  %s4 = sld [smem:[#allocation0]]
  $region34: #{tpu_custom_call.1} parent=0
    _
  %s6 = ssub.s32 1, %s4
  %s7 = scalar_select 0, %s6, %s4
  $region1: #{tpu_custom_call.1} parent=0
    #allocation2 [shape = 'u8[131072]{0}', space=vmem, size = 0x20000, scoped, tag = 'input window, operand 0, single buffered']
    #allocation3 [shape = 's32[1]{0}', space=sflag, size = 0x4, scoped, tag = 'scoped memory for tpu_custom_call.1']
    #allocation4 [shape = 's32[1]{0}', space=sflag, size = 0x4, scoped, tag = 'scoped memory for tpu_custom_call.1']
    #allocation5 [shape = 'u8[131072]{0}', space=vmem, size = 0x20000, scoped, tag = 'input window, operand 1, single buffered']
    #allocation6 [shape = 's32[1]{0}', space=sflag, size = 0x4, scoped, tag = 'scoped memory for tpu_custom_call.1']
    #allocation7 [shape = 'u8[131072]{0}', space=vmem, size = 0x20000, scoped, tag = 'input window, operand 2, single buffered']
    #allocation8 [shape = 'u8[131072]{0}', space=vmem, size = 0x20000, scoped, tag = 'output window, operand 0, single buffered']
    %8 = vsyncpa [#allocation3], 0
    %9 = vsyncpa [#allocation6], 0
    %10 = vsyncpa [#allocation4], 0
    // Predicated region
    $region2: #{tpu_custom_call.1} parent=1 // pred_check
      _
    $region3: #{tpu_custom_call.1} parent=1 // pred_check_branch
      %12 = sbr.rel (0) target = $region5
    $region4: #{tpu_custom_call.1} parent=1 // pred_region
      %14 = vsyncadd [#allocation3], 0
      %s15 = sshll.u32 %s0, 4
      %s16 = int_to_ptr.hbm [resolvable:$true] %s15
      %s17 = sshll.u32 [#allocation2], 4
      %s18 = int_to_ptr.vmem [resolvable:$true] %s17
      %23 = dma.hbm_to_vmem [thread:$0]  %s16, 4096, %s18, [#allocation3], 128, 128, 8
    $region5: #{tpu_custom_call.1} parent=1 // pred_fallthru
      _
    // Predicated region
    $region6: #{tpu_custom_call.1} parent=1 // pred_check
      _
    $region7: #{tpu_custom_call.1} parent=1 // pred_check_branch
      %25 = sbr.rel (0) target = $region9
    $region8: #{tpu_custom_call.1} parent=1 // pred_region
      %27 = vsyncadd [#allocation6], 0
      %s28 = sshll.u32 %s1, 4
      %s29 = int_to_ptr.hbm [resolvable:$true] %s28
      %s30 = sshll.u32 [#allocation5], 4
      %s31 = int_to_ptr.vmem [resolvable:$true] %s30
      %36 = dma.hbm_to_vmem [thread:$0]  %s29, 4096, %s31, [#allocation6], 256, 256, 16
    $region9: #{tpu_custom_call.1} parent=1 // pred_fallthru
      _
    // Predicated region
    $region10: #{tpu_custom_call.1} parent=1 // pred_check
      _
    $region11: #{tpu_custom_call.1} parent=1 // pred_check_branch
      %38 = sbr.rel (0) target = $region13
    $region12: #{tpu_custom_call.1} parent=1 // pred_region
      %40 = vsyncadd [#allocation6], 0
      %s41 = sshll.u32 %s2, 4
      %s42 = int_to_ptr.hbm [resolvable:$true] %s41
      %s43 = sshll.u32 [#allocation7], 4
      %s44 = int_to_ptr.vmem [resolvable:$true] %s43
      %49 = dma.hbm_to_vmem [thread:$0]  %s42, 4096, %s44, [#allocation6], 128, 128, 8
    $region13: #{tpu_custom_call.1} parent=1 // pred_fallthru
      _
    // Predicated region
    $region14: #{tpu_custom_call.1} parent=1 // pred_check
      _
    $region15: #{tpu_custom_call.1} parent=1 // pred_check_branch
      %51 = sbr.rel (0) target = $region17
    $region16: #{tpu_custom_call.1} parent=1 // pred_region
      %53 = dma.done [#allocation3], 4096
    $region17: #{tpu_custom_call.1} parent=1 // pred_fallthru
      _
    // Predicated region
    $region18: #{tpu_custom_call.1} parent=1 // pred_check
      _
    $region19: #{tpu_custom_call.1} parent=1 // pred_check_branch
      %55 = sbr.rel (0) target = $region21
    $region20: #{tpu_custom_call.1} parent=1 // pred_region
      %57 = dma.done [#allocation6], 4096
    $region21: #{tpu_custom_call.1} parent=1 // pred_fallthru
      _
    // Predicated region
    $region22: #{tpu_custom_call.1} parent=1 // pred_check
      _
    $region23: #{tpu_custom_call.1} parent=1 // pred_check_branch
      %59 = sbr.rel (0) target = $region25
    $region24: #{tpu_custom_call.1} parent=1 // pred_region
      %61 = dma.done [#allocation6], 4096
    $region25: #{tpu_custom_call.1} parent=1 // pred_fallthru
      _
    %v62 = vld [vmem:[#allocation2] sm:$0xff]
    %v63 = vld [vmem:[#allocation2 + $0x8] sm:$0xff]
    %v64 = vld [vmem:[#allocation2 + $0x10] sm:$0xff]
    %v65 = vld [vmem:[#allocation2 + $0x18] sm:$0xff]
    %v66 = vld [vmem:[#allocation2 + $0x20] sm:$0xff]
    %v67 = vld [vmem:[#allocation2 + $0x28] sm:$0xff]
    %v68 = vld [vmem:[#allocation2 + $0x30] sm:$0xff]
    %v69 = vld [vmem:[#allocation2 + $0x38] sm:$0xff]
    %v70 = vld [vmem:[#allocation2 + $0x40] sm:$0xff]
    %v71 = vld [vmem:[#allocation2 + $0x48] sm:$0xff]
    %v72 = vld [vmem:[#allocation2 + $0x50] sm:$0xff]
    %v73 = vld [vmem:[#allocation2 + $0x58] sm:$0xff]
    %v74 = vld [vmem:[#allocation2 + $0x60] sm:$0xff]
    %v75 = vld [vmem:[#allocation2 + $0x68] sm:$0xff]
    %v76 = vld [vmem:[#allocation2 + $0x70] sm:$0xff]
    %v77 = vld [vmem:[#allocation2 + $0x78] sm:$0xff]
    %v78 = vld [vmem:[#allocation2 + $0x80] sm:$0xff]
    %v79 = vld [vmem:[#allocation2 + $0x88] sm:$0xff]
    %v80 = vld [vmem:[#allocation2 + $0x90] sm:$0xff]
    %v81 = vld [vmem:[#allocation2 + $0x98] sm:$0xff]
    %v82 = vld [vmem:[#allocation2 + $0xa0] sm:$0xff]
    %v83 = vld [vmem:[#allocation2 + $0xa8] sm:$0xff]
    %v84 = vld [vmem:[#allocation2 + $0xb0] sm:$0xff]
    %v85 = vld [vmem:[#allocation2 + $0xb8] sm:$0xff]
    %v86 = vld [vmem:[#allocation2 + $0xc0] sm:$0xff]
    %v87 = vld [vmem:[#allocation2 + $0xc8] sm:$0xff]
    %v88 = vld [vmem:[#allocation2 + $0xd0] sm:$0xff]
    %v89 = vld [vmem:[#allocation2 + $0xd8] sm:$0xff]
    %v90 = vld [vmem:[#allocation2 + $0xe0] sm:$0xff]
    %v91 = vld [vmem:[#allocation2 + $0xe8] sm:$0xff]
    %v92 = vld [vmem:[#allocation2 + $0xf0] sm:$0xff]
    %v93 = vld [vmem:[#allocation2 + $0xf8] sm:$0xff]
    %v94 = vld [vmem:[#allocation5] sm:$0xff]
    %v95 = vld [vmem:[#allocation5 + $0x8] sm:$0xff]
    %v96 = vld [vmem:[#allocation5 + $0x10] sm:$0xff]
    %v97 = vld [vmem:[#allocation5 + $0x18] sm:$0xff]
    %v98 = vld [vmem:[#allocation5 + $0x20] sm:$0xff]
    %v99 = vld [vmem:[#allocation5 + $0x28] sm:$0xff]
    %v100 = vld [vmem:[#allocation5 + $0x30] sm:$0xff]
    %v101 = vld [vmem:[#allocation5 + $0x38] sm:$0xff]
    %v102 = vld [vmem:[#allocation5 + $0x40] sm:$0xff]
    %v103 = vld [vmem:[#allocation5 + $0x48] sm:$0xff]
    %v104 = vld [vmem:[#allocation5 + $0x50] sm:$0xff]
    %v105 = vld [vmem:[#allocation5 + $0x58] sm:$0xff]
    %v106 = vld [vmem:[#allocation5 + $0x60] sm:$0xff]
    %v107 = vld [vmem:[#allocation5 + $0x68] sm:$0xff]
    %v108 = vld [vmem:[#allocation5 + $0x70] sm:$0xff]
    %v109 = vld [vmem:[#allocation5 + $0x78] sm:$0xff]
    %v110 = vld [vmem:[#allocation5 + $0x80] sm:$0xff]
    %v111 = vld [vmem:[#allocation5 + $0x88] sm:$0xff]
    %v112 = vld [vmem:[#allocation5 + $0x90] sm:$0xff]
    %v113 = vld [vmem:[#allocation5 + $0x98] sm:$0xff]
    %v114 = vld [vmem:[#allocation5 + $0xa0] sm:$0xff]
    %v115 = vld [vmem:[#allocation5 + $0xa8] sm:$0xff]
    %v116 = vld [vmem:[#allocation5 + $0xb0] sm:$0xff]
    %v117 = vld [vmem:[#allocation5 + $0xb8] sm:$0xff]
    %v118 = vld [vmem:[#allocation5 + $0xc0] sm:$0xff]
    %v119 = vld [vmem:[#allocation5 + $0xc8] sm:$0xff]
    %v120 = vld [vmem:[#allocation5 + $0xd0] sm:$0xff]
    %v121 = vld [vmem:[#allocation5 + $0xd8] sm:$0xff]
    %v122 = vld [vmem:[#allocation5 + $0xe0] sm:$0xff]
    %v123 = vld [vmem:[#allocation5 + $0xe8] sm:$0xff]
    %v124 = vld [vmem:[#allocation5 + $0xf0] sm:$0xff]
    %v125 = vld [vmem:[#allocation5 + $0xf8] sm:$0xff]
    %126 = vmatpush.msra.mxu0 %v124
    %127 = vmatpush.msra.mxu0 %v122
    %128 = vmatpush.msra.mxu0 %v120
    %129 = vmatpush.msra.mxu0 %v118
    %130 = vmatpush.msra.mxu0 %v116
    %131 = vmatpush.msra.mxu0 %v114
    %132 = vmatpush.msra.mxu0 %v112
    %133 = vmatpush.msra.mxu0 %v110
    %134 = vmatpush.msra.mxu0 %v108
    %135 = vmatpush.msra.mxu0 %v106
    %136 = vmatpush.msra.mxu0 %v104
    %137 = vmatpush.msra.mxu0 %v102
    %138 = vmatpush.msra.mxu0 %v100
    %139 = vmatpush.msra.mxu0 %v98
    %140 = vmatpush.msra.mxu0 %v96
    %141 = vmatpush.msra.mxu0 %v94
    %142 = vmatmul.f32.gmra.mxu0 %v62
    %v143 = vpop.f32.mrf.mxu0
    %v144 = vadd.f32 0.0, %v143
    %145 = vmatmul.f32.gmra.mxu0 %v63
    %v146 = vpop.f32.mrf.mxu0
    %v147 = vadd.f32 0.0, %v146
    %148 = vmatmul.f32.gmra.mxu0 %v64
    %v149 = vpop.f32.mrf.mxu0
    %v150 = vadd.f32 0.0, %v149
    %151 = vmatmul.f32.gmra.mxu0 %v65
    %v152 = vpop.f32.mrf.mxu0
    %v153 = vadd.f32 0.0, %v152
    %154 = vmatmul.f32.gmra.mxu0 %v66
    %v155 = vpop.f32.mrf.mxu0
    %v156 = vadd.f32 0.0, %v155
    %157 = vmatmul.f32.gmra.mxu0 %v67
    %v158 = vpop.f32.mrf.mxu0
    %v159 = vadd.f32 0.0, %v158
    %160 = vmatmul.f32.gmra.mxu0 %v68
    %v161 = vpop.f32.mrf.mxu0
    %v162 = vadd.f32 0.0, %v161
    %163 = vmatmul.f32.gmra.mxu0 %v69
    %v164 = vpop.f32.mrf.mxu0
    %v165 = vadd.f32 0.0, %v164
    %166 = vmatmul.f32.gmra.mxu0 %v70
    %v167 = vpop.f32.mrf.mxu0
    %v168 = vadd.f32 0.0, %v167
    %169 = vmatmul.f32.gmra.mxu0 %v71
    %v170 = vpop.f32.mrf.mxu0
    %v171 = vadd.f32 0.0, %v170
    %172 = vmatmul.f32.gmra.mxu0 %v72
    %v173 = vpop.f32.mrf.mxu0
    %v174 = vadd.f32 0.0, %v173
    %175 = vmatmul.f32.gmra.mxu0 %v73
    %v176 = vpop.f32.mrf.mxu0
    %v177 = vadd.f32 0.0, %v176
    %178 = vmatmul.f32.gmra.mxu0 %v74
    %v179 = vpop.f32.mrf.mxu0
    %v180 = vadd.f32 0.0, %v179
    %181 = vmatmul.f32.gmra.mxu0 %v75
    %v182 = vpop.f32.mrf.mxu0
    %v183 = vadd.f32 0.0, %v182
    %184 = vmatmul.f32.gmra.mxu0 %v76
    %v185 = vpop.f32.mrf.mxu0
    %v186 = vadd.f32 0.0, %v185
    %187 = vmatmul.f32.gmra.mxu0 %v77
    %v188 = vpop.f32.mrf.mxu0
    %v189 = vadd.f32 0.0, %v188
    %190 = vmatmul.f32.gmra.mxu0 %v78
    %v191 = vpop.f32.mrf.mxu0
    %v192 = vadd.f32 0.0, %v191
    %193 = vmatmul.f32.gmra.mxu0 %v79
    %v194 = vpop.f32.mrf.mxu0
    %v195 = vadd.f32 0.0, %v194
    %196 = vmatmul.f32.gmra.mxu0 %v80
    %v197 = vpop.f32.mrf.mxu0
    %v198 = vadd.f32 0.0, %v197
    %199 = vmatmul.f32.gmra.mxu0 %v81
    %v200 = vpop.f32.mrf.mxu0
    %v201 = vadd.f32 0.0, %v200
    %202 = vmatmul.f32.gmra.mxu0 %v82
    %v203 = vpop.f32.mrf.mxu0
    %v204 = vadd.f32 0.0, %v203
    %205 = vmatmul.f32.gmra.mxu0 %v83
    %v206 = vpop.f32.mrf.mxu0
    %v207 = vadd.f32 0.0, %v206
    %208 = vmatmul.f32.gmra.mxu0 %v84
    %v209 = vpop.f32.mrf.mxu0
    %v210 = vadd.f32 0.0, %v209
    %211 = vmatmul.f32.gmra.mxu0 %v85
    %v212 = vpop.f32.mrf.mxu0
    %v213 = vadd.f32 0.0, %v212
    %214 = vmatmul.f32.gmra.mxu0 %v86
    %v215 = vpop.f32.mrf.mxu0
    %v216 = vadd.f32 0.0, %v215
    %217 = vmatmul.f32.gmra.mxu0 %v87
    %v218 = vpop.f32.mrf.mxu0
    %v219 = vadd.f32 0.0, %v218
    %220 = vmatmul.f32.gmra.mxu0 %v88
    %v221 = vpop.f32.mrf.mxu0
    %v222 = vadd.f32 0.0, %v221
    %223 = vmatmul.f32.gmra.mxu0 %v89
    %v224 = vpop.f32.mrf.mxu0
    %v225 = vadd.f32 0.0, %v224
    %226 = vmatmul.f32.gmra.mxu0 %v90
    %v227 = vpop.f32.mrf.mxu0
    %v228 = vadd.f32 0.0, %v227
    %229 = vmatmul.f32.gmra.mxu0 %v91
    %v230 = vpop.f32.mrf.mxu0
    %v231 = vadd.f32 0.0, %v230
    %232 = vmatmul.f32.gmra.mxu0 %v92
    %v233 = vpop.f32.mrf.mxu0
    %v234 = vadd.f32 0.0, %v233
    %235 = vmatmul.f32.gmra.mxu0 %v93
    %v236 = vpop.f32.mrf.mxu0
    %v237 = vadd.f32 0.0, %v236
    %238 = vdwg.mxu0
    %239 = vmatpush.msra.mxu0 %v125
    %240 = vmatpush.msra.mxu0 %v123
    %241 = vmatpush.msra.mxu0 %v121
    %242 = vmatpush.msra.mxu0 %v119
    %243 = vmatpush.msra.mxu0 %v117
    %244 = vmatpush.msra.mxu0 %v115
    %245 = vmatpush.msra.mxu0 %v113
    %246 = vmatpush.msra.mxu0 %v111
    %247 = vmatpush.msra.mxu0 %v109
    %248 = vmatpush.msra.mxu0 %v107
    %249 = vmatpush.msra.mxu0 %v105
    %250 = vmatpush.msra.mxu0 %v103
    %251 = vmatpush.msra.mxu0 %v101
    %252 = vmatpush.msra.mxu0 %v99
    %253 = vmatpush.msra.mxu0 %v97
    %254 = vmatpush.msra.mxu0 %v95
    %255 = vmatmul.f32.gmra.mxu0 %v62
    %v256 = vpop.f32.mrf.mxu0
    %v257 = vadd.f32 0.0, %v256
    %258 = vmatmul.f32.gmra.mxu0 %v63
    %v259 = vpop.f32.mrf.mxu0
    %v260 = vadd.f32 0.0, %v259
    %261 = vmatmul.f32.gmra.mxu0 %v64
    %v262 = vpop.f32.mrf.mxu0
    %v263 = vadd.f32 0.0, %v262
    %264 = vmatmul.f32.gmra.mxu0 %v65
    %v265 = vpop.f32.mrf.mxu0
    %v266 = vadd.f32 0.0, %v265
    %267 = vmatmul.f32.gmra.mxu0 %v66
    %v268 = vpop.f32.mrf.mxu0
    %v269 = vadd.f32 0.0, %v268
    %270 = vmatmul.f32.gmra.mxu0 %v67
    %v271 = vpop.f32.mrf.mxu0
    %v272 = vadd.f32 0.0, %v271
    %273 = vmatmul.f32.gmra.mxu0 %v68
    %v274 = vpop.f32.mrf.mxu0
    %v275 = vadd.f32 0.0, %v274
    %276 = vmatmul.f32.gmra.mxu0 %v69
    %v277 = vpop.f32.mrf.mxu0
    %v278 = vadd.f32 0.0, %v277
    %279 = vmatmul.f32.gmra.mxu0 %v70
    %v280 = vpop.f32.mrf.mxu0
    %v281 = vadd.f32 0.0, %v280
    %282 = vmatmul.f32.gmra.mxu0 %v71
    %v283 = vpop.f32.mrf.mxu0
    %v284 = vadd.f32 0.0, %v283
    %285 = vmatmul.f32.gmra.mxu0 %v72
    %v286 = vpop.f32.mrf.mxu0
    %v287 = vadd.f32 0.0, %v286
    %288 = vmatmul.f32.gmra.mxu0 %v73
    %v289 = vpop.f32.mrf.mxu0
    %v290 = vadd.f32 0.0, %v289
    %291 = vmatmul.f32.gmra.mxu0 %v74
    %v292 = vpop.f32.mrf.mxu0
    %v293 = vadd.f32 0.0, %v292
    %294 = vmatmul.f32.gmra.mxu0 %v75
    %v295 = vpop.f32.mrf.mxu0
    %v296 = vadd.f32 0.0, %v295
    %297 = vmatmul.f32.gmra.mxu0 %v76
    %v298 = vpop.f32.mrf.mxu0
    %v299 = vadd.f32 0.0, %v298
    %300 = vmatmul.f32.gmra.mxu0 %v77
    %v301 = vpop.f32.mrf.mxu0
    %v302 = vadd.f32 0.0, %v301
    %303 = vmatmul.f32.gmra.mxu0 %v78
    %v304 = vpop.f32.mrf.mxu0
    %v305 = vadd.f32 0.0, %v304
    %306 = vmatmul.f32.gmra.mxu0 %v79
    %v307 = vpop.f32.mrf.mxu0
    %v308 = vadd.f32 0.0, %v307
    %309 = vmatmul.f32.gmra.mxu0 %v80
    %v310 = vpop.f32.mrf.mxu0
    %v311 = vadd.f32 0.0, %v310
    %312 = vmatmul.f32.gmra.mxu0 %v81
    %v313 = vpop.f32.mrf.mxu0
    %v314 = vadd.f32 0.0, %v313
    %315 = vmatmul.f32.gmra.mxu0 %v82
    %v316 = vpop.f32.mrf.mxu0
    %v317 = vadd.f32 0.0, %v316
    %318 = vmatmul.f32.gmra.mxu0 %v83
    %v319 = vpop.f32.mrf.mxu0
    %v320 = vadd.f32 0.0, %v319
    %321 = vmatmul.f32.gmra.mxu0 %v84
    %v322 = vpop.f32.mrf.mxu0
    %v323 = vadd.f32 0.0, %v322
    %324 = vmatmul.f32.gmra.mxu0 %v85
    %v325 = vpop.f32.mrf.mxu0
    %v326 = vadd.f32 0.0, %v325
    %327 = vmatmul.f32.gmra.mxu0 %v86
    %v328 = vpop.f32.mrf.mxu0
    %v329 = vadd.f32 0.0, %v328
    %330 = vmatmul.f32.gmra.mxu0 %v87
    %v331 = vpop.f32.mrf.mxu0
    %v332 = vadd.f32 0.0, %v331
    %333 = vmatmul.f32.gmra.mxu0 %v88
    %v334 = vpop.f32.mrf.mxu0
    %v335 = vadd.f32 0.0, %v334
    %336 = vmatmul.f32.gmra.mxu0 %v89
    %v337 = vpop.f32.mrf.mxu0
    %v338 = vadd.f32 0.0, %v337
    %339 = vmatmul.f32.gmra.mxu0 %v90
    %v340 = vpop.f32.mrf.mxu0
    %v341 = vadd.f32 0.0, %v340
    %342 = vmatmul.f32.gmra.mxu0 %v91
    %v343 = vpop.f32.mrf.mxu0
    %v344 = vadd.f32 0.0, %v343
    %345 = vmatmul.f32.gmra.mxu0 %v92
    %v346 = vpop.f32.mrf.mxu0
    %v347 = vadd.f32 0.0, %v346
    %348 = vmatmul.f32.gmra.mxu0 %v93
    %v349 = vpop.f32.mrf.mxu0
    %v350 = vadd.f32 0.0, %v349
    %351 = vdwg.mxu0
    %v352 = vmul.f32 %v144, 0.5
    %v353 = vmul.f32 %v257, 0.5
    %v354 = vmul.f32 %v147, 0.5
    %v355 = vmul.f32 %v260, 0.5
    %v356 = vmul.f32 %v150, 0.5
    %v357 = vmul.f32 %v263, 0.5
    %v358 = vmul.f32 %v153, 0.5
    %v359 = vmul.f32 %v266, 0.5
    %v360 = vmul.f32 %v156, 0.5
    %v361 = vmul.f32 %v269, 0.5
    %v362 = vmul.f32 %v159, 0.5
    %v363 = vmul.f32 %v272, 0.5
    %v364 = vmul.f32 %v162, 0.5
    %v365 = vmul.f32 %v275, 0.5
    %v366 = vmul.f32 %v165, 0.5
    %v367 = vmul.f32 %v278, 0.5
    %v368 = vmul.f32 %v168, 0.5
    %v369 = vmul.f32 %v281, 0.5
    %v370 = vmul.f32 %v171, 0.5
    %v371 = vmul.f32 %v284, 0.5
    %v372 = vmul.f32 %v174, 0.5
    %v373 = vmul.f32 %v287, 0.5
    %v374 = vmul.f32 %v177, 0.5
    %v375 = vmul.f32 %v290, 0.5
    %v376 = vmul.f32 %v180, 0.5
    %v377 = vmul.f32 %v293, 0.5
    %v378 = vmul.f32 %v183, 0.5
    %v379 = vmul.f32 %v296, 0.5
    %v380 = vmul.f32 %v186, 0.5
    %v381 = vmul.f32 %v299, 0.5
    %v382 = vmul.f32 %v189, 0.5
    %v383 = vmul.f32 %v302, 0.5
    %v384 = vmul.f32 %v192, 0.5
    %v385 = vmul.f32 %v305, 0.5
    %v386 = vmul.f32 %v195, 0.5
    %v387 = vmul.f32 %v308, 0.5
    %v388 = vmul.f32 %v198, 0.5
    %v389 = vmul.f32 %v311, 0.5
    %v390 = vmul.f32 %v201, 0.5
    %v391 = vmul.f32 %v314, 0.5
    %v392 = vmul.f32 %v204, 0.5
    %v393 = vmul.f32 %v317, 0.5
    %v394 = vmul.f32 %v207, 0.5
    %v395 = vmul.f32 %v320, 0.5
    %v396 = vmul.f32 %v210, 0.5
    %v397 = vmul.f32 %v323, 0.5
    %v398 = vmul.f32 %v213, 0.5
    %v399 = vmul.f32 %v326, 0.5
    %v400 = vmul.f32 %v216, 0.5
    %v401 = vmul.f32 %v329, 0.5
    %v402 = vmul.f32 %v219, 0.5
    %v403 = vmul.f32 %v332, 0.5
    %v404 = vmul.f32 %v222, 0.5
    %v405 = vmul.f32 %v335, 0.5
    %v406 = vmul.f32 %v225, 0.5
    %v407 = vmul.f32 %v338, 0.5
    %v408 = vmul.f32 %v228, 0.5
    %v409 = vmul.f32 %v341, 0.5
    %v410 = vmul.f32 %v231, 0.5
    %v411 = vmul.f32 %v344, 0.5
    %v412 = vmul.f32 %v234, 0.5
    %v413 = vmul.f32 %v347, 0.5
    %v414 = vmul.f32 %v237, 0.5
    %v415 = vmul.f32 %v350, 0.5
    %v416 = vmul.f32 %v144, 0.70710677
    %v417 = vmul.f32 %v257, 0.70710677
    %v418 = vmul.f32 %v147, 0.70710677
    %v419 = vmul.f32 %v260, 0.70710677
    %v420 = vmul.f32 %v150, 0.70710677
    %v421 = vmul.f32 %v263, 0.70710677
    %v422 = vmul.f32 %v153, 0.70710677
    %v423 = vmul.f32 %v266, 0.70710677
    %v424 = vmul.f32 %v156, 0.70710677
    %v425 = vmul.f32 %v269, 0.70710677
    %v426 = vmul.f32 %v159, 0.70710677
    %v427 = vmul.f32 %v272, 0.70710677
    %v428 = vmul.f32 %v162, 0.70710677
    %v429 = vmul.f32 %v275, 0.70710677
    %v430 = vmul.f32 %v165, 0.70710677
    %v431 = vmul.f32 %v278, 0.70710677
    %v432 = vmul.f32 %v168, 0.70710677
    %v433 = vmul.f32 %v281, 0.70710677
    %v434 = vmul.f32 %v171, 0.70710677
    %v435 = vmul.f32 %v284, 0.70710677
    %v436 = vmul.f32 %v174, 0.70710677
    %v437 = vmul.f32 %v287, 0.70710677
    %v438 = vmul.f32 %v177, 0.70710677
    %v439 = vmul.f32 %v290, 0.70710677
    %v440 = vmul.f32 %v180, 0.70710677
    %v441 = vmul.f32 %v293, 0.70710677
    %v442 = vmul.f32 %v183, 0.70710677
    %v443 = vmul.f32 %v296, 0.70710677
    %v444 = vmul.f32 %v186, 0.70710677
    %v445 = vmul.f32 %v299, 0.70710677
    %v446 = vmul.f32 %v189, 0.70710677
    %v447 = vmul.f32 %v302, 0.70710677
    %v448 = vmul.f32 %v192, 0.70710677
    %v449 = vmul.f32 %v305, 0.70710677
    %v450 = vmul.f32 %v195, 0.70710677
    %v451 = vmul.f32 %v308, 0.70710677
    %v452 = vmul.f32 %v198, 0.70710677
    %v453 = vmul.f32 %v311, 0.70710677
    %v454 = vmul.f32 %v201, 0.70710677
    %v455 = vmul.f32 %v314, 0.70710677
    %v456 = vmul.f32 %v204, 0.70710677
    %v457 = vmul.f32 %v317, 0.70710677
    %v458 = vmul.f32 %v207, 0.70710677
    %v459 = vmul.f32 %v320, 0.70710677
    %v460 = vmul.f32 %v210, 0.70710677
    %v461 = vmul.f32 %v323, 0.70710677
    %v462 = vmul.f32 %v213, 0.70710677
    %v463 = vmul.f32 %v326, 0.70710677
    %v464 = vmul.f32 %v216, 0.70710677
    %v465 = vmul.f32 %v329, 0.70710677
    %v466 = vmul.f32 %v219, 0.70710677
    %v467 = vmul.f32 %v332, 0.70710677
    %v468 = vmul.f32 %v222, 0.70710677
    %v469 = vmul.f32 %v335, 0.70710677
    %v470 = vmul.f32 %v225, 0.70710677
    %v471 = vmul.f32 %v338, 0.70710677
    %v472 = vmul.f32 %v228, 0.70710677
    %v473 = vmul.f32 %v341, 0.70710677
    %v474 = vmul.f32 %v231, 0.70710677
    %v475 = vmul.f32 %v344, 0.70710677
    %v476 = vmul.f32 %v234, 0.70710677
    %v477 = vmul.f32 %v347, 0.70710677
    %v478 = vmul.f32 %v237, 0.70710677
    %v479 = vmul.f32 %v350, 0.70710677
    %v480 = vmul.f32 %v416, %v416
    %v481 = vmin.f32 16.0, %v480
    %v482 = vmul.f32 %v481, 2.1237322e-06
    %v483 = vadd.f32 %v482, 0.00028619796
    %v484 = vmul.f32 %v481, %v483
    %v485 = vadd.f32 %v484, 0.0036580483
    %v486 = vmul.f32 %v481, %v485
    %v487 = vadd.f32 %v486, 0.05243302
    %v488 = vmul.f32 %v481, %v487
    %v489 = vadd.f32 %v488, 0.18741608
    %v490 = vmul.f32 %v481, %v489
    %v491 = vadd.f32 %v490, 1.1283791
    %v492 = vmul.f32 %v416, %v491
    %v493 = vmul.f32 %v481, 3.8918573e-05
    %v494 = vadd.f32 %v493, 0.001143296
    %v495 = vmul.f32 %v481, %v494
    %v496 = vadd.f32 %v495, 0.014752088
    %v497 = vmul.f32 %v481, %v496
    %v498 = vadd.f32 %v497, 0.112945676
    %v499 = vmul.f32 %v481, %v498
    %v500 = vadd.f32 %v499, 0.4994258
    %v501 = vmul.f32 %v481, %v500
    %v502 = vadd.f32 %v501, 1.0
    %v503 = vrcp.pop %v502
    %v504 = vmul.f32 %v502, %v503
    %v505 = vsub.f32 1.0, %v504
    %v506 = vmul.f32 %v503, %v505
    %v507 = vadd.f32 %v503, %v506
    %vm508 = vweird.f32 %v502
    %vm509 = vweird.f32 %v503
    %vm510 = vmor %vm508, %vm509
    %v511 = vsel %vm510, %v503, %v507
    %v512 = vand.u32 2147483647, %v502
    %vm513 = vcmp.eq.f32.partialorder %v512, 8.507059e+37
    %v514 = vand.u32 %v502, 2147483648
    %v515 = vor.u32 1.1754944e-38, %v514
    %v516 = vsel %vm513, %v515, %v511
    %v517 = vmul.f32 %v492, %v516
    %v518 = vmin.f32 %v517, 1.0
    %v519 = vmax.f32 %v518, -1.0
    %v520 = vmul.f32 %v417, %v417
    %v521 = vmin.f32 16.0, %v520
    %v522 = vmul.f32 %v521, 2.1237322e-06
    %v523 = vadd.f32 %v522, 0.00028619796
    %v524 = vmul.f32 %v521, %v523
    %v525 = vadd.f32 %v524, 0.0036580483
    %v526 = vmul.f32 %v521, %v525
    %v527 = vadd.f32 %v526, 0.05243302
    %v528 = vmul.f32 %v521, %v527
    %v529 = vadd.f32 %v528, 0.18741608
    %v530 = vmul.f32 %v521, %v529
    %v531 = vadd.f32 %v530, 1.1283791
    %v532 = vmul.f32 %v417, %v531
    %v533 = vmul.f32 %v521, 3.8918573e-05
    %v534 = vadd.f32 %v533, 0.001143296
    %v535 = vmul.f32 %v521, %v534
    %v536 = vadd.f32 %v535, 0.014752088
    %v537 = vmul.f32 %v521, %v536
    %v538 = vadd.f32 %v537, 0.112945676
    %v539 = vmul.f32 %v521, %v538
    %v540 = vadd.f32 %v539, 0.4994258
    %v541 = vmul.f32 %v521, %v540
    %v542 = vadd.f32 %v541, 1.0
    %v543 = vrcp.pop %v542
    %v544 = vmul.f32 %v542, %v543
    %v545 = vsub.f32 1.0, %v544
    %v546 = vmul.f32 %v543, %v545
    %v547 = vadd.f32 %v543, %v546
    %vm548 = vweird.f32 %v542
    %vm549 = vweird.f32 %v543
    %vm550 = vmor %vm548, %vm549
    %v551 = vsel %vm550, %v543, %v547
    %v552 = vand.u32 2147483647, %v542
    %vm553 = vcmp.eq.f32.partialorder %v552, 8.507059e+37
    %v554 = vand.u32 %v542, 2147483648
    %v555 = vor.u32 1.1754944e-38, %v554
    %v556 = vsel %vm553, %v555, %v551
    %v557 = vmul.f32 %v532, %v556
    %v558 = vmin.f32 %v557, 1.0
    %v559 = vmax.f32 %v558, -1.0
    %v560 = vmul.f32 %v418, %v418
    %v561 = vmin.f32 16.0, %v560
    %v562 = vmul.f32 %v561, 2.1237322e-06
    %v563 = vadd.f32 %v562, 0.00028619796
    %v564 = vmul.f32 %v561, %v563
    %v565 = vadd.f32 %v564, 0.0036580483
    %v566 = vmul.f32 %v561, %v565
    %v567 = vadd.f32 %v566, 0.05243302
    %v568 = vmul.f32 %v561, %v567
    %v569 = vadd.f32 %v568, 0.18741608
    %v570 = vmul.f32 %v561, %v569
    %v571 = vadd.f32 %v570, 1.1283791
    %v572 = vmul.f32 %v418, %v571
    %v573 = vmul.f32 %v561, 3.8918573e-05
    %v574 = vadd.f32 %v573, 0.001143296
    %v575 = vmul.f32 %v561, %v574
    %v576 = vadd.f32 %v575, 0.014752088
    %v577 = vmul.f32 %v561, %v576
    %v578 = vadd.f32 %v577, 0.112945676
    %v579 = vmul.f32 %v561, %v578
    %v580 = vadd.f32 %v579, 0.4994258
    %v581 = vmul.f32 %v561, %v580
    %v582 = vadd.f32 %v581, 1.0
    %v583 = vrcp.pop %v582
    %v584 = vmul.f32 %v582, %v583
    %v585 = vsub.f32 1.0, %v584
    %v586 = vmul.f32 %v583, %v585
    %v587 = vadd.f32 %v583, %v586
    %vm588 = vweird.f32 %v582
    %vm589 = vweird.f32 %v583
    %vm590 = vmor %vm588, %vm589
    %v591 = vsel %vm590, %v583, %v587
    %v592 = vand.u32 2147483647, %v582
    %vm593 = vcmp.eq.f32.partialorder %v592, 8.507059e+37
    %v594 = vand.u32 %v582, 2147483648
    %v595 = vor.u32 1.1754944e-38, %v594
    %v596 = vsel %vm593, %v595, %v591
    %v597 = vmul.f32 %v572, %v596
    %v598 = vmin.f32 %v597, 1.0
    %v599 = vmax.f32 %v598, -1.0
    %v600 = vmul.f32 %v419, %v419
    %v601 = vmin.f32 16.0, %v600
    %v602 = vmul.f32 %v601, 2.1237322e-06
    %v603 = vadd.f32 %v602, 0.00028619796
    %v604 = vmul.f32 %v601, %v603
    %v605 = vadd.f32 %v604, 0.0036580483
    %v606 = vmul.f32 %v601, %v605
    %v607 = vadd.f32 %v606, 0.05243302
    %v608 = vmul.f32 %v601, %v607
    %v609 = vadd.f32 %v608, 0.18741608
    %v610 = vmul.f32 %v601, %v609
    %v611 = vadd.f32 %v610, 1.1283791
    %v612 = vmul.f32 %v419, %v611
    %v613 = vmul.f32 %v601, 3.8918573e-05
    %v614 = vadd.f32 %v613, 0.001143296
    %v615 = vmul.f32 %v601, %v614
    %v616 = vadd.f32 %v615, 0.014752088
    %v617 = vmul.f32 %v601, %v616
    %v618 = vadd.f32 %v617, 0.112945676
    %v619 = vmul.f32 %v601, %v618
    %v620 = vadd.f32 %v619, 0.4994258
    %v621 = vmul.f32 %v601, %v620
    %v622 = vadd.f32 %v621, 1.0
    %v623 = vrcp.pop %v622
    %v624 = vmul.f32 %v622, %v623
    %v625 = vsub.f32 1.0, %v624
    %v626 = vmul.f32 %v623, %v625
    %v627 = vadd.f32 %v623, %v626
    %vm628 = vweird.f32 %v622
    %vm629 = vweird.f32 %v623
    %vm630 = vmor %vm628, %vm629
    %v631 = vsel %vm630, %v623, %v627
    %v632 = vand.u32 2147483647, %v622
    %vm633 = vcmp.eq.f32.partialorder %v632, 8.507059e+37
    %v634 = vand.u32 %v622, 2147483648
    %v635 = vor.u32 1.1754944e-38, %v634
    %v636 = vsel %vm633, %v635, %v631
    %v637 = vmul.f32 %v612, %v636
    %v638 = vmin.f32 %v637, 1.0
    %v639 = vmax.f32 %v638, -1.0
    %v640 = vmul.f32 %v420, %v420
    %v641 = vmin.f32 16.0, %v640
    %v642 = vmul.f32 %v641, 2.1237322e-06
    %v643 = vadd.f32 %v642, 0.00028619796
    %v644 = vmul.f32 %v641, %v643
    %v645 = vadd.f32 %v644, 0.0036580483
    %v646 = vmul.f32 %v641, %v645
    %v647 = vadd.f32 %v646, 0.05243302
    %v648 = vmul.f32 %v641, %v647
    %v649 = vadd.f32 %v648, 0.18741608
    %v650 = vmul.f32 %v641, %v649
    %v651 = vadd.f32 %v650, 1.1283791
    %v652 = vmul.f32 %v420, %v651
    %v653 = vmul.f32 %v641, 3.8918573e-05
    %v654 = vadd.f32 %v653, 0.001143296
    %v655 = vmul.f32 %v641, %v654
    %v656 = vadd.f32 %v655, 0.014752088
    %v657 = vmul.f32 %v641, %v656
    %v658 = vadd.f32 %v657, 0.112945676
    %v659 = vmul.f32 %v641, %v658
    %v660 = vadd.f32 %v659, 0.4994258
    %v661 = vmul.f32 %v641, %v660
    %v662 = vadd.f32 %v661, 1.0
    %v663 = vrcp.pop %v662
    %v664 = vmul.f32 %v662, %v663
    %v665 = vsub.f32 1.0, %v664
    %v666 = vmul.f32 %v663, %v665
    %v667 = vadd.f32 %v663, %v666
    %vm668 = vweird.f32 %v662
    %vm669 = vweird.f32 %v663
    %vm670 = vmor %vm668, %vm669
    %v671 = vsel %vm670, %v663, %v667
    %v672 = vand.u32 2147483647, %v662
    %vm673 = vcmp.eq.f32.partialorder %v672, 8.507059e+37
    %v674 = vand.u32 %v662, 2147483648
    %v675 = vor.u32 1.1754944e-38, %v674
    %v676 = vsel %vm673, %v675, %v671
    %v677 = vmul.f32 %v652, %v676
    %v678 = vmin.f32 %v677, 1.0
    %v679 = vmax.f32 %v678, -1.0
    %v680 = vmul.f32 %v421, %v421
    %v681 = vmin.f32 16.0, %v680
    %v682 = vmul.f32 %v681, 2.1237322e-06
    %v683 = vadd.f32 %v682, 0.00028619796
    %v684 = vmul.f32 %v681, %v683
    %v685 = vadd.f32 %v684, 0.0036580483
    %v686 = vmul.f32 %v681, %v685
    %v687 = vadd.f32 %v686, 0.05243302
    %v688 = vmul.f32 %v681, %v687
    %v689 = vadd.f32 %v688, 0.18741608
    %v690 = vmul.f32 %v681, %v689
    %v691 = vadd.f32 %v690, 1.1283791
    %v692 = vmul.f32 %v421, %v691
    %v693 = vmul.f32 %v681, 3.8918573e-05
    %v694 = vadd.f32 %v693, 0.001143296
    %v695 = vmul.f32 %v681, %v694
    %v696 = vadd.f32 %v695, 0.014752088
    %v697 = vmul.f32 %v681, %v696
    %v698 = vadd.f32 %v697, 0.112945676
    %v699 = vmul.f32 %v681, %v698
    %v700 = vadd.f32 %v699, 0.4994258
    %v701 = vmul.f32 %v681, %v700
    %v702 = vadd.f32 %v701, 1.0
    %v703 = vrcp.pop %v702
    %v704 = vmul.f32 %v702, %v703
    %v705 = vsub.f32 1.0, %v704
    %v706 = vmul.f32 %v703, %v705
    %v707 = vadd.f32 %v703, %v706
    %vm708 = vweird.f32 %v702
    %vm709 = vweird.f32 %v703
    %vm710 = vmor %vm708, %vm709
    %v711 = vsel %vm710, %v703, %v707
    %v712 = vand.u32 2147483647, %v702
    %vm713 = vcmp.eq.f32.partialorder %v712, 8.507059e+37
    %v714 = vand.u32 %v702, 2147483648
    %v715 = vor.u32 1.1754944e-38, %v714
    %v716 = vsel %vm713, %v715, %v711
    %v717 = vmul.f32 %v692, %v716
    %v718 = vmin.f32 %v717, 1.0
    %v719 = vmax.f32 %v718, -1.0
    %v720 = vmul.f32 %v422, %v422
    %v721 = vmin.f32 16.0, %v720
    %v722 = vmul.f32 %v721, 2.1237322e-06
    %v723 = vadd.f32 %v722, 0.00028619796
    %v724 = vmul.f32 %v721, %v723
    %v725 = vadd.f32 %v724, 0.0036580483
    %v726 = vmul.f32 %v721, %v725
    %v727 = vadd.f32 %v726, 0.05243302
    %v728 = vmul.f32 %v721, %v727
    %v729 = vadd.f32 %v728, 0.18741608
    %v730 = vmul.f32 %v721, %v729
    %v731 = vadd.f32 %v730, 1.1283791
    %v732 = vmul.f32 %v422, %v731
    %v733 = vmul.f32 %v721, 3.8918573e-05
    %v734 = vadd.f32 %v733, 0.001143296
    %v735 = vmul.f32 %v721, %v734
    %v736 = vadd.f32 %v735, 0.014752088
    %v737 = vmul.f32 %v721, %v736
    %v738 = vadd.f32 %v737, 0.112945676
    %v739 = vmul.f32 %v721, %v738
    %v740 = vadd.f32 %v739, 0.4994258
    %v741 = vmul.f32 %v721, %v740
    %v742 = vadd.f32 %v741, 1.0
    %v743 = vrcp.pop %v742
    %v744 = vmul.f32 %v742, %v743
    %v745 = vsub.f32 1.0, %v744
    %v746 = vmul.f32 %v743, %v745
    %v747 = vadd.f32 %v743, %v746
    %vm748 = vweird.f32 %v742
    %vm749 = vweird.f32 %v743
    %vm750 = vmor %vm748, %vm749
    %v751 = vsel %vm750, %v743, %v747
    %v752 = vand.u32 2147483647, %v742
    %vm753 = vcmp.eq.f32.partialorder %v752, 8.507059e+37
    %v754 = vand.u32 %v742, 2147483648
    %v755 = vor.u32 1.1754944e-38, %v754
    %v756 = vsel %vm753, %v755, %v751
    %v757 = vmul.f32 %v732, %v756
    %v758 = vmin.f32 %v757, 1.0
    %v759 = vmax.f32 %v758, -1.0
    %v760 = vmul.f32 %v423, %v423
    %v761 = vmin.f32 16.0, %v760
    %v762 = vmul.f32 %v761, 2.1237322e-06
    %v763 = vadd.f32 %v762, 0.00028619796
    %v764 = vmul.f32 %v761, %v763
    %v765 = vadd.f32 %v764, 0.0036580483
    %v766 = vmul.f32 %v761, %v765
    %v767 = vadd.f32 %v766, 0.05243302
    %v768 = vmul.f32 %v761, %v767
    %v769 = vadd.f32 %v768, 0.18741608
    %v770 = vmul.f32 %v761, %v769
    %v771 = vadd.f32 %v770, 1.1283791
    %v772 = vmul.f32 %v423, %v771
    %v773 = vmul.f32 %v761, 3.8918573e-05
    %v774 = vadd.f32 %v773, 0.001143296
    %v775 = vmul.f32 %v761, %v774
    %v776 = vadd.f32 %v775, 0.014752088
    %v777 = vmul.f32 %v761, %v776
    %v778 = vadd.f32 %v777, 0.112945676
    %v779 = vmul.f32 %v761, %v778
    %v780 = vadd.f32 %v779, 0.4994258
    %v781 = vmul.f32 %v761, %v780
    %v782 = vadd.f32 %v781, 1.0
    %v783 = vrcp.pop %v782
    %v784 = vmul.f32 %v782, %v783
    %v785 = vsub.f32 1.0, %v784
    %v786 = vmul.f32 %v783, %v785
    %v787 = vadd.f32 %v783, %v786
    %vm788 = vweird.f32 %v782
    %vm789 = vweird.f32 %v783
    %vm790 = vmor %vm788, %vm789
    %v791 = vsel %vm790, %v783, %v787
    %v792 = vand.u32 2147483647, %v782
    %vm793 = vcmp.eq.f32.partialorder %v792, 8.507059e+37
    %v794 = vand.u32 %v782, 2147483648
    %v795 = vor.u32 1.1754944e-38, %v794
    %v796 = vsel %vm793, %v795, %v791
    %v797 = vmul.f32 %v772, %v796
    %v798 = vmin.f32 %v797, 1.0
    %v799 = vmax.f32 %v798, -1.0
    %v800 = vmul.f32 %v424, %v424
    %v801 = vmin.f32 16.0, %v800
    %v802 = vmul.f32 %v801, 2.1237322e-06
    %v803 = vadd.f32 %v802, 0.00028619796
    %v804 = vmul.f32 %v801, %v803
    %v805 = vadd.f32 %v804, 0.0036580483
    %v806 = vmul.f32 %v801, %v805
    %v807 = vadd.f32 %v806, 0.05243302
    %v808 = vmul.f32 %v801, %v807
    %v809 = vadd.f32 %v808, 0.18741608
    %v810 = vmul.f32 %v801, %v809
    %v811 = vadd.f32 %v810, 1.1283791
    %v812 = vmul.f32 %v424, %v811
    %v813 = vmul.f32 %v801, 3.8918573e-05
    %v814 = vadd.f32 %v813, 0.001143296
    %v815 = vmul.f32 %v801, %v814
    %v816 = vadd.f32 %v815, 0.014752088
    %v817 = vmul.f32 %v801, %v816
    %v818 = vadd.f32 %v817, 0.112945676
    %v819 = vmul.f32 %v801, %v818
    %v820 = vadd.f32 %v819, 0.4994258
    %v821 = vmul.f32 %v801, %v820
    %v822 = vadd.f32 %v821, 1.0
    %v823 = vrcp.pop %v822
    %v824 = vmul.f32 %v822, %v823
    %v825 = vsub.f32 1.0, %v824
    %v826 = vmul.f32 %v823, %v825
    %v827 = vadd.f32 %v823, %v826
    %vm828 = vweird.f32 %v822
    %vm829 = vweird.f32 %v823
    %vm830 = vmor %vm828, %vm829
    %v831 = vsel %vm830, %v823, %v827
    %v832 = vand.u32 2147483647, %v822
    %vm833 = vcmp.eq.f32.partialorder %v832, 8.507059e+37
    %v834 = vand.u32 %v822, 2147483648
    %v835 = vor.u32 1.1754944e-38, %v834
    %v836 = vsel %vm833, %v835, %v831
    %v837 = vmul.f32 %v812, %v836
    %v838 = vmin.f32 %v837, 1.0
    %v839 = vmax.f32 %v838, -1.0
    %v840 = vmul.f32 %v425, %v425
    %v841 = vmin.f32 16.0, %v840
    %v842 = vmul.f32 %v841, 2.1237322e-06
    %v843 = vadd.f32 %v842, 0.00028619796
    %v844 = vmul.f32 %v841, %v843
    %v845 = vadd.f32 %v844, 0.0036580483
    %v846 = vmul.f32 %v841, %v845
    %v847 = vadd.f32 %v846, 0.05243302
    %v848 = vmul.f32 %v841, %v847
    %v849 = vadd.f32 %v848, 0.18741608
    %v850 = vmul.f32 %v841, %v849
    %v851 = vadd.f32 %v850, 1.1283791
    %v852 = vmul.f32 %v425, %v851
    %v853 = vmul.f32 %v841, 3.8918573e-05
    %v854 = vadd.f32 %v853, 0.001143296
    %v855 = vmul.f32 %v841, %v854
    %v856 = vadd.f32 %v855, 0.014752088
    %v857 = vmul.f32 %v841, %v856
    %v858 = vadd.f32 %v857, 0.112945676
    %v859 = vmul.f32 %v841, %v858
    %v860 = vadd.f32 %v859, 0.4994258
    %v861 = vmul.f32 %v841, %v860
    %v862 = vadd.f32 %v861, 1.0
    %v863 = vrcp.pop %v862
    %v864 = vmul.f32 %v862, %v863
    %v865 = vsub.f32 1.0, %v864
    %v866 = vmul.f32 %v863, %v865
    %v867 = vadd.f32 %v863, %v866
    %vm868 = vweird.f32 %v862
    %vm869 = vweird.f32 %v863
    %vm870 = vmor %vm868, %vm869
    %v871 = vsel %vm870, %v863, %v867
    %v872 = vand.u32 2147483647, %v862
    %vm873 = vcmp.eq.f32.partialorder %v872, 8.507059e+37
    %v874 = vand.u32 %v862, 2147483648
    %v875 = vor.u32 1.1754944e-38, %v874
    %v876 = vsel %vm873, %v875, %v871
    %v877 = vmul.f32 %v852, %v876
    %v878 = vmin.f32 %v877, 1.0
    %v879 = vmax.f32 %v878, -1.0
    %v880 = vmul.f32 %v426, %v426
    %v881 = vmin.f32 16.0, %v880
    %v882 = vmul.f32 %v881, 2.1237322e-06
    %v883 = vadd.f32 %v882, 0.00028619796
    %v884 = vmul.f32 %v881, %v883
    %v885 = vadd.f32 %v884, 0.0036580483
    %v886 = vmul.f32 %v881, %v885
    %v887 = vadd.f32 %v886, 0.05243302
    %v888 = vmul.f32 %v881, %v887
    %v889 = vadd.f32 %v888, 0.18741608
    %v890 = vmul.f32 %v881, %v889
    %v891 = vadd.f32 %v890, 1.1283791
    %v892 = vmul.f32 %v426, %v891
    %v893 = vmul.f32 %v881, 3.8918573e-05
    %v894 = vadd.f32 %v893, 0.001143296
    %v895 = vmul.f32 %v881, %v894
    %v896 = vadd.f32 %v895, 0.014752088
    %v897 = vmul.f32 %v881, %v896
    %v898 = vadd.f32 %v897, 0.112945676
    %v899 = vmul.f32 %v881, %v898
    %v900 = vadd.f32 %v899, 0.4994258
    %v901 = vmul.f32 %v881, %v900
    %v902 = vadd.f32 %v901, 1.0
    %v903 = vrcp.pop %v902
    %v904 = vmul.f32 %v902, %v903
    %v905 = vsub.f32 1.0, %v904
    %v906 = vmul.f32 %v903, %v905
    %v907 = vadd.f32 %v903, %v906
    %vm908 = vweird.f32 %v902
    %vm909 = vweird.f32 %v903
    %vm910 = vmor %vm908, %vm909
    %v911 = vsel %vm910, %v903, %v907
    %v912 = vand.u32 2147483647, %v902
    %vm913 = vcmp.eq.f32.partialorder %v912, 8.507059e+37
    %v914 = vand.u32 %v902, 2147483648
    %v915 = vor.u32 1.1754944e-38, %v914
    %v916 = vsel %vm913, %v915, %v911
    %v917 = vmul.f32 %v892, %v916
    %v918 = vmin.f32 %v917, 1.0
    %v919 = vmax.f32 %v918, -1.0
    %v920 = vmul.f32 %v427, %v427
    %v921 = vmin.f32 16.0, %v920
    %v922 = vmul.f32 %v921, 2.1237322e-06
    %v923 = vadd.f32 %v922, 0.00028619796
    %v924 = vmul.f32 %v921, %v923
    %v925 = vadd.f32 %v924, 0.0036580483
    %v926 = vmul.f32 %v921, %v925
    %v927 = vadd.f32 %v926, 0.05243302
    %v928 = vmul.f32 %v921, %v927
    %v929 = vadd.f32 %v928, 0.18741608
    %v930 = vmul.f32 %v921, %v929
    %v931 = vadd.f32 %v930, 1.1283791
    %v932 = vmul.f32 %v427, %v931
    %v933 = vmul.f32 %v921, 3.8918573e-05
    %v934 = vadd.f32 %v933, 0.001143296
    %v935 = vmul.f32 %v921, %v934
    %v936 = vadd.f32 %v935, 0.014752088
    %v937 = vmul.f32 %v921, %v936
    %v938 = vadd.f32 %v937, 0.112945676
    %v939 = vmul.f32 %v921, %v938
    %v940 = vadd.f32 %v939, 0.4994258
    %v941 = vmul.f32 %v921, %v940
    %v942 = vadd.f32 %v941, 1.0
    %v943 = vrcp.pop %v942
    %v944 = vmul.f32 %v942, %v943
    %v945 = vsub.f32 1.0, %v944
    %v946 = vmul.f32 %v943, %v945
    %v947 = vadd.f32 %v943, %v946
    %vm948 = vweird.f32 %v942
    %vm949 = vweird.f32 %v943
    %vm950 = vmor %vm948, %vm949
    %v951 = vsel %vm950, %v943, %v947
    %v952 = vand.u32 2147483647, %v942
    %vm953 = vcmp.eq.f32.partialorder %v952, 8.507059e+37
    %v954 = vand.u32 %v942, 2147483648
    %v955 = vor.u32 1.1754944e-38, %v954
    %v956 = vsel %vm953, %v955, %v951
    %v957 = vmul.f32 %v932, %v956
    %v958 = vmin.f32 %v957, 1.0
    %v959 = vmax.f32 %v958, -1.0
    %v960 = vmul.f32 %v428, %v428
    %v961 = vmin.f32 16.0, %v960
    %v962 = vmul.f32 %v961, 2.1237322e-06
    %v963 = vadd.f32 %v962, 0.00028619796
    %v964 = vmul.f32 %v961, %v963
    %v965 = vadd.f32 %v964, 0.0036580483
    %v966 = vmul.f32 %v961, %v965
    %v967 = vadd.f32 %v966, 0.05243302
    %v968 = vmul.f32 %v961, %v967
    %v969 = vadd.f32 %v968, 0.18741608
    %v970 = vmul.f32 %v961, %v969
    %v971 = vadd.f32 %v970, 1.1283791
    %v972 = vmul.f32 %v428, %v971
    %v973 = vmul.f32 %v961, 3.8918573e-05
    %v974 = vadd.f32 %v973, 0.001143296
    %v975 = vmul.f32 %v961, %v974
    %v976 = vadd.f32 %v975, 0.014752088
    %v977 = vmul.f32 %v961, %v976
    %v978 = vadd.f32 %v977, 0.112945676
    %v979 = vmul.f32 %v961, %v978
    %v980 = vadd.f32 %v979, 0.4994258
    %v981 = vmul.f32 %v961, %v980
    %v982 = vadd.f32 %v981, 1.0
    %v983 = vrcp.pop %v982
    %v984 = vmul.f32 %v982, %v983
    %v985 = vsub.f32 1.0, %v984
    %v986 = vmul.f32 %v983, %v985
    %v987 = vadd.f32 %v983, %v986
    %vm988 = vweird.f32 %v982
    %vm989 = vweird.f32 %v983
    %vm990 = vmor %vm988, %vm989
    %v991 = vsel %vm990, %v983, %v987
    %v992 = vand.u32 2147483647, %v982
    %vm993 = vcmp.eq.f32.partialorder %v992, 8.507059e+37
    %v994 = vand.u32 %v982, 2147483648
    %v995 = vor.u32 1.1754944e-38, %v994
    %v996 = vsel %vm993, %v995, %v991
    %v997 = vmul.f32 %v972, %v996
    %v998 = vmin.f32 %v997, 1.0
    %v999 = vmax.f32 %v998, -1.0
    %v1000 = vmul.f32 %v429, %v429
    %v1001 = vmin.f32 16.0, %v1000
    %v1002 = vmul.f32 %v1001, 2.1237322e-06
    %v1003 = vadd.f32 %v1002, 0.00028619796
    %v1004 = vmul.f32 %v1001, %v1003
    %v1005 = vadd.f32 %v1004, 0.0036580483
    %v1006 = vmul.f32 %v1001, %v1005
    %v1007 = vadd.f32 %v1006, 0.05243302
    %v1008 = vmul.f32 %v1001, %v1007
    %v1009 = vadd.f32 %v1008, 0.18741608
    %v1010 = vmul.f32 %v1001, %v1009
    %v1011 = vadd.f32 %v1010, 1.1283791
    %v1012 = vmul.f32 %v429, %v1011
    %v1013 = vmul.f32 %v1001, 3.8918573e-05
    %v1014 = vadd.f32 %v1013, 0.001143296
    %v1015 = vmul.f32 %v1001, %v1014
    %v1016 = vadd.f32 %v1015, 0.014752088
    %v1017 = vmul.f32 %v1001, %v1016
    %v1018 = vadd.f32 %v1017, 0.112945676
    %v1019 = vmul.f32 %v1001, %v1018
    %v1020 = vadd.f32 %v1019, 0.4994258
    %v1021 = vmul.f32 %v1001, %v1020
    %v1022 = vadd.f32 %v1021, 1.0
    %v1023 = vrcp.pop %v1022
    %v1024 = vmul.f32 %v1022, %v1023
    %v1025 = vsub.f32 1.0, %v1024
    %v1026 = vmul.f32 %v1023, %v1025
    %v1027 = vadd.f32 %v1023, %v1026
    %vm1028 = vweird.f32 %v1022
    %vm1029 = vweird.f32 %v1023
    %vm1030 = vmor %vm1028, %vm1029
    %v1031 = vsel %vm1030, %v1023, %v1027
    %v1032 = vand.u32 2147483647, %v1022
    %vm1033 = vcmp.eq.f32.partialorder %v1032, 8.507059e+37
    %v1034 = vand.u32 %v1022, 2147483648
    %v1035 = vor.u32 1.1754944e-38, %v1034
    %v1036 = vsel %vm1033, %v1035, %v1031
    %v1037 = vmul.f32 %v1012, %v1036
    %v1038 = vmin.f32 %v1037, 1.0
    %v1039 = vmax.f32 %v1038, -1.0
    %v1040 = vmul.f32 %v430, %v430
    %v1041 = vmin.f32 16.0, %v1040
    %v1042 = vmul.f32 %v1041, 2.1237322e-06
    %v1043 = vadd.f32 %v1042, 0.00028619796
    %v1044 = vmul.f32 %v1041, %v1043
    %v1045 = vadd.f32 %v1044, 0.0036580483
    %v1046 = vmul.f32 %v1041, %v1045
    %v1047 = vadd.f32 %v1046, 0.05243302
    %v1048 = vmul.f32 %v1041, %v1047
    %v1049 = vadd.f32 %v1048, 0.18741608
    %v1050 = vmul.f32 %v1041, %v1049
    %v1051 = vadd.f32 %v1050, 1.1283791
    %v1052 = vmul.f32 %v430, %v1051
    %v1053 = vmul.f32 %v1041, 3.8918573e-05
    %v1054 = vadd.f32 %v1053, 0.001143296
    %v1055 = vmul.f32 %v1041, %v1054
    %v1056 = vadd.f32 %v1055, 0.014752088
    %v1057 = vmul.f32 %v1041, %v1056
    %v1058 = vadd.f32 %v1057, 0.112945676
    %v1059 = vmul.f32 %v1041, %v1058
    %v1060 = vadd.f32 %v1059, 0.4994258
    %v1061 = vmul.f32 %v1041, %v1060
    %v1062 = vadd.f32 %v1061, 1.0
    %v1063 = vrcp.pop %v1062
    %v1064 = vmul.f32 %v1062, %v1063
    %v1065 = vsub.f32 1.0, %v1064
    %v1066 = vmul.f32 %v1063, %v1065
    %v1067 = vadd.f32 %v1063, %v1066
    %vm1068 = vweird.f32 %v1062
    %vm1069 = vweird.f32 %v1063
    %vm1070 = vmor %vm1068, %vm1069
    %v1071 = vsel %vm1070, %v1063, %v1067
    %v1072 = vand.u32 2147483647, %v1062
    %vm1073 = vcmp.eq.f32.partialorder %v1072, 8.507059e+37
    %v1074 = vand.u32 %v1062, 2147483648
    %v1075 = vor.u32 1.1754944e-38, %v1074
    %v1076 = vsel %vm1073, %v1075, %v1071
    %v1077 = vmul.f32 %v1052, %v1076
    %v1078 = vmin.f32 %v1077, 1.0
    %v1079 = vmax.f32 %v1078, -1.0
    %v1080 = vmul.f32 %v431, %v431
    %v1081 = vmin.f32 16.0, %v1080
    %v1082 = vmul.f32 %v1081, 2.1237322e-06
    %v1083 = vadd.f32 %v1082, 0.00028619796
    %v1084 = vmul.f32 %v1081, %v1083
    %v1085 = vadd.f32 %v1084, 0.0036580483
    %v1086 = vmul.f32 %v1081, %v1085
    %v1087 = vadd.f32 %v1086, 0.05243302
    %v1088 = vmul.f32 %v1081, %v1087
    %v1089 = vadd.f32 %v1088, 0.18741608
    %v1090 = vmul.f32 %v1081, %v1089
    %v1091 = vadd.f32 %v1090, 1.1283791
    %v1092 = vmul.f32 %v431, %v1091
    %v1093 = vmul.f32 %v1081, 3.8918573e-05
    %v1094 = vadd.f32 %v1093, 0.001143296
    %v1095 = vmul.f32 %v1081, %v1094
    %v1096 = vadd.f32 %v1095, 0.014752088
    %v1097 = vmul.f32 %v1081, %v1096
    %v1098 = vadd.f32 %v1097, 0.112945676
    %v1099 = vmul.f32 %v1081, %v1098
    %v1100 = vadd.f32 %v1099, 0.4994258
    %v1101 = vmul.f32 %v1081, %v1100
    %v1102 = vadd.f32 %v1101, 1.0
    %v1103 = vrcp.pop %v1102
    %v1104 = vmul.f32 %v1102, %v1103
    %v1105 = vsub.f32 1.0, %v1104
    %v1106 = vmul.f32 %v1103, %v1105
    %v1107 = vadd.f32 %v1103, %v1106
    %vm1108 = vweird.f32 %v1102
    %vm1109 = vweird.f32 %v1103
    %vm1110 = vmor %vm1108, %vm1109
    %v1111 = vsel %vm1110, %v1103, %v1107
    %v1112 = vand.u32 2147483647, %v1102
    %vm1113 = vcmp.eq.f32.partialorder %v1112, 8.507059e+37
    %v1114 = vand.u32 %v1102, 2147483648
    %v1115 = vor.u32 1.1754944e-38, %v1114
    %v1116 = vsel %vm1113, %v1115, %v1111
    %v1117 = vmul.f32 %v1092, %v1116
    %v1118 = vmin.f32 %v1117, 1.0
    %v1119 = vmax.f32 %v1118, -1.0
    %v1120 = vmul.f32 %v432, %v432
    %v1121 = vmin.f32 16.0, %v1120
    %v1122 = vmul.f32 %v1121, 2.1237322e-06
    %v1123 = vadd.f32 %v1122, 0.00028619796
    %v1124 = vmul.f32 %v1121, %v1123
    %v1125 = vadd.f32 %v1124, 0.0036580483
    %v1126 = vmul.f32 %v1121, %v1125
    %v1127 = vadd.f32 %v1126, 0.05243302
    %v1128 = vmul.f32 %v1121, %v1127
    %v1129 = vadd.f32 %v1128, 0.18741608
    %v1130 = vmul.f32 %v1121, %v1129
    %v1131 = vadd.f32 %v1130, 1.1283791
    %v1132 = vmul.f32 %v432, %v1131
    %v1133 = vmul.f32 %v1121, 3.8918573e-05
    %v1134 = vadd.f32 %v1133, 0.001143296
    %v1135 = vmul.f32 %v1121, %v1134
    %v1136 = vadd.f32 %v1135, 0.014752088
    %v1137 = vmul.f32 %v1121, %v1136
    %v1138 = vadd.f32 %v1137, 0.112945676
    %v1139 = vmul.f32 %v1121, %v1138
    %v1140 = vadd.f32 %v1139, 0.4994258
    %v1141 = vmul.f32 %v1121, %v1140
    %v1142 = vadd.f32 %v1141, 1.0
    %v1143 = vrcp.pop %v1142
    %v1144 = vmul.f32 %v1142, %v1143
    %v1145 = vsub.f32 1.0, %v1144
    %v1146 = vmul.f32 %v1143, %v1145
    %v1147 = vadd.f32 %v1143, %v1146
    %vm1148 = vweird.f32 %v1142
    %vm1149 = vweird.f32 %v1143
    %vm1150 = vmor %vm1148, %vm1149
    %v1151 = vsel %vm1150, %v1143, %v1147
    %v1152 = vand.u32 2147483647, %v1142
    %vm1153 = vcmp.eq.f32.partialorder %v1152, 8.507059e+37
    %v1154 = vand.u32 %v1142, 2147483648
    %v1155 = vor.u32 1.1754944e-38, %v1154
    %v1156 = vsel %vm1153, %v1155, %v1151
    %v1157 = vmul.f32 %v1132, %v1156
    %v1158 = vmin.f32 %v1157, 1.0
    %v1159 = vmax.f32 %v1158, -1.0
    %v1160 = vmul.f32 %v433, %v433
    %v1161 = vmin.f32 16.0, %v1160
    %v1162 = vmul.f32 %v1161, 2.1237322e-06
    %v1163 = vadd.f32 %v1162, 0.00028619796
    %v1164 = vmul.f32 %v1161, %v1163
    %v1165 = vadd.f32 %v1164, 0.0036580483
    %v1166 = vmul.f32 %v1161, %v1165
    %v1167 = vadd.f32 %v1166, 0.05243302
    %v1168 = vmul.f32 %v1161, %v1167
    %v1169 = vadd.f32 %v1168, 0.18741608
    %v1170 = vmul.f32 %v1161, %v1169
    %v1171 = vadd.f32 %v1170, 1.1283791
    %v1172 = vmul.f32 %v433, %v1171
    %v1173 = vmul.f32 %v1161, 3.8918573e-05
    %v1174 = vadd.f32 %v1173, 0.001143296
    %v1175 = vmul.f32 %v1161, %v1174
    %v1176 = vadd.f32 %v1175, 0.014752088
    %v1177 = vmul.f32 %v1161, %v1176
    %v1178 = vadd.f32 %v1177, 0.112945676
    %v1179 = vmul.f32 %v1161, %v1178
    %v1180 = vadd.f32 %v1179, 0.4994258
    %v1181 = vmul.f32 %v1161, %v1180
    %v1182 = vadd.f32 %v1181, 1.0
    %v1183 = vrcp.pop %v1182
    %v1184 = vmul.f32 %v1182, %v1183
    %v1185 = vsub.f32 1.0, %v1184
    %v1186 = vmul.f32 %v1183, %v1185
    %v1187 = vadd.f32 %v1183, %v1186
    %vm1188 = vweird.f32 %v1182
    %vm1189 = vweird.f32 %v1183
    %vm1190 = vmor %vm1188, %vm1189
    %v1191 = vsel %vm1190, %v1183, %v1187
    %v1192 = vand.u32 2147483647, %v1182
    %vm1193 = vcmp.eq.f32.partialorder %v1192, 8.507059e+37
    %v1194 = vand.u32 %v1182, 2147483648
    %v1195 = vor.u32 1.1754944e-38, %v1194
    %v1196 = vsel %vm1193, %v1195, %v1191
    %v1197 = vmul.f32 %v1172, %v1196
    %v1198 = vmin.f32 %v1197, 1.0
    %v1199 = vmax.f32 %v1198, -1.0
    %v1200 = vmul.f32 %v434, %v434
    %v1201 = vmin.f32 16.0, %v1200
    %v1202 = vmul.f32 %v1201, 2.1237322e-06
    %v1203 = vadd.f32 %v1202, 0.00028619796
    %v1204 = vmul.f32 %v1201, %v1203
    %v1205 = vadd.f32 %v1204, 0.0036580483
    %v1206 = vmul.f32 %v1201, %v1205
    %v1207 = vadd.f32 %v1206, 0.05243302
    %v1208 = vmul.f32 %v1201, %v1207
    %v1209 = vadd.f32 %v1208, 0.18741608
    %v1210 = vmul.f32 %v1201, %v1209
    %v1211 = vadd.f32 %v1210, 1.1283791
    %v1212 = vmul.f32 %v434, %v1211
    %v1213 = vmul.f32 %v1201, 3.8918573e-05
    %v1214 = vadd.f32 %v1213, 0.001143296
    %v1215 = vmul.f32 %v1201, %v1214
    %v1216 = vadd.f32 %v1215, 0.014752088
    %v1217 = vmul.f32 %v1201, %v1216
    %v1218 = vadd.f32 %v1217, 0.112945676
    %v1219 = vmul.f32 %v1201, %v1218
    %v1220 = vadd.f32 %v1219, 0.4994258
    %v1221 = vmul.f32 %v1201, %v1220
    %v1222 = vadd.f32 %v1221, 1.0
    %v1223 = vrcp.pop %v1222
    %v1224 = vmul.f32 %v1222, %v1223
    %v1225 = vsub.f32 1.0, %v1224
    %v1226 = vmul.f32 %v1223, %v1225
    %v1227 = vadd.f32 %v1223, %v1226
    %vm1228 = vweird.f32 %v1222
    %vm1229 = vweird.f32 %v1223
    %vm1230 = vmor %vm1228, %vm1229
    %v1231 = vsel %vm1230, %v1223, %v1227
    %v1232 = vand.u32 2147483647, %v1222
    %vm1233 = vcmp.eq.f32.partialorder %v1232, 8.507059e+37
    %v1234 = vand.u32 %v1222, 2147483648
    %v1235 = vor.u32 1.1754944e-38, %v1234
    %v1236 = vsel %vm1233, %v1235, %v1231
    %v1237 = vmul.f32 %v1212, %v1236
    %v1238 = vmin.f32 %v1237, 1.0
    %v1239 = vmax.f32 %v1238, -1.0
    %v1240 = vmul.f32 %v435, %v435
    %v1241 = vmin.f32 16.0, %v1240
    %v1242 = vmul.f32 %v1241, 2.1237322e-06
    %v1243 = vadd.f32 %v1242, 0.00028619796
    %v1244 = vmul.f32 %v1241, %v1243
    %v1245 = vadd.f32 %v1244, 0.0036580483
    %v1246 = vmul.f32 %v1241, %v1245
    %v1247 = vadd.f32 %v1246, 0.05243302
    %v1248 = vmul.f32 %v1241, %v1247
    %v1249 = vadd.f32 %v1248, 0.18741608
    %v1250 = vmul.f32 %v1241, %v1249
    %v1251 = vadd.f32 %v1250, 1.1283791
    %v1252 = vmul.f32 %v435, %v1251
    %v1253 = vmul.f32 %v1241, 3.8918573e-05
    %v1254 = vadd.f32 %v1253, 0.001143296
    %v1255 = vmul.f32 %v1241, %v1254
    %v1256 = vadd.f32 %v1255, 0.014752088
    %v1257 = vmul.f32 %v1241, %v1256
    %v1258 = vadd.f32 %v1257, 0.112945676
    %v1259 = vmul.f32 %v1241, %v1258
    %v1260 = vadd.f32 %v1259, 0.4994258
    %v1261 = vmul.f32 %v1241, %v1260
    %v1262 = vadd.f32 %v1261, 1.0
    %v1263 = vrcp.pop %v1262
    %v1264 = vmul.f32 %v1262, %v1263
    %v1265 = vsub.f32 1.0, %v1264
    %v1266 = vmul.f32 %v1263, %v1265
    %v1267 = vadd.f32 %v1263, %v1266
    %vm1268 = vweird.f32 %v1262
    %vm1269 = vweird.f32 %v1263
    %vm1270 = vmor %vm1268, %vm1269
    %v1271 = vsel %vm1270, %v1263, %v1267
    %v1272 = vand.u32 2147483647, %v1262
    %vm1273 = vcmp.eq.f32.partialorder %v1272, 8.507059e+37
    %v1274 = vand.u32 %v1262, 2147483648
    %v1275 = vor.u32 1.1754944e-38, %v1274
    %v1276 = vsel %vm1273, %v1275, %v1271
    %v1277 = vmul.f32 %v1252, %v1276
    %v1278 = vmin.f32 %v1277, 1.0
    %v1279 = vmax.f32 %v1278, -1.0
    %v1280 = vmul.f32 %v436, %v436
    %v1281 = vmin.f32 16.0, %v1280
    %v1282 = vmul.f32 %v1281, 2.1237322e-06
    %v1283 = vadd.f32 %v1282, 0.00028619796
    %v1284 = vmul.f32 %v1281, %v1283
    %v1285 = vadd.f32 %v1284, 0.0036580483
    %v1286 = vmul.f32 %v1281, %v1285
    %v1287 = vadd.f32 %v1286, 0.05243302
    %v1288 = vmul.f32 %v1281, %v1287
    %v1289 = vadd.f32 %v1288, 0.18741608
    %v1290 = vmul.f32 %v1281, %v1289
    %v1291 = vadd.f32 %v1290, 1.1283791
    %v1292 = vmul.f32 %v436, %v1291
    %v1293 = vmul.f32 %v1281, 3.8918573e-05
    %v1294 = vadd.f32 %v1293, 0.001143296
    %v1295 = vmul.f32 %v1281, %v1294
    %v1296 = vadd.f32 %v1295, 0.014752088
    %v1297 = vmul.f32 %v1281, %v1296
    %v1298 = vadd.f32 %v1297, 0.112945676
    %v1299 = vmul.f32 %v1281, %v1298
    %v1300 = vadd.f32 %v1299, 0.4994258
    %v1301 = vmul.f32 %v1281, %v1300
    %v1302 = vadd.f32 %v1301, 1.0
    %v1303 = vrcp.pop %v1302
    %v1304 = vmul.f32 %v1302, %v1303
    %v1305 = vsub.f32 1.0, %v1304
    %v1306 = vmul.f32 %v1303, %v1305
    %v1307 = vadd.f32 %v1303, %v1306
    %vm1308 = vweird.f32 %v1302
    %vm1309 = vweird.f32 %v1303
    %vm1310 = vmor %vm1308, %vm1309
    %v1311 = vsel %vm1310, %v1303, %v1307
    %v1312 = vand.u32 2147483647, %v1302
    %vm1313 = vcmp.eq.f32.partialorder %v1312, 8.507059e+37
    %v1314 = vand.u32 %v1302, 2147483648
    %v1315 = vor.u32 1.1754944e-38, %v1314
    %v1316 = vsel %vm1313, %v1315, %v1311
    %v1317 = vmul.f32 %v1292, %v1316
    %v1318 = vmin.f32 %v1317, 1.0
    %v1319 = vmax.f32 %v1318, -1.0
    %v1320 = vmul.f32 %v437, %v437
    %v1321 = vmin.f32 16.0, %v1320
    %v1322 = vmul.f32 %v1321, 2.1237322e-06
    %v1323 = vadd.f32 %v1322, 0.00028619796
    %v1324 = vmul.f32 %v1321, %v1323
    %v1325 = vadd.f32 %v1324, 0.0036580483
    %v1326 = vmul.f32 %v1321, %v1325
    %v1327 = vadd.f32 %v1326, 0.05243302
    %v1328 = vmul.f32 %v1321, %v1327
    %v1329 = vadd.f32 %v1328, 0.18741608
    %v1330 = vmul.f32 %v1321, %v1329
    %v1331 = vadd.f32 %v1330, 1.1283791
    %v1332 = vmul.f32 %v437, %v1331
    %v1333 = vmul.f32 %v1321, 3.8918573e-05
    %v1334 = vadd.f32 %v1333, 0.001143296
    %v1335 = vmul.f32 %v1321, %v1334
    %v1336 = vadd.f32 %v1335, 0.014752088
    %v1337 = vmul.f32 %v1321, %v1336
    %v1338 = vadd.f32 %v1337, 0.112945676
    %v1339 = vmul.f32 %v1321, %v1338
    %v1340 = vadd.f32 %v1339, 0.4994258
    %v1341 = vmul.f32 %v1321, %v1340
    %v1342 = vadd.f32 %v1341, 1.0
    %v1343 = vrcp.pop %v1342
    %v1344 = vmul.f32 %v1342, %v1343
    %v1345 = vsub.f32 1.0, %v1344
    %v1346 = vmul.f32 %v1343, %v1345
    %v1347 = vadd.f32 %v1343, %v1346
    %vm1348 = vweird.f32 %v1342
    %vm1349 = vweird.f32 %v1343
    %vm1350 = vmor %vm1348, %vm1349
    %v1351 = vsel %vm1350, %v1343, %v1347
    %v1352 = vand.u32 2147483647, %v1342
    %vm1353 = vcmp.eq.f32.partialorder %v1352, 8.507059e+37
    %v1354 = vand.u32 %v1342, 2147483648
    %v1355 = vor.u32 1.1754944e-38, %v1354
    %v1356 = vsel %vm1353, %v1355, %v1351
    %v1357 = vmul.f32 %v1332, %v1356
    %v1358 = vmin.f32 %v1357, 1.0
    %v1359 = vmax.f32 %v1358, -1.0
    %v1360 = vmul.f32 %v438, %v438
    %v1361 = vmin.f32 16.0, %v1360
    %v1362 = vmul.f32 %v1361, 2.1237322e-06
    %v1363 = vadd.f32 %v1362, 0.00028619796
    %v1364 = vmul.f32 %v1361, %v1363
    %v1365 = vadd.f32 %v1364, 0.0036580483
    %v1366 = vmul.f32 %v1361, %v1365
    %v1367 = vadd.f32 %v1366, 0.05243302
    %v1368 = vmul.f32 %v1361, %v1367
    %v1369 = vadd.f32 %v1368, 0.18741608
    %v1370 = vmul.f32 %v1361, %v1369
    %v1371 = vadd.f32 %v1370, 1.1283791
    %v1372 = vmul.f32 %v438, %v1371
    %v1373 = vmul.f32 %v1361, 3.8918573e-05
    %v1374 = vadd.f32 %v1373, 0.001143296
    %v1375 = vmul.f32 %v1361, %v1374
    %v1376 = vadd.f32 %v1375, 0.014752088
    %v1377 = vmul.f32 %v1361, %v1376
    %v1378 = vadd.f32 %v1377, 0.112945676
    %v1379 = vmul.f32 %v1361, %v1378
    %v1380 = vadd.f32 %v1379, 0.4994258
    %v1381 = vmul.f32 %v1361, %v1380
    %v1382 = vadd.f32 %v1381, 1.0
    %v1383 = vrcp.pop %v1382
    %v1384 = vmul.f32 %v1382, %v1383
    %v1385 = vsub.f32 1.0, %v1384
    %v1386 = vmul.f32 %v1383, %v1385
    %v1387 = vadd.f32 %v1383, %v1386
    %vm1388 = vweird.f32 %v1382
    %vm1389 = vweird.f32 %v1383
    %vm1390 = vmor %vm1388, %vm1389
    %v1391 = vsel %vm1390, %v1383, %v1387
    %v1392 = vand.u32 2147483647, %v1382
    %vm1393 = vcmp.eq.f32.partialorder %v1392, 8.507059e+37
    %v1394 = vand.u32 %v1382, 2147483648
    %v1395 = vor.u32 1.1754944e-38, %v1394
    %v1396 = vsel %vm1393, %v1395, %v1391
    %v1397 = vmul.f32 %v1372, %v1396
    %v1398 = vmin.f32 %v1397, 1.0
    %v1399 = vmax.f32 %v1398, -1.0
    %v1400 = vmul.f32 %v439, %v439
    %v1401 = vmin.f32 16.0, %v1400
    %v1402 = vmul.f32 %v1401, 2.1237322e-06
    %v1403 = vadd.f32 %v1402, 0.00028619796
    %v1404 = vmul.f32 %v1401, %v1403
    %v1405 = vadd.f32 %v1404, 0.0036580483
    %v1406 = vmul.f32 %v1401, %v1405
    %v1407 = vadd.f32 %v1406, 0.05243302
    %v1408 = vmul.f32 %v1401, %v1407
    %v1409 = vadd.f32 %v1408, 0.18741608
    %v1410 = vmul.f32 %v1401, %v1409
    %v1411 = vadd.f32 %v1410, 1.1283791
    %v1412 = vmul.f32 %v439, %v1411
    %v1413 = vmul.f32 %v1401, 3.8918573e-05
    %v1414 = vadd.f32 %v1413, 0.001143296
    %v1415 = vmul.f32 %v1401, %v1414
    %v1416 = vadd.f32 %v1415, 0.014752088
    %v1417 = vmul.f32 %v1401, %v1416
    %v1418 = vadd.f32 %v1417, 0.112945676
    %v1419 = vmul.f32 %v1401, %v1418
    %v1420 = vadd.f32 %v1419, 0.4994258
    %v1421 = vmul.f32 %v1401, %v1420
    %v1422 = vadd.f32 %v1421, 1.0
    %v1423 = vrcp.pop %v1422
    %v1424 = vmul.f32 %v1422, %v1423
    %v1425 = vsub.f32 1.0, %v1424
    %v1426 = vmul.f32 %v1423, %v1425
    %v1427 = vadd.f32 %v1423, %v1426
    %vm1428 = vweird.f32 %v1422
    %vm1429 = vweird.f32 %v1423
    %vm1430 = vmor %vm1428, %vm1429
    %v1431 = vsel %vm1430, %v1423, %v1427
    %v1432 = vand.u32 2147483647, %v1422
    %vm1433 = vcmp.eq.f32.partialorder %v1432, 8.507059e+37
    %v1434 = vand.u32 %v1422, 2147483648
    %v1435 = vor.u32 1.1754944e-38, %v1434
    %v1436 = vsel %vm1433, %v1435, %v1431
    %v1437 = vmul.f32 %v1412, %v1436
    %v1438 = vmin.f32 %v1437, 1.0
    %v1439 = vmax.f32 %v1438, -1.0
    %v1440 = vmul.f32 %v440, %v440
    %v1441 = vmin.f32 16.0, %v1440
    %v1442 = vmul.f32 %v1441, 2.1237322e-06
    %v1443 = vadd.f32 %v1442, 0.00028619796
    %v1444 = vmul.f32 %v1441, %v1443
    %v1445 = vadd.f32 %v1444, 0.0036580483
    %v1446 = vmul.f32 %v1441, %v1445
    %v1447 = vadd.f32 %v1446, 0.05243302
    %v1448 = vmul.f32 %v1441, %v1447
    %v1449 = vadd.f32 %v1448, 0.18741608
    %v1450 = vmul.f32 %v1441, %v1449
    %v1451 = vadd.f32 %v1450, 1.1283791
    %v1452 = vmul.f32 %v440, %v1451
    %v1453 = vmul.f32 %v1441, 3.8918573e-05
    %v1454 = vadd.f32 %v1453, 0.001143296
    %v1455 = vmul.f32 %v1441, %v1454
    %v1456 = vadd.f32 %v1455, 0.014752088
    %v1457 = vmul.f32 %v1441, %v1456
    %v1458 = vadd.f32 %v1457, 0.112945676
    %v1459 = vmul.f32 %v1441, %v1458
    %v1460 = vadd.f32 %v1459, 0.4994258
    %v1461 = vmul.f32 %v1441, %v1460
    %v1462 = vadd.f32 %v1461, 1.0
    %v1463 = vrcp.pop %v1462
    %v1464 = vmul.f32 %v1462, %v1463
    %v1465 = vsub.f32 1.0, %v1464
    %v1466 = vmul.f32 %v1463, %v1465
    %v1467 = vadd.f32 %v1463, %v1466
    %vm1468 = vweird.f32 %v1462
    %vm1469 = vweird.f32 %v1463
    %vm1470 = vmor %vm1468, %vm1469
    %v1471 = vsel %vm1470, %v1463, %v1467
    %v1472 = vand.u32 2147483647, %v1462
    %vm1473 = vcmp.eq.f32.partialorder %v1472, 8.507059e+37
    %v1474 = vand.u32 %v1462, 2147483648
    %v1475 = vor.u32 1.1754944e-38, %v1474
    %v1476 = vsel %vm1473, %v1475, %v1471
    %v1477 = vmul.f32 %v1452, %v1476
    %v1478 = vmin.f32 %v1477, 1.0
    %v1479 = vmax.f32 %v1478, -1.0
    %v1480 = vmul.f32 %v441, %v441
    %v1481 = vmin.f32 16.0, %v1480
    %v1482 = vmul.f32 %v1481, 2.1237322e-06
    %v1483 = vadd.f32 %v1482, 0.00028619796
    %v1484 = vmul.f32 %v1481, %v1483
    %v1485 = vadd.f32 %v1484, 0.0036580483
    %v1486 = vmul.f32 %v1481, %v1485
    %v1487 = vadd.f32 %v1486, 0.05243302
    %v1488 = vmul.f32 %v1481, %v1487
    %v1489 = vadd.f32 %v1488, 0.18741608
    %v1490 = vmul.f32 %v1481, %v1489
    %v1491 = vadd.f32 %v1490, 1.1283791
    %v1492 = vmul.f32 %v441, %v1491
    %v1493 = vmul.f32 %v1481, 3.8918573e-05
    %v1494 = vadd.f32 %v1493, 0.001143296
    %v1495 = vmul.f32 %v1481, %v1494
    %v1496 = vadd.f32 %v1495, 0.014752088
    %v1497 = vmul.f32 %v1481, %v1496
    %v1498 = vadd.f32 %v1497, 0.112945676
    %v1499 = vmul.f32 %v1481, %v1498
    %v1500 = vadd.f32 %v1499, 0.4994258
    %v1501 = vmul.f32 %v1481, %v1500
    %v1502 = vadd.f32 %v1501, 1.0
    %v1503 = vrcp.pop %v1502
    %v1504 = vmul.f32 %v1502, %v1503
    %v1505 = vsub.f32 1.0, %v1504
    %v1506 = vmul.f32 %v1503, %v1505
    %v1507 = vadd.f32 %v1503, %v1506
    %vm1508 = vweird.f32 %v1502
    %vm1509 = vweird.f32 %v1503
    %vm1510 = vmor %vm1508, %vm1509
    %v1511 = vsel %vm1510, %v1503, %v1507
    %v1512 = vand.u32 2147483647, %v1502
    %vm1513 = vcmp.eq.f32.partialorder %v1512, 8.507059e+37
    %v1514 = vand.u32 %v1502, 2147483648
    %v1515 = vor.u32 1.1754944e-38, %v1514
    %v1516 = vsel %vm1513, %v1515, %v1511
    %v1517 = vmul.f32 %v1492, %v1516
    %v1518 = vmin.f32 %v1517, 1.0
    %v1519 = vmax.f32 %v1518, -1.0
    %v1520 = vmul.f32 %v442, %v442
    %v1521 = vmin.f32 16.0, %v1520
    %v1522 = vmul.f32 %v1521, 2.1237322e-06
    %v1523 = vadd.f32 %v1522, 0.00028619796
    %v1524 = vmul.f32 %v1521, %v1523
    %v1525 = vadd.f32 %v1524, 0.0036580483
    %v1526 = vmul.f32 %v1521, %v1525
    %v1527 = vadd.f32 %v1526, 0.05243302
    %v1528 = vmul.f32 %v1521, %v1527
    %v1529 = vadd.f32 %v1528, 0.18741608
    %v1530 = vmul.f32 %v1521, %v1529
    %v1531 = vadd.f32 %v1530, 1.1283791
    %v1532 = vmul.f32 %v442, %v1531
    %v1533 = vmul.f32 %v1521, 3.8918573e-05
    %v1534 = vadd.f32 %v1533, 0.001143296
    %v1535 = vmul.f32 %v1521, %v1534
    %v1536 = vadd.f32 %v1535, 0.014752088
    %v1537 = vmul.f32 %v1521, %v1536
    %v1538 = vadd.f32 %v1537, 0.112945676
    %v1539 = vmul.f32 %v1521, %v1538
    %v1540 = vadd.f32 %v1539, 0.4994258
    %v1541 = vmul.f32 %v1521, %v1540
    %v1542 = vadd.f32 %v1541, 1.0
    %v1543 = vrcp.pop %v1542
    %v1544 = vmul.f32 %v1542, %v1543
    %v1545 = vsub.f32 1.0, %v1544
    %v1546 = vmul.f32 %v1543, %v1545
    %v1547 = vadd.f32 %v1543, %v1546
    %vm1548 = vweird.f32 %v1542
    %vm1549 = vweird.f32 %v1543
    %vm1550 = vmor %vm1548, %vm1549
    %v1551 = vsel %vm1550, %v1543, %v1547
    %v1552 = vand.u32 2147483647, %v1542
    %vm1553 = vcmp.eq.f32.partialorder %v1552, 8.507059e+37
    %v1554 = vand.u32 %v1542, 2147483648
    %v1555 = vor.u32 1.1754944e-38, %v1554
    %v1556 = vsel %vm1553, %v1555, %v1551
    %v1557 = vmul.f32 %v1532, %v1556
    %v1558 = vmin.f32 %v1557, 1.0
    %v1559 = vmax.f32 %v1558, -1.0
    %v1560 = vmul.f32 %v443, %v443
    %v1561 = vmin.f32 16.0, %v1560
    %v1562 = vmul.f32 %v1561, 2.1237322e-06
    %v1563 = vadd.f32 %v1562, 0.00028619796
    %v1564 = vmul.f32 %v1561, %v1563
    %v1565 = vadd.f32 %v1564, 0.0036580483
    %v1566 = vmul.f32 %v1561, %v1565
    %v1567 = vadd.f32 %v1566, 0.05243302
    %v1568 = vmul.f32 %v1561, %v1567
    %v1569 = vadd.f32 %v1568, 0.18741608
    %v1570 = vmul.f32 %v1561, %v1569
    %v1571 = vadd.f32 %v1570, 1.1283791
    %v1572 = vmul.f32 %v443, %v1571
    %v1573 = vmul.f32 %v1561, 3.8918573e-05
    %v1574 = vadd.f32 %v1573, 0.001143296
    %v1575 = vmul.f32 %v1561, %v1574
    %v1576 = vadd.f32 %v1575, 0.014752088
    %v1577 = vmul.f32 %v1561, %v1576
    %v1578 = vadd.f32 %v1577, 0.112945676
    %v1579 = vmul.f32 %v1561, %v1578
    %v1580 = vadd.f32 %v1579, 0.4994258
    %v1581 = vmul.f32 %v1561, %v1580
    %v1582 = vadd.f32 %v1581, 1.0
    %v1583 = vrcp.pop %v1582
    %v1584 = vmul.f32 %v1582, %v1583
    %v1585 = vsub.f32 1.0, %v1584
    %v1586 = vmul.f32 %v1583, %v1585
    %v1587 = vadd.f32 %v1583, %v1586
    %vm1588 = vweird.f32 %v1582
    %vm1589 = vweird.f32 %v1583
    %vm1590 = vmor %vm1588, %vm1589
    %v1591 = vsel %vm1590, %v1583, %v1587
    %v1592 = vand.u32 2147483647, %v1582
    %vm1593 = vcmp.eq.f32.partialorder %v1592, 8.507059e+37
    %v1594 = vand.u32 %v1582, 2147483648
    %v1595 = vor.u32 1.1754944e-38, %v1594
    %v1596 = vsel %vm1593, %v1595, %v1591
    %v1597 = vmul.f32 %v1572, %v1596
    %v1598 = vmin.f32 %v1597, 1.0
    %v1599 = vmax.f32 %v1598, -1.0
    %v1600 = vmul.f32 %v444, %v444
    %v1601 = vmin.f32 16.0, %v1600
    %v1602 = vmul.f32 %v1601, 2.1237322e-06
    %v1603 = vadd.f32 %v1602, 0.00028619796
    %v1604 = vmul.f32 %v1601, %v1603
    %v1605 = vadd.f32 %v1604, 0.0036580483
    %v1606 = vmul.f32 %v1601, %v1605
    %v1607 = vadd.f32 %v1606, 0.05243302
    %v1608 = vmul.f32 %v1601, %v1607
    %v1609 = vadd.f32 %v1608, 0.18741608
    %v1610 = vmul.f32 %v1601, %v1609
    %v1611 = vadd.f32 %v1610, 1.1283791
    %v1612 = vmul.f32 %v444, %v1611
    %v1613 = vmul.f32 %v1601, 3.8918573e-05
    %v1614 = vadd.f32 %v1613, 0.001143296
    %v1615 = vmul.f32 %v1601, %v1614
    %v1616 = vadd.f32 %v1615, 0.014752088
    %v1617 = vmul.f32 %v1601, %v1616
    %v1618 = vadd.f32 %v1617, 0.112945676
    %v1619 = vmul.f32 %v1601, %v1618
    %v1620 = vadd.f32 %v1619, 0.4994258
    %v1621 = vmul.f32 %v1601, %v1620
    %v1622 = vadd.f32 %v1621, 1.0
    %v1623 = vrcp.pop %v1622
    %v1624 = vmul.f32 %v1622, %v1623
    %v1625 = vsub.f32 1.0, %v1624
    %v1626 = vmul.f32 %v1623, %v1625
    %v1627 = vadd.f32 %v1623, %v1626
    %vm1628 = vweird.f32 %v1622
    %vm1629 = vweird.f32 %v1623
    %vm1630 = vmor %vm1628, %vm1629
    %v1631 = vsel %vm1630, %v1623, %v1627
    %v1632 = vand.u32 2147483647, %v1622
    %vm1633 = vcmp.eq.f32.partialorder %v1632, 8.507059e+37
    %v1634 = vand.u32 %v1622, 2147483648
    %v1635 = vor.u32 1.1754944e-38, %v1634
    %v1636 = vsel %vm1633, %v1635, %v1631
    %v1637 = vmul.f32 %v1612, %v1636
    %v1638 = vmin.f32 %v1637, 1.0
    %v1639 = vmax.f32 %v1638, -1.0
    %v1640 = vmul.f32 %v445, %v445
    %v1641 = vmin.f32 16.0, %v1640
    %v1642 = vmul.f32 %v1641, 2.1237322e-06
    %v1643 = vadd.f32 %v1642, 0.00028619796
    %v1644 = vmul.f32 %v1641, %v1643
    %v1645 = vadd.f32 %v1644, 0.0036580483
    %v1646 = vmul.f32 %v1641, %v1645
    %v1647 = vadd.f32 %v1646, 0.05243302
    %v1648 = vmul.f32 %v1641, %v1647
    %v1649 = vadd.f32 %v1648, 0.18741608
    %v1650 = vmul.f32 %v1641, %v1649
    %v1651 = vadd.f32 %v1650, 1.1283791
    %v1652 = vmul.f32 %v445, %v1651
    %v1653 = vmul.f32 %v1641, 3.8918573e-05
    %v1654 = vadd.f32 %v1653, 0.001143296
    %v1655 = vmul.f32 %v1641, %v1654
    %v1656 = vadd.f32 %v1655, 0.014752088
    %v1657 = vmul.f32 %v1641, %v1656
    %v1658 = vadd.f32 %v1657, 0.112945676
    %v1659 = vmul.f32 %v1641, %v1658
    %v1660 = vadd.f32 %v1659, 0.4994258
    %v1661 = vmul.f32 %v1641, %v1660
    %v1662 = vadd.f32 %v1661, 1.0
    %v1663 = vrcp.pop %v1662
    %v1664 = vmul.f32 %v1662, %v1663
    %v1665 = vsub.f32 1.0, %v1664
    %v1666 = vmul.f32 %v1663, %v1665
    %v1667 = vadd.f32 %v1663, %v1666
    %vm1668 = vweird.f32 %v1662
    %vm1669 = vweird.f32 %v1663
    %vm1670 = vmor %vm1668, %vm1669
    %v1671 = vsel %vm1670, %v1663, %v1667
    %v1672 = vand.u32 2147483647, %v1662
    %vm1673 = vcmp.eq.f32.partialorder %v1672, 8.507059e+37
    %v1674 = vand.u32 %v1662, 2147483648
    %v1675 = vor.u32 1.1754944e-38, %v1674
    %v1676 = vsel %vm1673, %v1675, %v1671
    %v1677 = vmul.f32 %v1652, %v1676
    %v1678 = vmin.f32 %v1677, 1.0
    %v1679 = vmax.f32 %v1678, -1.0
    %v1680 = vmul.f32 %v446, %v446
    %v1681 = vmin.f32 16.0, %v1680
    %v1682 = vmul.f32 %v1681, 2.1237322e-06
    %v1683 = vadd.f32 %v1682, 0.00028619796
    %v1684 = vmul.f32 %v1681, %v1683
    %v1685 = vadd.f32 %v1684, 0.0036580483
    %v1686 = vmul.f32 %v1681, %v1685
    %v1687 = vadd.f32 %v1686, 0.05243302
    %v1688 = vmul.f32 %v1681, %v1687
    %v1689 = vadd.f32 %v1688, 0.18741608
    %v1690 = vmul.f32 %v1681, %v1689
    %v1691 = vadd.f32 %v1690, 1.1283791
    %v1692 = vmul.f32 %v446, %v1691
    %v1693 = vmul.f32 %v1681, 3.8918573e-05
    %v1694 = vadd.f32 %v1693, 0.001143296
    %v1695 = vmul.f32 %v1681, %v1694
    %v1696 = vadd.f32 %v1695, 0.014752088
    %v1697 = vmul.f32 %v1681, %v1696
    %v1698 = vadd.f32 %v1697, 0.112945676
    %v1699 = vmul.f32 %v1681, %v1698
    %v1700 = vadd.f32 %v1699, 0.4994258
    %v1701 = vmul.f32 %v1681, %v1700
    %v1702 = vadd.f32 %v1701, 1.0
    %v1703 = vrcp.pop %v1702
    %v1704 = vmul.f32 %v1702, %v1703
    %v1705 = vsub.f32 1.0, %v1704
    %v1706 = vmul.f32 %v1703, %v1705
    %v1707 = vadd.f32 %v1703, %v1706
    %vm1708 = vweird.f32 %v1702
    %vm1709 = vweird.f32 %v1703
    %vm1710 = vmor %vm1708, %vm1709
    %v1711 = vsel %vm1710, %v1703, %v1707
    %v1712 = vand.u32 2147483647, %v1702
    %vm1713 = vcmp.eq.f32.partialorder %v1712, 8.507059e+37
    %v1714 = vand.u32 %v1702, 2147483648
    %v1715 = vor.u32 1.1754944e-38, %v1714
    %v1716 = vsel %vm1713, %v1715, %v1711
    %v1717 = vmul.f32 %v1692, %v1716
    %v1718 = vmin.f32 %v1717, 1.0
    %v1719 = vmax.f32 %v1718, -1.0
    %v1720 = vmul.f32 %v447, %v447
    %v1721 = vmin.f32 16.0, %v1720
    %v1722 = vmul.f32 %v1721, 2.1237322e-06
    %v1723 = vadd.f32 %v1722, 0.00028619796
    %v1724 = vmul.f32 %v1721, %v1723
    %v1725 = vadd.f32 %v1724, 0.0036580483
    %v1726 = vmul.f32 %v1721, %v1725
    %v1727 = vadd.f32 %v1726, 0.05243302
    %v1728 = vmul.f32 %v1721, %v1727
    %v1729 = vadd.f32 %v1728, 0.18741608
    %v1730 = vmul.f32 %v1721, %v1729
    %v1731 = vadd.f32 %v1730, 1.1283791
    %v1732 = vmul.f32 %v447, %v1731
    %v1733 = vmul.f32 %v1721, 3.8918573e-05
    %v1734 = vadd.f32 %v1733, 0.001143296
    %v1735 = vmul.f32 %v1721, %v1734
    %v1736 = vadd.f32 %v1735, 0.014752088
    %v1737 = vmul.f32 %v1721, %v1736
    %v1738 = vadd.f32 %v1737, 0.112945676
    %v1739 = vmul.f32 %v1721, %v1738
    %v1740 = vadd.f32 %v1739, 0.4994258
    %v1741 = vmul.f32 %v1721, %v1740
    %v1742 = vadd.f32 %v1741, 1.0
    %v1743 = vrcp.pop %v1742
    %v1744 = vmul.f32 %v1742, %v1743
    %v1745 = vsub.f32 1.0, %v1744
    %v1746 = vmul.f32 %v1743, %v1745
    %v1747 = vadd.f32 %v1743, %v1746
    %vm1748 = vweird.f32 %v1742
    %vm1749 = vweird.f32 %v1743
    %vm1750 = vmor %vm1748, %vm1749
    %v1751 = vsel %vm1750, %v1743, %v1747
    %v1752 = vand.u32 2147483647, %v1742
    %vm1753 = vcmp.eq.f32.partialorder %v1752, 8.507059e+37
    %v1754 = vand.u32 %v1742, 2147483648
    %v1755 = vor.u32 1.1754944e-38, %v1754
    %v1756 = vsel %vm1753, %v1755, %v1751
    %v1757 = vmul.f32 %v1732, %v1756
    %v1758 = vmin.f32 %v1757, 1.0
    %v1759 = vmax.f32 %v1758, -1.0
    %v1760 = vmul.f32 %v448, %v448
    %v1761 = vmin.f32 16.0, %v1760
    %v1762 = vmul.f32 %v1761, 2.1237322e-06
    %v1763 = vadd.f32 %v1762, 0.00028619796
    %v1764 = vmul.f32 %v1761, %v1763
    %v1765 = vadd.f32 %v1764, 0.0036580483
    %v1766 = vmul.f32 %v1761, %v1765
    %v1767 = vadd.f32 %v1766, 0.05243302
    %v1768 = vmul.f32 %v1761, %v1767
    %v1769 = vadd.f32 %v1768, 0.18741608
    %v1770 = vmul.f32 %v1761, %v1769
    %v1771 = vadd.f32 %v1770, 1.1283791
    %v1772 = vmul.f32 %v448, %v1771
    %v1773 = vmul.f32 %v1761, 3.8918573e-05
    %v1774 = vadd.f32 %v1773, 0.001143296
    %v1775 = vmul.f32 %v1761, %v1774
    %v1776 = vadd.f32 %v1775, 0.014752088
    %v1777 = vmul.f32 %v1761, %v1776
    %v1778 = vadd.f32 %v1777, 0.112945676
    %v1779 = vmul.f32 %v1761, %v1778
    %v1780 = vadd.f32 %v1779, 0.4994258
    %v1781 = vmul.f32 %v1761, %v1780
    %v1782 = vadd.f32 %v1781, 1.0
    %v1783 = vrcp.pop %v1782
    %v1784 = vmul.f32 %v1782, %v1783
    %v1785 = vsub.f32 1.0, %v1784
    %v1786 = vmul.f32 %v1783, %v1785
    %v1787 = vadd.f32 %v1783, %v1786
    %vm1788 = vweird.f32 %v1782
    %vm1789 = vweird.f32 %v1783
    %vm1790 = vmor %vm1788, %vm1789
    %v1791 = vsel %vm1790, %v1783, %v1787
    %v1792 = vand.u32 2147483647, %v1782
    %vm1793 = vcmp.eq.f32.partialorder %v1792, 8.507059e+37
    %v1794 = vand.u32 %v1782, 2147483648
    %v1795 = vor.u32 1.1754944e-38, %v1794
    %v1796 = vsel %vm1793, %v1795, %v1791
    %v1797 = vmul.f32 %v1772, %v1796
    %v1798 = vmin.f32 %v1797, 1.0
    %v1799 = vmax.f32 %v1798, -1.0
    %v1800 = vmul.f32 %v449, %v449
    %v1801 = vmin.f32 16.0, %v1800
    %v1802 = vmul.f32 %v1801, 2.1237322e-06
    %v1803 = vadd.f32 %v1802, 0.00028619796
    %v1804 = vmul.f32 %v1801, %v1803
    %v1805 = vadd.f32 %v1804, 0.0036580483
    %v1806 = vmul.f32 %v1801, %v1805
    %v1807 = vadd.f32 %v1806, 0.05243302
    %v1808 = vmul.f32 %v1801, %v1807
    %v1809 = vadd.f32 %v1808, 0.18741608
    %v1810 = vmul.f32 %v1801, %v1809
    %v1811 = vadd.f32 %v1810, 1.1283791
    %v1812 = vmul.f32 %v449, %v1811
    %v1813 = vmul.f32 %v1801, 3.8918573e-05
    %v1814 = vadd.f32 %v1813, 0.001143296
    %v1815 = vmul.f32 %v1801, %v1814
    %v1816 = vadd.f32 %v1815, 0.014752088
    %v1817 = vmul.f32 %v1801, %v1816
    %v1818 = vadd.f32 %v1817, 0.112945676
    %v1819 = vmul.f32 %v1801, %v1818
    %v1820 = vadd.f32 %v1819, 0.4994258
    %v1821 = vmul.f32 %v1801, %v1820
    %v1822 = vadd.f32 %v1821, 1.0
    %v1823 = vrcp.pop %v1822
    %v1824 = vmul.f32 %v1822, %v1823
    %v1825 = vsub.f32 1.0, %v1824
    %v1826 = vmul.f32 %v1823, %v1825
    %v1827 = vadd.f32 %v1823, %v1826
    %vm1828 = vweird.f32 %v1822
    %vm1829 = vweird.f32 %v1823
    %vm1830 = vmor %vm1828, %vm1829
    %v1831 = vsel %vm1830, %v1823, %v1827
    %v1832 = vand.u32 2147483647, %v1822
    %vm1833 = vcmp.eq.f32.partialorder %v1832, 8.507059e+37
    %v1834 = vand.u32 %v1822, 2147483648
    %v1835 = vor.u32 1.1754944e-38, %v1834
    %v1836 = vsel %vm1833, %v1835, %v1831
    %v1837 = vmul.f32 %v1812, %v1836
    %v1838 = vmin.f32 %v1837, 1.0
    %v1839 = vmax.f32 %v1838, -1.0
    %v1840 = vmul.f32 %v450, %v450
    %v1841 = vmin.f32 16.0, %v1840
    %v1842 = vmul.f32 %v1841, 2.1237322e-06
    %v1843 = vadd.f32 %v1842, 0.00028619796
    %v1844 = vmul.f32 %v1841, %v1843
    %v1845 = vadd.f32 %v1844, 0.0036580483
    %v1846 = vmul.f32 %v1841, %v1845
    %v1847 = vadd.f32 %v1846, 0.05243302
    %v1848 = vmul.f32 %v1841, %v1847
    %v1849 = vadd.f32 %v1848, 0.18741608
    %v1850 = vmul.f32 %v1841, %v1849
    %v1851 = vadd.f32 %v1850, 1.1283791
    %v1852 = vmul.f32 %v450, %v1851
    %v1853 = vmul.f32 %v1841, 3.8918573e-05
    %v1854 = vadd.f32 %v1853, 0.001143296
    %v1855 = vmul.f32 %v1841, %v1854
    %v1856 = vadd.f32 %v1855, 0.014752088
    %v1857 = vmul.f32 %v1841, %v1856
    %v1858 = vadd.f32 %v1857, 0.112945676
    %v1859 = vmul.f32 %v1841, %v1858
    %v1860 = vadd.f32 %v1859, 0.4994258
    %v1861 = vmul.f32 %v1841, %v1860
    %v1862 = vadd.f32 %v1861, 1.0
    %v1863 = vrcp.pop %v1862
    %v1864 = vmul.f32 %v1862, %v1863
    %v1865 = vsub.f32 1.0, %v1864
    %v1866 = vmul.f32 %v1863, %v1865
    %v1867 = vadd.f32 %v1863, %v1866
    %vm1868 = vweird.f32 %v1862
    %vm1869 = vweird.f32 %v1863
    %vm1870 = vmor %vm1868, %vm1869
    %v1871 = vsel %vm1870, %v1863, %v1867
    %v1872 = vand.u32 2147483647, %v1862
    %vm1873 = vcmp.eq.f32.partialorder %v1872, 8.507059e+37
    %v1874 = vand.u32 %v1862, 2147483648
    %v1875 = vor.u32 1.1754944e-38, %v1874
    %v1876 = vsel %vm1873, %v1875, %v1871
    %v1877 = vmul.f32 %v1852, %v1876
    %v1878 = vmin.f32 %v1877, 1.0
    %v1879 = vmax.f32 %v1878, -1.0
    %v1880 = vmul.f32 %v451, %v451
    %v1881 = vmin.f32 16.0, %v1880
    %v1882 = vmul.f32 %v1881, 2.1237322e-06
    %v1883 = vadd.f32 %v1882, 0.00028619796
    %v1884 = vmul.f32 %v1881, %v1883
    %v1885 = vadd.f32 %v1884, 0.0036580483
    %v1886 = vmul.f32 %v1881, %v1885
    %v1887 = vadd.f32 %v1886, 0.05243302
    %v1888 = vmul.f32 %v1881, %v1887
    %v1889 = vadd.f32 %v1888, 0.18741608
    %v1890 = vmul.f32 %v1881, %v1889
    %v1891 = vadd.f32 %v1890, 1.1283791
    %v1892 = vmul.f32 %v451, %v1891
    %v1893 = vmul.f32 %v1881, 3.8918573e-05
    %v1894 = vadd.f32 %v1893, 0.001143296
    %v1895 = vmul.f32 %v1881, %v1894
    %v1896 = vadd.f32 %v1895, 0.014752088
    %v1897 = vmul.f32 %v1881, %v1896
    %v1898 = vadd.f32 %v1897, 0.112945676
    %v1899 = vmul.f32 %v1881, %v1898
    %v1900 = vadd.f32 %v1899, 0.4994258
    %v1901 = vmul.f32 %v1881, %v1900
    %v1902 = vadd.f32 %v1901, 1.0
    %v1903 = vrcp.pop %v1902
    %v1904 = vmul.f32 %v1902, %v1903
    %v1905 = vsub.f32 1.0, %v1904
    %v1906 = vmul.f32 %v1903, %v1905
    %v1907 = vadd.f32 %v1903, %v1906
    %vm1908 = vweird.f32 %v1902
    %vm1909 = vweird.f32 %v1903
    %vm1910 = vmor %vm1908, %vm1909
    %v1911 = vsel %vm1910, %v1903, %v1907
    %v1912 = vand.u32 2147483647, %v1902
    %vm1913 = vcmp.eq.f32.partialorder %v1912, 8.507059e+37
    %v1914 = vand.u32 %v1902, 2147483648
    %v1915 = vor.u32 1.1754944e-38, %v1914
    %v1916 = vsel %vm1913, %v1915, %v1911
    %v1917 = vmul.f32 %v1892, %v1916
    %v1918 = vmin.f32 %v1917, 1.0
    %v1919 = vmax.f32 %v1918, -1.0
    %v1920 = vmul.f32 %v452, %v452
    %v1921 = vmin.f32 16.0, %v1920
    %v1922 = vmul.f32 %v1921, 2.1237322e-06
    %v1923 = vadd.f32 %v1922, 0.00028619796
    %v1924 = vmul.f32 %v1921, %v1923
    %v1925 = vadd.f32 %v1924, 0.0036580483
    %v1926 = vmul.f32 %v1921, %v1925
    %v1927 = vadd.f32 %v1926, 0.05243302
    %v1928 = vmul.f32 %v1921, %v1927
    %v1929 = vadd.f32 %v1928, 0.18741608
    %v1930 = vmul.f32 %v1921, %v1929
    %v1931 = vadd.f32 %v1930, 1.1283791
    %v1932 = vmul.f32 %v452, %v1931
    %v1933 = vmul.f32 %v1921, 3.8918573e-05
    %v1934 = vadd.f32 %v1933, 0.001143296
    %v1935 = vmul.f32 %v1921, %v1934
    %v1936 = vadd.f32 %v1935, 0.014752088
    %v1937 = vmul.f32 %v1921, %v1936
    %v1938 = vadd.f32 %v1937, 0.112945676
    %v1939 = vmul.f32 %v1921, %v1938
    %v1940 = vadd.f32 %v1939, 0.4994258
    %v1941 = vmul.f32 %v1921, %v1940
    %v1942 = vadd.f32 %v1941, 1.0
    %v1943 = vrcp.pop %v1942
    %v1944 = vmul.f32 %v1942, %v1943
    %v1945 = vsub.f32 1.0, %v1944
    %v1946 = vmul.f32 %v1943, %v1945
    %v1947 = vadd.f32 %v1943, %v1946
    %vm1948 = vweird.f32 %v1942
    %vm1949 = vweird.f32 %v1943
    %vm1950 = vmor %vm1948, %vm1949
    %v1951 = vsel %vm1950, %v1943, %v1947
    %v1952 = vand.u32 2147483647, %v1942
    %vm1953 = vcmp.eq.f32.partialorder %v1952, 8.507059e+37
    %v1954 = vand.u32 %v1942, 2147483648
    %v1955 = vor.u32 1.1754944e-38, %v1954
    %v1956 = vsel %vm1953, %v1955, %v1951
    %v1957 = vmul.f32 %v1932, %v1956
    %v1958 = vmin.f32 %v1957, 1.0
    %v1959 = vmax.f32 %v1958, -1.0
    %v1960 = vmul.f32 %v453, %v453
    %v1961 = vmin.f32 16.0, %v1960
    %v1962 = vmul.f32 %v1961, 2.1237322e-06
    %v1963 = vadd.f32 %v1962, 0.00028619796
    %v1964 = vmul.f32 %v1961, %v1963
    %v1965 = vadd.f32 %v1964, 0.0036580483
    %v1966 = vmul.f32 %v1961, %v1965
    %v1967 = vadd.f32 %v1966, 0.05243302
    %v1968 = vmul.f32 %v1961, %v1967
    %v1969 = vadd.f32 %v1968, 0.18741608
    %v1970 = vmul.f32 %v1961, %v1969
    %v1971 = vadd.f32 %v1970, 1.1283791
    %v1972 = vmul.f32 %v453, %v1971
    %v1973 = vmul.f32 %v1961, 3.8918573e-05
    %v1974 = vadd.f32 %v1973, 0.001143296
    %v1975 = vmul.f32 %v1961, %v1974
    %v1976 = vadd.f32 %v1975, 0.014752088
    %v1977 = vmul.f32 %v1961, %v1976
    %v1978 = vadd.f32 %v1977, 0.112945676
    %v1979 = vmul.f32 %v1961, %v1978
    %v1980 = vadd.f32 %v1979, 0.4994258
    %v1981 = vmul.f32 %v1961, %v1980
    %v1982 = vadd.f32 %v1981, 1.0
    %v1983 = vrcp.pop %v1982
    %v1984 = vmul.f32 %v1982, %v1983
    %v1985 = vsub.f32 1.0, %v1984
    %v1986 = vmul.f32 %v1983, %v1985
    %v1987 = vadd.f32 %v1983, %v1986
    %vm1988 = vweird.f32 %v1982
    %vm1989 = vweird.f32 %v1983
    %vm1990 = vmor %vm1988, %vm1989
    %v1991 = vsel %vm1990, %v1983, %v1987
    %v1992 = vand.u32 2147483647, %v1982
    %vm1993 = vcmp.eq.f32.partialorder %v1992, 8.507059e+37
    %v1994 = vand.u32 %v1982, 2147483648
    %v1995 = vor.u32 1.1754944e-38, %v1994
    %v1996 = vsel %vm1993, %v1995, %v1991
    %v1997 = vmul.f32 %v1972, %v1996
    %v1998 = vmin.f32 %v1997, 1.0
    %v1999 = vmax.f32 %v1998, -1.0
    %v2000 = vmul.f32 %v454, %v454
    %v2001 = vmin.f32 16.0, %v2000
    %v2002 = vmul.f32 %v2001, 2.1237322e-06
    %v2003 = vadd.f32 %v2002, 0.00028619796
    %v2004 = vmul.f32 %v2001, %v2003
    %v2005 = vadd.f32 %v2004, 0.0036580483
    %v2006 = vmul.f32 %v2001, %v2005
    %v2007 = vadd.f32 %v2006, 0.05243302
    %v2008 = vmul.f32 %v2001, %v2007
    %v2009 = vadd.f32 %v2008, 0.18741608
    %v2010 = vmul.f32 %v2001, %v2009
    %v2011 = vadd.f32 %v2010, 1.1283791
    %v2012 = vmul.f32 %v454, %v2011
    %v2013 = vmul.f32 %v2001, 3.8918573e-05
    %v2014 = vadd.f32 %v2013, 0.001143296
    %v2015 = vmul.f32 %v2001, %v2014
    %v2016 = vadd.f32 %v2015, 0.014752088
    %v2017 = vmul.f32 %v2001, %v2016
    %v2018 = vadd.f32 %v2017, 0.112945676
    %v2019 = vmul.f32 %v2001, %v2018
    %v2020 = vadd.f32 %v2019, 0.4994258
    %v2021 = vmul.f32 %v2001, %v2020
    %v2022 = vadd.f32 %v2021, 1.0
    %v2023 = vrcp.pop %v2022
    %v2024 = vmul.f32 %v2022, %v2023
    %v2025 = vsub.f32 1.0, %v2024
    %v2026 = vmul.f32 %v2023, %v2025
    %v2027 = vadd.f32 %v2023, %v2026
    %vm2028 = vweird.f32 %v2022
    %vm2029 = vweird.f32 %v2023
    %vm2030 = vmor %vm2028, %vm2029
    %v2031 = vsel %vm2030, %v2023, %v2027
    %v2032 = vand.u32 2147483647, %v2022
    %vm2033 = vcmp.eq.f32.partialorder %v2032, 8.507059e+37
    %v2034 = vand.u32 %v2022, 2147483648
    %v2035 = vor.u32 1.1754944e-38, %v2034
    %v2036 = vsel %vm2033, %v2035, %v2031
    %v2037 = vmul.f32 %v2012, %v2036
    %v2038 = vmin.f32 %v2037, 1.0
    %v2039 = vmax.f32 %v2038, -1.0
    %v2040 = vmul.f32 %v455, %v455
    %v2041 = vmin.f32 16.0, %v2040
    %v2042 = vmul.f32 %v2041, 2.1237322e-06
    %v2043 = vadd.f32 %v2042, 0.00028619796
    %v2044 = vmul.f32 %v2041, %v2043
    %v2045 = vadd.f32 %v2044, 0.0036580483
    %v2046 = vmul.f32 %v2041, %v2045
    %v2047 = vadd.f32 %v2046, 0.05243302
    %v2048 = vmul.f32 %v2041, %v2047
    %v2049 = vadd.f32 %v2048, 0.18741608
    %v2050 = vmul.f32 %v2041, %v2049
    %v2051 = vadd.f32 %v2050, 1.1283791
    %v2052 = vmul.f32 %v455, %v2051
    %v2053 = vmul.f32 %v2041, 3.8918573e-05
    %v2054 = vadd.f32 %v2053, 0.001143296
    %v2055 = vmul.f32 %v2041, %v2054
    %v2056 = vadd.f32 %v2055, 0.014752088
    %v2057 = vmul.f32 %v2041, %v2056
    %v2058 = vadd.f32 %v2057, 0.112945676
    %v2059 = vmul.f32 %v2041, %v2058
    %v2060 = vadd.f32 %v2059, 0.4994258
    %v2061 = vmul.f32 %v2041, %v2060
    %v2062 = vadd.f32 %v2061, 1.0
    %v2063 = vrcp.pop %v2062
    %v2064 = vmul.f32 %v2062, %v2063
    %v2065 = vsub.f32 1.0, %v2064
    %v2066 = vmul.f32 %v2063, %v2065
    %v2067 = vadd.f32 %v2063, %v2066
    %vm2068 = vweird.f32 %v2062
    %vm2069 = vweird.f32 %v2063
    %vm2070 = vmor %vm2068, %vm2069
    %v2071 = vsel %vm2070, %v2063, %v2067
    %v2072 = vand.u32 2147483647, %v2062
    %vm2073 = vcmp.eq.f32.partialorder %v2072, 8.507059e+37
    %v2074 = vand.u32 %v2062, 2147483648
    %v2075 = vor.u32 1.1754944e-38, %v2074
    %v2076 = vsel %vm2073, %v2075, %v2071
    %v2077 = vmul.f32 %v2052, %v2076
    %v2078 = vmin.f32 %v2077, 1.0
    %v2079 = vmax.f32 %v2078, -1.0
    %v2080 = vmul.f32 %v456, %v456
    %v2081 = vmin.f32 16.0, %v2080
    %v2082 = vmul.f32 %v2081, 2.1237322e-06
    %v2083 = vadd.f32 %v2082, 0.00028619796
    %v2084 = vmul.f32 %v2081, %v2083
    %v2085 = vadd.f32 %v2084, 0.0036580483
    %v2086 = vmul.f32 %v2081, %v2085
    %v2087 = vadd.f32 %v2086, 0.05243302
    %v2088 = vmul.f32 %v2081, %v2087
    %v2089 = vadd.f32 %v2088, 0.18741608
    %v2090 = vmul.f32 %v2081, %v2089
    %v2091 = vadd.f32 %v2090, 1.1283791
    %v2092 = vmul.f32 %v456, %v2091
    %v2093 = vmul.f32 %v2081, 3.8918573e-05
    %v2094 = vadd.f32 %v2093, 0.001143296
    %v2095 = vmul.f32 %v2081, %v2094
    %v2096 = vadd.f32 %v2095, 0.014752088
    %v2097 = vmul.f32 %v2081, %v2096
    %v2098 = vadd.f32 %v2097, 0.112945676
    %v2099 = vmul.f32 %v2081, %v2098
    %v2100 = vadd.f32 %v2099, 0.4994258
    %v2101 = vmul.f32 %v2081, %v2100
    %v2102 = vadd.f32 %v2101, 1.0
    %v2103 = vrcp.pop %v2102
    %v2104 = vmul.f32 %v2102, %v2103
    %v2105 = vsub.f32 1.0, %v2104
    %v2106 = vmul.f32 %v2103, %v2105
    %v2107 = vadd.f32 %v2103, %v2106
    %vm2108 = vweird.f32 %v2102
    %vm2109 = vweird.f32 %v2103
    %vm2110 = vmor %vm2108, %vm2109
    %v2111 = vsel %vm2110, %v2103, %v2107
    %v2112 = vand.u32 2147483647, %v2102
    %vm2113 = vcmp.eq.f32.partialorder %v2112, 8.507059e+37
    %v2114 = vand.u32 %v2102, 2147483648
    %v2115 = vor.u32 1.1754944e-38, %v2114
    %v2116 = vsel %vm2113, %v2115, %v2111
    %v2117 = vmul.f32 %v2092, %v2116
    %v2118 = vmin.f32 %v2117, 1.0
    %v2119 = vmax.f32 %v2118, -1.0
    %v2120 = vmul.f32 %v457, %v457
    %v2121 = vmin.f32 16.0, %v2120
    %v2122 = vmul.f32 %v2121, 2.1237322e-06
    %v2123 = vadd.f32 %v2122, 0.00028619796
    %v2124 = vmul.f32 %v2121, %v2123
    %v2125 = vadd.f32 %v2124, 0.0036580483
    %v2126 = vmul.f32 %v2121, %v2125
    %v2127 = vadd.f32 %v2126, 0.05243302
    %v2128 = vmul.f32 %v2121, %v2127
    %v2129 = vadd.f32 %v2128, 0.18741608
    %v2130 = vmul.f32 %v2121, %v2129
    %v2131 = vadd.f32 %v2130, 1.1283791
    %v2132 = vmul.f32 %v457, %v2131
    %v2133 = vmul.f32 %v2121, 3.8918573e-05
    %v2134 = vadd.f32 %v2133, 0.001143296
    %v2135 = vmul.f32 %v2121, %v2134
    %v2136 = vadd.f32 %v2135, 0.014752088
    %v2137 = vmul.f32 %v2121, %v2136
    %v2138 = vadd.f32 %v2137, 0.112945676
    %v2139 = vmul.f32 %v2121, %v2138
    %v2140 = vadd.f32 %v2139, 0.4994258
    %v2141 = vmul.f32 %v2121, %v2140
    %v2142 = vadd.f32 %v2141, 1.0
    %v2143 = vrcp.pop %v2142
    %v2144 = vmul.f32 %v2142, %v2143
    %v2145 = vsub.f32 1.0, %v2144
    %v2146 = vmul.f32 %v2143, %v2145
    %v2147 = vadd.f32 %v2143, %v2146
    %vm2148 = vweird.f32 %v2142
    %vm2149 = vweird.f32 %v2143
    %vm2150 = vmor %vm2148, %vm2149
    %v2151 = vsel %vm2150, %v2143, %v2147
    %v2152 = vand.u32 2147483647, %v2142
    %vm2153 = vcmp.eq.f32.partialorder %v2152, 8.507059e+37
    %v2154 = vand.u32 %v2142, 2147483648
    %v2155 = vor.u32 1.1754944e-38, %v2154
    %v2156 = vsel %vm2153, %v2155, %v2151
    %v2157 = vmul.f32 %v2132, %v2156
    %v2158 = vmin.f32 %v2157, 1.0
    %v2159 = vmax.f32 %v2158, -1.0
    %v2160 = vmul.f32 %v458, %v458
    %v2161 = vmin.f32 16.0, %v2160
    %v2162 = vmul.f32 %v2161, 2.1237322e-06
    %v2163 = vadd.f32 %v2162, 0.00028619796
    %v2164 = vmul.f32 %v2161, %v2163
    %v2165 = vadd.f32 %v2164, 0.0036580483
    %v2166 = vmul.f32 %v2161, %v2165
    %v2167 = vadd.f32 %v2166, 0.05243302
    %v2168 = vmul.f32 %v2161, %v2167
    %v2169 = vadd.f32 %v2168, 0.18741608
    %v2170 = vmul.f32 %v2161, %v2169
    %v2171 = vadd.f32 %v2170, 1.1283791
    %v2172 = vmul.f32 %v458, %v2171
    %v2173 = vmul.f32 %v2161, 3.8918573e-05
    %v2174 = vadd.f32 %v2173, 0.001143296
    %v2175 = vmul.f32 %v2161, %v2174
    %v2176 = vadd.f32 %v2175, 0.014752088
    %v2177 = vmul.f32 %v2161, %v2176
    %v2178 = vadd.f32 %v2177, 0.112945676
    %v2179 = vmul.f32 %v2161, %v2178
    %v2180 = vadd.f32 %v2179, 0.4994258
    %v2181 = vmul.f32 %v2161, %v2180
    %v2182 = vadd.f32 %v2181, 1.0
    %v2183 = vrcp.pop %v2182
    %v2184 = vmul.f32 %v2182, %v2183
    %v2185 = vsub.f32 1.0, %v2184
    %v2186 = vmul.f32 %v2183, %v2185
    %v2187 = vadd.f32 %v2183, %v2186
    %vm2188 = vweird.f32 %v2182
    %vm2189 = vweird.f32 %v2183
    %vm2190 = vmor %vm2188, %vm2189
    %v2191 = vsel %vm2190, %v2183, %v2187
    %v2192 = vand.u32 2147483647, %v2182
    %vm2193 = vcmp.eq.f32.partialorder %v2192, 8.507059e+37
    %v2194 = vand.u32 %v2182, 2147483648
    %v2195 = vor.u32 1.1754944e-38, %v2194
    %v2196 = vsel %vm2193, %v2195, %v2191
    %v2197 = vmul.f32 %v2172, %v2196
    %v2198 = vmin.f32 %v2197, 1.0
    %v2199 = vmax.f32 %v2198, -1.0
    %v2200 = vmul.f32 %v459, %v459
    %v2201 = vmin.f32 16.0, %v2200
    %v2202 = vmul.f32 %v2201, 2.1237322e-06
    %v2203 = vadd.f32 %v2202, 0.00028619796
    %v2204 = vmul.f32 %v2201, %v2203
    %v2205 = vadd.f32 %v2204, 0.0036580483
    %v2206 = vmul.f32 %v2201, %v2205
    %v2207 = vadd.f32 %v2206, 0.05243302
    %v2208 = vmul.f32 %v2201, %v2207
    %v2209 = vadd.f32 %v2208, 0.18741608
    %v2210 = vmul.f32 %v2201, %v2209
    %v2211 = vadd.f32 %v2210, 1.1283791
    %v2212 = vmul.f32 %v459, %v2211
    %v2213 = vmul.f32 %v2201, 3.8918573e-05
    %v2214 = vadd.f32 %v2213, 0.001143296
    %v2215 = vmul.f32 %v2201, %v2214
    %v2216 = vadd.f32 %v2215, 0.014752088
    %v2217 = vmul.f32 %v2201, %v2216
    %v2218 = vadd.f32 %v2217, 0.112945676
    %v2219 = vmul.f32 %v2201, %v2218
    %v2220 = vadd.f32 %v2219, 0.4994258
    %v2221 = vmul.f32 %v2201, %v2220
    %v2222 = vadd.f32 %v2221, 1.0
    %v2223 = vrcp.pop %v2222
    %v2224 = vmul.f32 %v2222, %v2223
    %v2225 = vsub.f32 1.0, %v2224
    %v2226 = vmul.f32 %v2223, %v2225
    %v2227 = vadd.f32 %v2223, %v2226
    %vm2228 = vweird.f32 %v2222
    %vm2229 = vweird.f32 %v2223
    %vm2230 = vmor %vm2228, %vm2229
    %v2231 = vsel %vm2230, %v2223, %v2227
    %v2232 = vand.u32 2147483647, %v2222
    %vm2233 = vcmp.eq.f32.partialorder %v2232, 8.507059e+37
    %v2234 = vand.u32 %v2222, 2147483648
    %v2235 = vor.u32 1.1754944e-38, %v2234
    %v2236 = vsel %vm2233, %v2235, %v2231
    %v2237 = vmul.f32 %v2212, %v2236
    %v2238 = vmin.f32 %v2237, 1.0
    %v2239 = vmax.f32 %v2238, -1.0
    %v2240 = vmul.f32 %v460, %v460
    %v2241 = vmin.f32 16.0, %v2240
    %v2242 = vmul.f32 %v2241, 2.1237322e-06
    %v2243 = vadd.f32 %v2242, 0.00028619796
    %v2244 = vmul.f32 %v2241, %v2243
    %v2245 = vadd.f32 %v2244, 0.0036580483
    %v2246 = vmul.f32 %v2241, %v2245
    %v2247 = vadd.f32 %v2246, 0.05243302
    %v2248 = vmul.f32 %v2241, %v2247
    %v2249 = vadd.f32 %v2248, 0.18741608
    %v2250 = vmul.f32 %v2241, %v2249
    %v2251 = vadd.f32 %v2250, 1.1283791
    %v2252 = vmul.f32 %v460, %v2251
    %v2253 = vmul.f32 %v2241, 3.8918573e-05
    %v2254 = vadd.f32 %v2253, 0.001143296
    %v2255 = vmul.f32 %v2241, %v2254
    %v2256 = vadd.f32 %v2255, 0.014752088
    %v2257 = vmul.f32 %v2241, %v2256
    %v2258 = vadd.f32 %v2257, 0.112945676
    %v2259 = vmul.f32 %v2241, %v2258
    %v2260 = vadd.f32 %v2259, 0.4994258
    %v2261 = vmul.f32 %v2241, %v2260
    %v2262 = vadd.f32 %v2261, 1.0
    %v2263 = vrcp.pop %v2262
    %v2264 = vmul.f32 %v2262, %v2263
    %v2265 = vsub.f32 1.0, %v2264
    %v2266 = vmul.f32 %v2263, %v2265
    %v2267 = vadd.f32 %v2263, %v2266
    %vm2268 = vweird.f32 %v2262
    %vm2269 = vweird.f32 %v2263
    %vm2270 = vmor %vm2268, %vm2269
    %v2271 = vsel %vm2270, %v2263, %v2267
    %v2272 = vand.u32 2147483647, %v2262
    %vm2273 = vcmp.eq.f32.partialorder %v2272, 8.507059e+37
    %v2274 = vand.u32 %v2262, 2147483648
    %v2275 = vor.u32 1.1754944e-38, %v2274
    %v2276 = vsel %vm2273, %v2275, %v2271
    %v2277 = vmul.f32 %v2252, %v2276
    %v2278 = vmin.f32 %v2277, 1.0
    %v2279 = vmax.f32 %v2278, -1.0
    %v2280 = vmul.f32 %v461, %v461
    %v2281 = vmin.f32 16.0, %v2280
    %v2282 = vmul.f32 %v2281, 2.1237322e-06
    %v2283 = vadd.f32 %v2282, 0.00028619796
    %v2284 = vmul.f32 %v2281, %v2283
    %v2285 = vadd.f32 %v2284, 0.0036580483
    %v2286 = vmul.f32 %v2281, %v2285
    %v2287 = vadd.f32 %v2286, 0.05243302
    %v2288 = vmul.f32 %v2281, %v2287
    %v2289 = vadd.f32 %v2288, 0.18741608
    %v2290 = vmul.f32 %v2281, %v2289
    %v2291 = vadd.f32 %v2290, 1.1283791
    %v2292 = vmul.f32 %v461, %v2291
    %v2293 = vmul.f32 %v2281, 3.8918573e-05
    %v2294 = vadd.f32 %v2293, 0.001143296
    %v2295 = vmul.f32 %v2281, %v2294
    %v2296 = vadd.f32 %v2295, 0.014752088
    %v2297 = vmul.f32 %v2281, %v2296
    %v2298 = vadd.f32 %v2297, 0.112945676
    %v2299 = vmul.f32 %v2281, %v2298
    %v2300 = vadd.f32 %v2299, 0.4994258
    %v2301 = vmul.f32 %v2281, %v2300
    %v2302 = vadd.f32 %v2301, 1.0
    %v2303 = vrcp.pop %v2302
    %v2304 = vmul.f32 %v2302, %v2303
    %v2305 = vsub.f32 1.0, %v2304
    %v2306 = vmul.f32 %v2303, %v2305
    %v2307 = vadd.f32 %v2303, %v2306
    %vm2308 = vweird.f32 %v2302
    %vm2309 = vweird.f32 %v2303
    %vm2310 = vmor %vm2308, %vm2309
    %v2311 = vsel %vm2310, %v2303, %v2307
    %v2312 = vand.u32 2147483647, %v2302
    %vm2313 = vcmp.eq.f32.partialorder %v2312, 8.507059e+37
    %v2314 = vand.u32 %v2302, 2147483648
    %v2315 = vor.u32 1.1754944e-38, %v2314
    %v2316 = vsel %vm2313, %v2315, %v2311
    %v2317 = vmul.f32 %v2292, %v2316
    %v2318 = vmin.f32 %v2317, 1.0
    %v2319 = vmax.f32 %v2318, -1.0
    %v2320 = vmul.f32 %v462, %v462
    %v2321 = vmin.f32 16.0, %v2320
    %v2322 = vmul.f32 %v2321, 2.1237322e-06
    %v2323 = vadd.f32 %v2322, 0.00028619796
    %v2324 = vmul.f32 %v2321, %v2323
    %v2325 = vadd.f32 %v2324, 0.0036580483
    %v2326 = vmul.f32 %v2321, %v2325
    %v2327 = vadd.f32 %v2326, 0.05243302
    %v2328 = vmul.f32 %v2321, %v2327
    %v2329 = vadd.f32 %v2328, 0.18741608
    %v2330 = vmul.f32 %v2321, %v2329
    %v2331 = vadd.f32 %v2330, 1.1283791
    %v2332 = vmul.f32 %v462, %v2331
    %v2333 = vmul.f32 %v2321, 3.8918573e-05
    %v2334 = vadd.f32 %v2333, 0.001143296
    %v2335 = vmul.f32 %v2321, %v2334
    %v2336 = vadd.f32 %v2335, 0.014752088
    %v2337 = vmul.f32 %v2321, %v2336
    %v2338 = vadd.f32 %v2337, 0.112945676
    %v2339 = vmul.f32 %v2321, %v2338
    %v2340 = vadd.f32 %v2339, 0.4994258
    %v2341 = vmul.f32 %v2321, %v2340
    %v2342 = vadd.f32 %v2341, 1.0
    %v2343 = vrcp.pop %v2342
    %v2344 = vmul.f32 %v2342, %v2343
    %v2345 = vsub.f32 1.0, %v2344
    %v2346 = vmul.f32 %v2343, %v2345
    %v2347 = vadd.f32 %v2343, %v2346
    %vm2348 = vweird.f32 %v2342
    %vm2349 = vweird.f32 %v2343
    %vm2350 = vmor %vm2348, %vm2349
    %v2351 = vsel %vm2350, %v2343, %v2347
    %v2352 = vand.u32 2147483647, %v2342
    %vm2353 = vcmp.eq.f32.partialorder %v2352, 8.507059e+37
    %v2354 = vand.u32 %v2342, 2147483648
    %v2355 = vor.u32 1.1754944e-38, %v2354
    %v2356 = vsel %vm2353, %v2355, %v2351
    %v2357 = vmul.f32 %v2332, %v2356
    %v2358 = vmin.f32 %v2357, 1.0
    %v2359 = vmax.f32 %v2358, -1.0
    %v2360 = vmul.f32 %v463, %v463
    %v2361 = vmin.f32 16.0, %v2360
    %v2362 = vmul.f32 %v2361, 2.1237322e-06
    %v2363 = vadd.f32 %v2362, 0.00028619796
    %v2364 = vmul.f32 %v2361, %v2363
    %v2365 = vadd.f32 %v2364, 0.0036580483
    %v2366 = vmul.f32 %v2361, %v2365
    %v2367 = vadd.f32 %v2366, 0.05243302
    %v2368 = vmul.f32 %v2361, %v2367
    %v2369 = vadd.f32 %v2368, 0.18741608
    %v2370 = vmul.f32 %v2361, %v2369
    %v2371 = vadd.f32 %v2370, 1.1283791
    %v2372 = vmul.f32 %v463, %v2371
    %v2373 = vmul.f32 %v2361, 3.8918573e-05
    %v2374 = vadd.f32 %v2373, 0.001143296
    %v2375 = vmul.f32 %v2361, %v2374
    %v2376 = vadd.f32 %v2375, 0.014752088
    %v2377 = vmul.f32 %v2361, %v2376
    %v2378 = vadd.f32 %v2377, 0.112945676
    %v2379 = vmul.f32 %v2361, %v2378
    %v2380 = vadd.f32 %v2379, 0.4994258
    %v2381 = vmul.f32 %v2361, %v2380
    %v2382 = vadd.f32 %v2381, 1.0
    %v2383 = vrcp.pop %v2382
    %v2384 = vmul.f32 %v2382, %v2383
    %v2385 = vsub.f32 1.0, %v2384
    %v2386 = vmul.f32 %v2383, %v2385
    %v2387 = vadd.f32 %v2383, %v2386
    %vm2388 = vweird.f32 %v2382
    %vm2389 = vweird.f32 %v2383
    %vm2390 = vmor %vm2388, %vm2389
    %v2391 = vsel %vm2390, %v2383, %v2387
    %v2392 = vand.u32 2147483647, %v2382
    %vm2393 = vcmp.eq.f32.partialorder %v2392, 8.507059e+37
    %v2394 = vand.u32 %v2382, 2147483648
    %v2395 = vor.u32 1.1754944e-38, %v2394
    %v2396 = vsel %vm2393, %v2395, %v2391
    %v2397 = vmul.f32 %v2372, %v2396
    %v2398 = vmin.f32 %v2397, 1.0
    %v2399 = vmax.f32 %v2398, -1.0
    %v2400 = vmul.f32 %v464, %v464
    %v2401 = vmin.f32 16.0, %v2400
    %v2402 = vmul.f32 %v2401, 2.1237322e-06
    %v2403 = vadd.f32 %v2402, 0.00028619796
    %v2404 = vmul.f32 %v2401, %v2403
    %v2405 = vadd.f32 %v2404, 0.0036580483
    %v2406 = vmul.f32 %v2401, %v2405
    %v2407 = vadd.f32 %v2406, 0.05243302
    %v2408 = vmul.f32 %v2401, %v2407
    %v2409 = vadd.f32 %v2408, 0.18741608
    %v2410 = vmul.f32 %v2401, %v2409
    %v2411 = vadd.f32 %v2410, 1.1283791
    %v2412 = vmul.f32 %v464, %v2411
    %v2413 = vmul.f32 %v2401, 3.8918573e-05
    %v2414 = vadd.f32 %v2413, 0.001143296
    %v2415 = vmul.f32 %v2401, %v2414
    %v2416 = vadd.f32 %v2415, 0.014752088
    %v2417 = vmul.f32 %v2401, %v2416
    %v2418 = vadd.f32 %v2417, 0.112945676
    %v2419 = vmul.f32 %v2401, %v2418
    %v2420 = vadd.f32 %v2419, 0.4994258
    %v2421 = vmul.f32 %v2401, %v2420
    %v2422 = vadd.f32 %v2421, 1.0
    %v2423 = vrcp.pop %v2422
    %v2424 = vmul.f32 %v2422, %v2423
    %v2425 = vsub.f32 1.0, %v2424
    %v2426 = vmul.f32 %v2423, %v2425
    %v2427 = vadd.f32 %v2423, %v2426
    %vm2428 = vweird.f32 %v2422
    %vm2429 = vweird.f32 %v2423
    %vm2430 = vmor %vm2428, %vm2429
    %v2431 = vsel %vm2430, %v2423, %v2427
    %v2432 = vand.u32 2147483647, %v2422
    %vm2433 = vcmp.eq.f32.partialorder %v2432, 8.507059e+37
    %v2434 = vand.u32 %v2422, 2147483648
    %v2435 = vor.u32 1.1754944e-38, %v2434
    %v2436 = vsel %vm2433, %v2435, %v2431
    %v2437 = vmul.f32 %v2412, %v2436
    %v2438 = vmin.f32 %v2437, 1.0
    %v2439 = vmax.f32 %v2438, -1.0
    %v2440 = vmul.f32 %v465, %v465
    %v2441 = vmin.f32 16.0, %v2440
    %v2442 = vmul.f32 %v2441, 2.1237322e-06
    %v2443 = vadd.f32 %v2442, 0.00028619796
    %v2444 = vmul.f32 %v2441, %v2443
    %v2445 = vadd.f32 %v2444, 0.0036580483
    %v2446 = vmul.f32 %v2441, %v2445
    %v2447 = vadd.f32 %v2446, 0.05243302
    %v2448 = vmul.f32 %v2441, %v2447
    %v2449 = vadd.f32 %v2448, 0.18741608
    %v2450 = vmul.f32 %v2441, %v2449
    %v2451 = vadd.f32 %v2450, 1.1283791
    %v2452 = vmul.f32 %v465, %v2451
    %v2453 = vmul.f32 %v2441, 3.8918573e-05
    %v2454 = vadd.f32 %v2453, 0.001143296
    %v2455 = vmul.f32 %v2441, %v2454
    %v2456 = vadd.f32 %v2455, 0.014752088
    %v2457 = vmul.f32 %v2441, %v2456
    %v2458 = vadd.f32 %v2457, 0.112945676
    %v2459 = vmul.f32 %v2441, %v2458
    %v2460 = vadd.f32 %v2459, 0.4994258
    %v2461 = vmul.f32 %v2441, %v2460
    %v2462 = vadd.f32 %v2461, 1.0
    %v2463 = vrcp.pop %v2462
    %v2464 = vmul.f32 %v2462, %v2463
    %v2465 = vsub.f32 1.0, %v2464
    %v2466 = vmul.f32 %v2463, %v2465
    %v2467 = vadd.f32 %v2463, %v2466
    %vm2468 = vweird.f32 %v2462
    %vm2469 = vweird.f32 %v2463
    %vm2470 = vmor %vm2468, %vm2469
    %v2471 = vsel %vm2470, %v2463, %v2467
    %v2472 = vand.u32 2147483647, %v2462
    %vm2473 = vcmp.eq.f32.partialorder %v2472, 8.507059e+37
    %v2474 = vand.u32 %v2462, 2147483648
    %v2475 = vor.u32 1.1754944e-38, %v2474
    %v2476 = vsel %vm2473, %v2475, %v2471
    %v2477 = vmul.f32 %v2452, %v2476
    %v2478 = vmin.f32 %v2477, 1.0
    %v2479 = vmax.f32 %v2478, -1.0
    %v2480 = vmul.f32 %v466, %v466
    %v2481 = vmin.f32 16.0, %v2480
    %v2482 = vmul.f32 %v2481, 2.1237322e-06
    %v2483 = vadd.f32 %v2482, 0.00028619796
    %v2484 = vmul.f32 %v2481, %v2483
    %v2485 = vadd.f32 %v2484, 0.0036580483
    %v2486 = vmul.f32 %v2481, %v2485
    %v2487 = vadd.f32 %v2486, 0.05243302
    %v2488 = vmul.f32 %v2481, %v2487
    %v2489 = vadd.f32 %v2488, 0.18741608
    %v2490 = vmul.f32 %v2481, %v2489
    %v2491 = vadd.f32 %v2490, 1.1283791
    %v2492 = vmul.f32 %v466, %v2491
    %v2493 = vmul.f32 %v2481, 3.8918573e-05
    %v2494 = vadd.f32 %v2493, 0.001143296
    %v2495 = vmul.f32 %v2481, %v2494
    %v2496 = vadd.f32 %v2495, 0.014752088
    %v2497 = vmul.f32 %v2481, %v2496
    %v2498 = vadd.f32 %v2497, 0.112945676
    %v2499 = vmul.f32 %v2481, %v2498
    %v2500 = vadd.f32 %v2499, 0.4994258
    %v2501 = vmul.f32 %v2481, %v2500
    %v2502 = vadd.f32 %v2501, 1.0
    %v2503 = vrcp.pop %v2502
    %v2504 = vmul.f32 %v2502, %v2503
    %v2505 = vsub.f32 1.0, %v2504
    %v2506 = vmul.f32 %v2503, %v2505
    %v2507 = vadd.f32 %v2503, %v2506
    %vm2508 = vweird.f32 %v2502
    %vm2509 = vweird.f32 %v2503
    %vm2510 = vmor %vm2508, %vm2509
    %v2511 = vsel %vm2510, %v2503, %v2507
    %v2512 = vand.u32 2147483647, %v2502
    %vm2513 = vcmp.eq.f32.partialorder %v2512, 8.507059e+37
    %v2514 = vand.u32 %v2502, 2147483648
    %v2515 = vor.u32 1.1754944e-38, %v2514
    %v2516 = vsel %vm2513, %v2515, %v2511
    %v2517 = vmul.f32 %v2492, %v2516
    %v2518 = vmin.f32 %v2517, 1.0
    %v2519 = vmax.f32 %v2518, -1.0
    %v2520 = vmul.f32 %v467, %v467
    %v2521 = vmin.f32 16.0, %v2520
    %v2522 = vmul.f32 %v2521, 2.1237322e-06
    %v2523 = vadd.f32 %v2522, 0.00028619796
    %v2524 = vmul.f32 %v2521, %v2523
    %v2525 = vadd.f32 %v2524, 0.0036580483
    %v2526 = vmul.f32 %v2521, %v2525
    %v2527 = vadd.f32 %v2526, 0.05243302
    %v2528 = vmul.f32 %v2521, %v2527
    %v2529 = vadd.f32 %v2528, 0.18741608
    %v2530 = vmul.f32 %v2521, %v2529
    %v2531 = vadd.f32 %v2530, 1.1283791
    %v2532 = vmul.f32 %v467, %v2531
    %v2533 = vmul.f32 %v2521, 3.8918573e-05
    %v2534 = vadd.f32 %v2533, 0.001143296
    %v2535 = vmul.f32 %v2521, %v2534
    %v2536 = vadd.f32 %v2535, 0.014752088
    %v2537 = vmul.f32 %v2521, %v2536
    %v2538 = vadd.f32 %v2537, 0.112945676
    %v2539 = vmul.f32 %v2521, %v2538
    %v2540 = vadd.f32 %v2539, 0.4994258
    %v2541 = vmul.f32 %v2521, %v2540
    %v2542 = vadd.f32 %v2541, 1.0
    %v2543 = vrcp.pop %v2542
    %v2544 = vmul.f32 %v2542, %v2543
    %v2545 = vsub.f32 1.0, %v2544
    %v2546 = vmul.f32 %v2543, %v2545
    %v2547 = vadd.f32 %v2543, %v2546
    %vm2548 = vweird.f32 %v2542
    %vm2549 = vweird.f32 %v2543
    %vm2550 = vmor %vm2548, %vm2549
    %v2551 = vsel %vm2550, %v2543, %v2547
    %v2552 = vand.u32 2147483647, %v2542
    %vm2553 = vcmp.eq.f32.partialorder %v2552, 8.507059e+37
    %v2554 = vand.u32 %v2542, 2147483648
    %v2555 = vor.u32 1.1754944e-38, %v2554
    %v2556 = vsel %vm2553, %v2555, %v2551
    %v2557 = vmul.f32 %v2532, %v2556
    %v2558 = vmin.f32 %v2557, 1.0
    %v2559 = vmax.f32 %v2558, -1.0
    %v2560 = vmul.f32 %v468, %v468
    %v2561 = vmin.f32 16.0, %v2560
    %v2562 = vmul.f32 %v2561, 2.1237322e-06
    %v2563 = vadd.f32 %v2562, 0.00028619796
    %v2564 = vmul.f32 %v2561, %v2563
    %v2565 = vadd.f32 %v2564, 0.0036580483
    %v2566 = vmul.f32 %v2561, %v2565
    %v2567 = vadd.f32 %v2566, 0.05243302
    %v2568 = vmul.f32 %v2561, %v2567
    %v2569 = vadd.f32 %v2568, 0.18741608
    %v2570 = vmul.f32 %v2561, %v2569
    %v2571 = vadd.f32 %v2570, 1.1283791
    %v2572 = vmul.f32 %v468, %v2571
    %v2573 = vmul.f32 %v2561, 3.8918573e-05
    %v2574 = vadd.f32 %v2573, 0.001143296
    %v2575 = vmul.f32 %v2561, %v2574
    %v2576 = vadd.f32 %v2575, 0.014752088
    %v2577 = vmul.f32 %v2561, %v2576
    %v2578 = vadd.f32 %v2577, 0.112945676
    %v2579 = vmul.f32 %v2561, %v2578
    %v2580 = vadd.f32 %v2579, 0.4994258
    %v2581 = vmul.f32 %v2561, %v2580
    %v2582 = vadd.f32 %v2581, 1.0
    %v2583 = vrcp.pop %v2582
    %v2584 = vmul.f32 %v2582, %v2583
    %v2585 = vsub.f32 1.0, %v2584
    %v2586 = vmul.f32 %v2583, %v2585
    %v2587 = vadd.f32 %v2583, %v2586
    %vm2588 = vweird.f32 %v2582
    %vm2589 = vweird.f32 %v2583
    %vm2590 = vmor %vm2588, %vm2589
    %v2591 = vsel %vm2590, %v2583, %v2587
    %v2592 = vand.u32 2147483647, %v2582
    %vm2593 = vcmp.eq.f32.partialorder %v2592, 8.507059e+37
    %v2594 = vand.u32 %v2582, 2147483648
    %v2595 = vor.u32 1.1754944e-38, %v2594
    %v2596 = vsel %vm2593, %v2595, %v2591
    %v2597 = vmul.f32 %v2572, %v2596
    %v2598 = vmin.f32 %v2597, 1.0
    %v2599 = vmax.f32 %v2598, -1.0
    %v2600 = vmul.f32 %v469, %v469
    %v2601 = vmin.f32 16.0, %v2600
    %v2602 = vmul.f32 %v2601, 2.1237322e-06
    %v2603 = vadd.f32 %v2602, 0.00028619796
    %v2604 = vmul.f32 %v2601, %v2603
    %v2605 = vadd.f32 %v2604, 0.0036580483
    %v2606 = vmul.f32 %v2601, %v2605
    %v2607 = vadd.f32 %v2606, 0.05243302
    %v2608 = vmul.f32 %v2601, %v2607
    %v2609 = vadd.f32 %v2608, 0.18741608
    %v2610 = vmul.f32 %v2601, %v2609
    %v2611 = vadd.f32 %v2610, 1.1283791
    %v2612 = vmul.f32 %v469, %v2611
    %v2613 = vmul.f32 %v2601, 3.8918573e-05
    %v2614 = vadd.f32 %v2613, 0.001143296
    %v2615 = vmul.f32 %v2601, %v2614
    %v2616 = vadd.f32 %v2615, 0.014752088
    %v2617 = vmul.f32 %v2601, %v2616
    %v2618 = vadd.f32 %v2617, 0.112945676
    %v2619 = vmul.f32 %v2601, %v2618
    %v2620 = vadd.f32 %v2619, 0.4994258
    %v2621 = vmul.f32 %v2601, %v2620
    %v2622 = vadd.f32 %v2621, 1.0
    %v2623 = vrcp.pop %v2622
    %v2624 = vmul.f32 %v2622, %v2623
    %v2625 = vsub.f32 1.0, %v2624
    %v2626 = vmul.f32 %v2623, %v2625
    %v2627 = vadd.f32 %v2623, %v2626
    %vm2628 = vweird.f32 %v2622
    %vm2629 = vweird.f32 %v2623
    %vm2630 = vmor %vm2628, %vm2629
    %v2631 = vsel %vm2630, %v2623, %v2627
    %v2632 = vand.u32 2147483647, %v2622
    %vm2633 = vcmp.eq.f32.partialorder %v2632, 8.507059e+37
    %v2634 = vand.u32 %v2622, 2147483648
    %v2635 = vor.u32 1.1754944e-38, %v2634
    %v2636 = vsel %vm2633, %v2635, %v2631
    %v2637 = vmul.f32 %v2612, %v2636
    %v2638 = vmin.f32 %v2637, 1.0
    %v2639 = vmax.f32 %v2638, -1.0
    %v2640 = vmul.f32 %v470, %v470
    %v2641 = vmin.f32 16.0, %v2640
    %v2642 = vmul.f32 %v2641, 2.1237322e-06
    %v2643 = vadd.f32 %v2642, 0.00028619796
    %v2644 = vmul.f32 %v2641, %v2643
    %v2645 = vadd.f32 %v2644, 0.0036580483
    %v2646 = vmul.f32 %v2641, %v2645
    %v2647 = vadd.f32 %v2646, 0.05243302
    %v2648 = vmul.f32 %v2641, %v2647
    %v2649 = vadd.f32 %v2648, 0.18741608
    %v2650 = vmul.f32 %v2641, %v2649
    %v2651 = vadd.f32 %v2650, 1.1283791
    %v2652 = vmul.f32 %v470, %v2651
    %v2653 = vmul.f32 %v2641, 3.8918573e-05
    %v2654 = vadd.f32 %v2653, 0.001143296
    %v2655 = vmul.f32 %v2641, %v2654
    %v2656 = vadd.f32 %v2655, 0.014752088
    %v2657 = vmul.f32 %v2641, %v2656
    %v2658 = vadd.f32 %v2657, 0.112945676
    %v2659 = vmul.f32 %v2641, %v2658
    %v2660 = vadd.f32 %v2659, 0.4994258
    %v2661 = vmul.f32 %v2641, %v2660
    %v2662 = vadd.f32 %v2661, 1.0
    %v2663 = vrcp.pop %v2662
    %v2664 = vmul.f32 %v2662, %v2663
    %v2665 = vsub.f32 1.0, %v2664
    %v2666 = vmul.f32 %v2663, %v2665
    %v2667 = vadd.f32 %v2663, %v2666
    %vm2668 = vweird.f32 %v2662
    %vm2669 = vweird.f32 %v2663
    %vm2670 = vmor %vm2668, %vm2669
    %v2671 = vsel %vm2670, %v2663, %v2667
    %v2672 = vand.u32 2147483647, %v2662
    %vm2673 = vcmp.eq.f32.partialorder %v2672, 8.507059e+37
    %v2674 = vand.u32 %v2662, 2147483648
    %v2675 = vor.u32 1.1754944e-38, %v2674
    %v2676 = vsel %vm2673, %v2675, %v2671
    %v2677 = vmul.f32 %v2652, %v2676
    %v2678 = vmin.f32 %v2677, 1.0
    %v2679 = vmax.f32 %v2678, -1.0
    %v2680 = vmul.f32 %v471, %v471
    %v2681 = vmin.f32 16.0, %v2680
    %v2682 = vmul.f32 %v2681, 2.1237322e-06
    %v2683 = vadd.f32 %v2682, 0.00028619796
    %v2684 = vmul.f32 %v2681, %v2683
    %v2685 = vadd.f32 %v2684, 0.0036580483
    %v2686 = vmul.f32 %v2681, %v2685
    %v2687 = vadd.f32 %v2686, 0.05243302
    %v2688 = vmul.f32 %v2681, %v2687
    %v2689 = vadd.f32 %v2688, 0.18741608
    %v2690 = vmul.f32 %v2681, %v2689
    %v2691 = vadd.f32 %v2690, 1.1283791
    %v2692 = vmul.f32 %v471, %v2691
    %v2693 = vmul.f32 %v2681, 3.8918573e-05
    %v2694 = vadd.f32 %v2693, 0.001143296
    %v2695 = vmul.f32 %v2681, %v2694
    %v2696 = vadd.f32 %v2695, 0.014752088
    %v2697 = vmul.f32 %v2681, %v2696
    %v2698 = vadd.f32 %v2697, 0.112945676
    %v2699 = vmul.f32 %v2681, %v2698
    %v2700 = vadd.f32 %v2699, 0.4994258
    %v2701 = vmul.f32 %v2681, %v2700
    %v2702 = vadd.f32 %v2701, 1.0
    %v2703 = vrcp.pop %v2702
    %v2704 = vmul.f32 %v2702, %v2703
    %v2705 = vsub.f32 1.0, %v2704
    %v2706 = vmul.f32 %v2703, %v2705
    %v2707 = vadd.f32 %v2703, %v2706
    %vm2708 = vweird.f32 %v2702
    %vm2709 = vweird.f32 %v2703
    %vm2710 = vmor %vm2708, %vm2709
    %v2711 = vsel %vm2710, %v2703, %v2707
    %v2712 = vand.u32 2147483647, %v2702
    %vm2713 = vcmp.eq.f32.partialorder %v2712, 8.507059e+37
    %v2714 = vand.u32 %v2702, 2147483648
    %v2715 = vor.u32 1.1754944e-38, %v2714
    %v2716 = vsel %vm2713, %v2715, %v2711
    %v2717 = vmul.f32 %v2692, %v2716
    %v2718 = vmin.f32 %v2717, 1.0
    %v2719 = vmax.f32 %v2718, -1.0
    %v2720 = vmul.f32 %v472, %v472
    %v2721 = vmin.f32 16.0, %v2720
    %v2722 = vmul.f32 %v2721, 2.1237322e-06
    %v2723 = vadd.f32 %v2722, 0.00028619796
    %v2724 = vmul.f32 %v2721, %v2723
    %v2725 = vadd.f32 %v2724, 0.0036580483
    %v2726 = vmul.f32 %v2721, %v2725
    %v2727 = vadd.f32 %v2726, 0.05243302
    %v2728 = vmul.f32 %v2721, %v2727
    %v2729 = vadd.f32 %v2728, 0.18741608
    %v2730 = vmul.f32 %v2721, %v2729
    %v2731 = vadd.f32 %v2730, 1.1283791
    %v2732 = vmul.f32 %v472, %v2731
    %v2733 = vmul.f32 %v2721, 3.8918573e-05
    %v2734 = vadd.f32 %v2733, 0.001143296
    %v2735 = vmul.f32 %v2721, %v2734
    %v2736 = vadd.f32 %v2735, 0.014752088
    %v2737 = vmul.f32 %v2721, %v2736
    %v2738 = vadd.f32 %v2737, 0.112945676
    %v2739 = vmul.f32 %v2721, %v2738
    %v2740 = vadd.f32 %v2739, 0.4994258
    %v2741 = vmul.f32 %v2721, %v2740
    %v2742 = vadd.f32 %v2741, 1.0
    %v2743 = vrcp.pop %v2742
    %v2744 = vmul.f32 %v2742, %v2743
    %v2745 = vsub.f32 1.0, %v2744
    %v2746 = vmul.f32 %v2743, %v2745
    %v2747 = vadd.f32 %v2743, %v2746
    %vm2748 = vweird.f32 %v2742
    %vm2749 = vweird.f32 %v2743
    %vm2750 = vmor %vm2748, %vm2749
    %v2751 = vsel %vm2750, %v2743, %v2747
    %v2752 = vand.u32 2147483647, %v2742
    %vm2753 = vcmp.eq.f32.partialorder %v2752, 8.507059e+37
    %v2754 = vand.u32 %v2742, 2147483648
    %v2755 = vor.u32 1.1754944e-38, %v2754
    %v2756 = vsel %vm2753, %v2755, %v2751
    %v2757 = vmul.f32 %v2732, %v2756
    %v2758 = vmin.f32 %v2757, 1.0
    %v2759 = vmax.f32 %v2758, -1.0
    %v2760 = vmul.f32 %v473, %v473
    %v2761 = vmin.f32 16.0, %v2760
    %v2762 = vmul.f32 %v2761, 2.1237322e-06
    %v2763 = vadd.f32 %v2762, 0.00028619796
    %v2764 = vmul.f32 %v2761, %v2763
    %v2765 = vadd.f32 %v2764, 0.0036580483
    %v2766 = vmul.f32 %v2761, %v2765
    %v2767 = vadd.f32 %v2766, 0.05243302
    %v2768 = vmul.f32 %v2761, %v2767
    %v2769 = vadd.f32 %v2768, 0.18741608
    %v2770 = vmul.f32 %v2761, %v2769
    %v2771 = vadd.f32 %v2770, 1.1283791
    %v2772 = vmul.f32 %v473, %v2771
    %v2773 = vmul.f32 %v2761, 3.8918573e-05
    %v2774 = vadd.f32 %v2773, 0.001143296
    %v2775 = vmul.f32 %v2761, %v2774
    %v2776 = vadd.f32 %v2775, 0.014752088
    %v2777 = vmul.f32 %v2761, %v2776
    %v2778 = vadd.f32 %v2777, 0.112945676
    %v2779 = vmul.f32 %v2761, %v2778
    %v2780 = vadd.f32 %v2779, 0.4994258
    %v2781 = vmul.f32 %v2761, %v2780
    %v2782 = vadd.f32 %v2781, 1.0
    %v2783 = vrcp.pop %v2782
    %v2784 = vmul.f32 %v2782, %v2783
    %v2785 = vsub.f32 1.0, %v2784
    %v2786 = vmul.f32 %v2783, %v2785
    %v2787 = vadd.f32 %v2783, %v2786
    %vm2788 = vweird.f32 %v2782
    %vm2789 = vweird.f32 %v2783
    %vm2790 = vmor %vm2788, %vm2789
    %v2791 = vsel %vm2790, %v2783, %v2787
    %v2792 = vand.u32 2147483647, %v2782
    %vm2793 = vcmp.eq.f32.partialorder %v2792, 8.507059e+37
    %v2794 = vand.u32 %v2782, 2147483648
    %v2795 = vor.u32 1.1754944e-38, %v2794
    %v2796 = vsel %vm2793, %v2795, %v2791
    %v2797 = vmul.f32 %v2772, %v2796
    %v2798 = vmin.f32 %v2797, 1.0
    %v2799 = vmax.f32 %v2798, -1.0
    %v2800 = vmul.f32 %v474, %v474
    %v2801 = vmin.f32 16.0, %v2800
    %v2802 = vmul.f32 %v2801, 2.1237322e-06
    %v2803 = vadd.f32 %v2802, 0.00028619796
    %v2804 = vmul.f32 %v2801, %v2803
    %v2805 = vadd.f32 %v2804, 0.0036580483
    %v2806 = vmul.f32 %v2801, %v2805
    %v2807 = vadd.f32 %v2806, 0.05243302
    %v2808 = vmul.f32 %v2801, %v2807
    %v2809 = vadd.f32 %v2808, 0.18741608
    %v2810 = vmul.f32 %v2801, %v2809
    %v2811 = vadd.f32 %v2810, 1.1283791
    %v2812 = vmul.f32 %v474, %v2811
    %v2813 = vmul.f32 %v2801, 3.8918573e-05
    %v2814 = vadd.f32 %v2813, 0.001143296
    %v2815 = vmul.f32 %v2801, %v2814
    %v2816 = vadd.f32 %v2815, 0.014752088
    %v2817 = vmul.f32 %v2801, %v2816
    %v2818 = vadd.f32 %v2817, 0.112945676
    %v2819 = vmul.f32 %v2801, %v2818
    %v2820 = vadd.f32 %v2819, 0.4994258
    %v2821 = vmul.f32 %v2801, %v2820
    %v2822 = vadd.f32 %v2821, 1.0
    %v2823 = vrcp.pop %v2822
    %v2824 = vmul.f32 %v2822, %v2823
    %v2825 = vsub.f32 1.0, %v2824
    %v2826 = vmul.f32 %v2823, %v2825
    %v2827 = vadd.f32 %v2823, %v2826
    %vm2828 = vweird.f32 %v2822
    %vm2829 = vweird.f32 %v2823
    %vm2830 = vmor %vm2828, %vm2829
    %v2831 = vsel %vm2830, %v2823, %v2827
    %v2832 = vand.u32 2147483647, %v2822
    %vm2833 = vcmp.eq.f32.partialorder %v2832, 8.507059e+37
    %v2834 = vand.u32 %v2822, 2147483648
    %v2835 = vor.u32 1.1754944e-38, %v2834
    %v2836 = vsel %vm2833, %v2835, %v2831
    %v2837 = vmul.f32 %v2812, %v2836
    %v2838 = vmin.f32 %v2837, 1.0
    %v2839 = vmax.f32 %v2838, -1.0
    %v2840 = vmul.f32 %v475, %v475
    %v2841 = vmin.f32 16.0, %v2840
    %v2842 = vmul.f32 %v2841, 2.1237322e-06
    %v2843 = vadd.f32 %v2842, 0.00028619796
    %v2844 = vmul.f32 %v2841, %v2843
    %v2845 = vadd.f32 %v2844, 0.0036580483
    %v2846 = vmul.f32 %v2841, %v2845
    %v2847 = vadd.f32 %v2846, 0.05243302
    %v2848 = vmul.f32 %v2841, %v2847
    %v2849 = vadd.f32 %v2848, 0.18741608
    %v2850 = vmul.f32 %v2841, %v2849
    %v2851 = vadd.f32 %v2850, 1.1283791
    %v2852 = vmul.f32 %v475, %v2851
    %v2853 = vmul.f32 %v2841, 3.8918573e-05
    %v2854 = vadd.f32 %v2853, 0.001143296
    %v2855 = vmul.f32 %v2841, %v2854
    %v2856 = vadd.f32 %v2855, 0.014752088
    %v2857 = vmul.f32 %v2841, %v2856
    %v2858 = vadd.f32 %v2857, 0.112945676
    %v2859 = vmul.f32 %v2841, %v2858
    %v2860 = vadd.f32 %v2859, 0.4994258
    %v2861 = vmul.f32 %v2841, %v2860
    %v2862 = vadd.f32 %v2861, 1.0
    %v2863 = vrcp.pop %v2862
    %v2864 = vmul.f32 %v2862, %v2863
    %v2865 = vsub.f32 1.0, %v2864
    %v2866 = vmul.f32 %v2863, %v2865
    %v2867 = vadd.f32 %v2863, %v2866
    %vm2868 = vweird.f32 %v2862
    %vm2869 = vweird.f32 %v2863
    %vm2870 = vmor %vm2868, %vm2869
    %v2871 = vsel %vm2870, %v2863, %v2867
    %v2872 = vand.u32 2147483647, %v2862
    %vm2873 = vcmp.eq.f32.partialorder %v2872, 8.507059e+37
    %v2874 = vand.u32 %v2862, 2147483648
    %v2875 = vor.u32 1.1754944e-38, %v2874
    %v2876 = vsel %vm2873, %v2875, %v2871
    %v2877 = vmul.f32 %v2852, %v2876
    %v2878 = vmin.f32 %v2877, 1.0
    %v2879 = vmax.f32 %v2878, -1.0
    %v2880 = vmul.f32 %v476, %v476
    %v2881 = vmin.f32 16.0, %v2880
    %v2882 = vmul.f32 %v2881, 2.1237322e-06
    %v2883 = vadd.f32 %v2882, 0.00028619796
    %v2884 = vmul.f32 %v2881, %v2883
    %v2885 = vadd.f32 %v2884, 0.0036580483
    %v2886 = vmul.f32 %v2881, %v2885
    %v2887 = vadd.f32 %v2886, 0.05243302
    %v2888 = vmul.f32 %v2881, %v2887
    %v2889 = vadd.f32 %v2888, 0.18741608
    %v2890 = vmul.f32 %v2881, %v2889
    %v2891 = vadd.f32 %v2890, 1.1283791
    %v2892 = vmul.f32 %v476, %v2891
    %v2893 = vmul.f32 %v2881, 3.8918573e-05
    %v2894 = vadd.f32 %v2893, 0.001143296
    %v2895 = vmul.f32 %v2881, %v2894
    %v2896 = vadd.f32 %v2895, 0.014752088
    %v2897 = vmul.f32 %v2881, %v2896
    %v2898 = vadd.f32 %v2897, 0.112945676
    %v2899 = vmul.f32 %v2881, %v2898
    %v2900 = vadd.f32 %v2899, 0.4994258
    %v2901 = vmul.f32 %v2881, %v2900
    %v2902 = vadd.f32 %v2901, 1.0
    %v2903 = vrcp.pop %v2902
    %v2904 = vmul.f32 %v2902, %v2903
    %v2905 = vsub.f32 1.0, %v2904
    %v2906 = vmul.f32 %v2903, %v2905
    %v2907 = vadd.f32 %v2903, %v2906
    %vm2908 = vweird.f32 %v2902
    %vm2909 = vweird.f32 %v2903
    %vm2910 = vmor %vm2908, %vm2909
    %v2911 = vsel %vm2910, %v2903, %v2907
    %v2912 = vand.u32 2147483647, %v2902
    %vm2913 = vcmp.eq.f32.partialorder %v2912, 8.507059e+37
    %v2914 = vand.u32 %v2902, 2147483648
    %v2915 = vor.u32 1.1754944e-38, %v2914
    %v2916 = vsel %vm2913, %v2915, %v2911
    %v2917 = vmul.f32 %v2892, %v2916
    %v2918 = vmin.f32 %v2917, 1.0
    %v2919 = vmax.f32 %v2918, -1.0
    %v2920 = vmul.f32 %v477, %v477
    %v2921 = vmin.f32 16.0, %v2920
    %v2922 = vmul.f32 %v2921, 2.1237322e-06
    %v2923 = vadd.f32 %v2922, 0.00028619796
    %v2924 = vmul.f32 %v2921, %v2923
    %v2925 = vadd.f32 %v2924, 0.0036580483
    %v2926 = vmul.f32 %v2921, %v2925
    %v2927 = vadd.f32 %v2926, 0.05243302
    %v2928 = vmul.f32 %v2921, %v2927
    %v2929 = vadd.f32 %v2928, 0.18741608
    %v2930 = vmul.f32 %v2921, %v2929
    %v2931 = vadd.f32 %v2930, 1.1283791
    %v2932 = vmul.f32 %v477, %v2931
    %v2933 = vmul.f32 %v2921, 3.8918573e-05
    %v2934 = vadd.f32 %v2933, 0.001143296
    %v2935 = vmul.f32 %v2921, %v2934
    %v2936 = vadd.f32 %v2935, 0.014752088
    %v2937 = vmul.f32 %v2921, %v2936
    %v2938 = vadd.f32 %v2937, 0.112945676
    %v2939 = vmul.f32 %v2921, %v2938
    %v2940 = vadd.f32 %v2939, 0.4994258
    %v2941 = vmul.f32 %v2921, %v2940
    %v2942 = vadd.f32 %v2941, 1.0
    %v2943 = vrcp.pop %v2942
    %v2944 = vmul.f32 %v2942, %v2943
    %v2945 = vsub.f32 1.0, %v2944
    %v2946 = vmul.f32 %v2943, %v2945
    %v2947 = vadd.f32 %v2943, %v2946
    %vm2948 = vweird.f32 %v2942
    %vm2949 = vweird.f32 %v2943
    %vm2950 = vmor %vm2948, %vm2949
    %v2951 = vsel %vm2950, %v2943, %v2947
    %v2952 = vand.u32 2147483647, %v2942
    %vm2953 = vcmp.eq.f32.partialorder %v2952, 8.507059e+37
    %v2954 = vand.u32 %v2942, 2147483648
    %v2955 = vor.u32 1.1754944e-38, %v2954
    %v2956 = vsel %vm2953, %v2955, %v2951
    %v2957 = vmul.f32 %v2932, %v2956
    %v2958 = vmin.f32 %v2957, 1.0
    %v2959 = vmax.f32 %v2958, -1.0
    %v2960 = vmul.f32 %v478, %v478
    %v2961 = vmin.f32 16.0, %v2960
    %v2962 = vmul.f32 %v2961, 2.1237322e-06
    %v2963 = vadd.f32 %v2962, 0.00028619796
    %v2964 = vmul.f32 %v2961, %v2963
    %v2965 = vadd.f32 %v2964, 0.0036580483
    %v2966 = vmul.f32 %v2961, %v2965
    %v2967 = vadd.f32 %v2966, 0.05243302
    %v2968 = vmul.f32 %v2961, %v2967
    %v2969 = vadd.f32 %v2968, 0.18741608
    %v2970 = vmul.f32 %v2961, %v2969
    %v2971 = vadd.f32 %v2970, 1.1283791
    %v2972 = vmul.f32 %v478, %v2971
    %v2973 = vmul.f32 %v2961, 3.8918573e-05
    %v2974 = vadd.f32 %v2973, 0.001143296
    %v2975 = vmul.f32 %v2961, %v2974
    %v2976 = vadd.f32 %v2975, 0.014752088
    %v2977 = vmul.f32 %v2961, %v2976
    %v2978 = vadd.f32 %v2977, 0.112945676
    %v2979 = vmul.f32 %v2961, %v2978
    %v2980 = vadd.f32 %v2979, 0.4994258
    %v2981 = vmul.f32 %v2961, %v2980
    %v2982 = vadd.f32 %v2981, 1.0
    %v2983 = vrcp.pop %v2982
    %v2984 = vmul.f32 %v2982, %v2983
    %v2985 = vsub.f32 1.0, %v2984
    %v2986 = vmul.f32 %v2983, %v2985
    %v2987 = vadd.f32 %v2983, %v2986
    %vm2988 = vweird.f32 %v2982
    %vm2989 = vweird.f32 %v2983
    %vm2990 = vmor %vm2988, %vm2989
    %v2991 = vsel %vm2990, %v2983, %v2987
    %v2992 = vand.u32 2147483647, %v2982
    %vm2993 = vcmp.eq.f32.partialorder %v2992, 8.507059e+37
    %v2994 = vand.u32 %v2982, 2147483648
    %v2995 = vor.u32 1.1754944e-38, %v2994
    %v2996 = vsel %vm2993, %v2995, %v2991
    %v2997 = vmul.f32 %v2972, %v2996
    %v2998 = vmin.f32 %v2997, 1.0
    %v2999 = vmax.f32 %v2998, -1.0
    %v3000 = vmul.f32 %v479, %v479
    %v3001 = vmin.f32 16.0, %v3000
    %v3002 = vmul.f32 %v3001, 2.1237322e-06
    %v3003 = vadd.f32 %v3002, 0.00028619796
    %v3004 = vmul.f32 %v3001, %v3003
    %v3005 = vadd.f32 %v3004, 0.0036580483
    %v3006 = vmul.f32 %v3001, %v3005
    %v3007 = vadd.f32 %v3006, 0.05243302
    %v3008 = vmul.f32 %v3001, %v3007
    %v3009 = vadd.f32 %v3008, 0.18741608
    %v3010 = vmul.f32 %v3001, %v3009
    %v3011 = vadd.f32 %v3010, 1.1283791
    %v3012 = vmul.f32 %v479, %v3011
    %v3013 = vmul.f32 %v3001, 3.8918573e-05
    %v3014 = vadd.f32 %v3013, 0.001143296
    %v3015 = vmul.f32 %v3001, %v3014
    %v3016 = vadd.f32 %v3015, 0.014752088
    %v3017 = vmul.f32 %v3001, %v3016
    %v3018 = vadd.f32 %v3017, 0.112945676
    %v3019 = vmul.f32 %v3001, %v3018
    %v3020 = vadd.f32 %v3019, 0.4994258
    %v3021 = vmul.f32 %v3001, %v3020
    %v3022 = vadd.f32 %v3021, 1.0
    %v3023 = vrcp.pop %v3022
    %v3024 = vmul.f32 %v3022, %v3023
    %v3025 = vsub.f32 1.0, %v3024
    %v3026 = vmul.f32 %v3023, %v3025
    %v3027 = vadd.f32 %v3023, %v3026
    %vm3028 = vweird.f32 %v3022
    %vm3029 = vweird.f32 %v3023
    %vm3030 = vmor %vm3028, %vm3029
    %v3031 = vsel %vm3030, %v3023, %v3027
    %v3032 = vand.u32 2147483647, %v3022
    %vm3033 = vcmp.eq.f32.partialorder %v3032, 8.507059e+37
    %v3034 = vand.u32 %v3022, 2147483648
    %v3035 = vor.u32 1.1754944e-38, %v3034
    %v3036 = vsel %vm3033, %v3035, %v3031
    %v3037 = vmul.f32 %v3012, %v3036
    %v3038 = vmin.f32 %v3037, 1.0
    %v3039 = vmax.f32 %v3038, -1.0
    %v3040 = vadd.f32 %v519, 1.0
    %v3041 = vadd.f32 %v559, 1.0
    %v3042 = vadd.f32 %v599, 1.0
    %v3043 = vadd.f32 %v639, 1.0
    %v3044 = vadd.f32 %v679, 1.0
    %v3045 = vadd.f32 %v719, 1.0
    %v3046 = vadd.f32 %v759, 1.0
    %v3047 = vadd.f32 %v799, 1.0
    %v3048 = vadd.f32 %v839, 1.0
    %v3049 = vadd.f32 %v879, 1.0
    %v3050 = vadd.f32 %v919, 1.0
    %v3051 = vadd.f32 %v959, 1.0
    %v3052 = vadd.f32 %v999, 1.0
    %v3053 = vadd.f32 %v1039, 1.0
    %v3054 = vadd.f32 %v1079, 1.0
    %v3055 = vadd.f32 %v1119, 1.0
    %v3056 = vadd.f32 %v1159, 1.0
    %v3057 = vadd.f32 %v1199, 1.0
    %v3058 = vadd.f32 %v1239, 1.0
    %v3059 = vadd.f32 %v1279, 1.0
    %v3060 = vadd.f32 %v1319, 1.0
    %v3061 = vadd.f32 %v1359, 1.0
    %v3062 = vadd.f32 %v1399, 1.0
    %v3063 = vadd.f32 %v1439, 1.0
    %v3064 = vadd.f32 %v1479, 1.0
    %v3065 = vadd.f32 %v1519, 1.0
    %v3066 = vadd.f32 %v1559, 1.0
    %v3067 = vadd.f32 %v1599, 1.0
    %v3068 = vadd.f32 %v1639, 1.0
    %v3069 = vadd.f32 %v1679, 1.0
    %v3070 = vadd.f32 %v1719, 1.0
    %v3071 = vadd.f32 %v1759, 1.0
    %v3072 = vadd.f32 %v1799, 1.0
    %v3073 = vadd.f32 %v1839, 1.0
    %v3074 = vadd.f32 %v1879, 1.0
    %v3075 = vadd.f32 %v1919, 1.0
    %v3076 = vadd.f32 %v1959, 1.0
    %v3077 = vadd.f32 %v1999, 1.0
    %v3078 = vadd.f32 %v2039, 1.0
    %v3079 = vadd.f32 %v2079, 1.0
    %v3080 = vadd.f32 %v2119, 1.0
    %v3081 = vadd.f32 %v2159, 1.0
    %v3082 = vadd.f32 %v2199, 1.0
    %v3083 = vadd.f32 %v2239, 1.0
    %v3084 = vadd.f32 %v2279, 1.0
    %v3085 = vadd.f32 %v2319, 1.0
    %v3086 = vadd.f32 %v2359, 1.0
    %v3087 = vadd.f32 %v2399, 1.0
    %v3088 = vadd.f32 %v2439, 1.0
    %v3089 = vadd.f32 %v2479, 1.0
    %v3090 = vadd.f32 %v2519, 1.0
    %v3091 = vadd.f32 %v2559, 1.0
    %v3092 = vadd.f32 %v2599, 1.0
    %v3093 = vadd.f32 %v2639, 1.0
    %v3094 = vadd.f32 %v2679, 1.0
    %v3095 = vadd.f32 %v2719, 1.0
    %v3096 = vadd.f32 %v2759, 1.0
    %v3097 = vadd.f32 %v2799, 1.0
    %v3098 = vadd.f32 %v2839, 1.0
    %v3099 = vadd.f32 %v2879, 1.0
    %v3100 = vadd.f32 %v2919, 1.0
    %v3101 = vadd.f32 %v2959, 1.0
    %v3102 = vadd.f32 %v2999, 1.0
    %v3103 = vadd.f32 %v3039, 1.0
    %v3104 = vmul.f32 %v352, %v3040
    %v3105 = vmul.f32 %v353, %v3041
    %v3106 = vmul.f32 %v354, %v3042
    %v3107 = vmul.f32 %v355, %v3043
    %v3108 = vmul.f32 %v356, %v3044
    %v3109 = vmul.f32 %v357, %v3045
    %v3110 = vmul.f32 %v358, %v3046
    %v3111 = vmul.f32 %v359, %v3047
    %v3112 = vmul.f32 %v360, %v3048
    %v3113 = vmul.f32 %v361, %v3049
    %v3114 = vmul.f32 %v362, %v3050
    %v3115 = vmul.f32 %v363, %v3051
    %v3116 = vmul.f32 %v364, %v3052
    %v3117 = vmul.f32 %v365, %v3053
    %v3118 = vmul.f32 %v366, %v3054
    %v3119 = vmul.f32 %v367, %v3055
    %v3120 = vmul.f32 %v368, %v3056
    %v3121 = vmul.f32 %v369, %v3057
    %v3122 = vmul.f32 %v370, %v3058
    %v3123 = vmul.f32 %v371, %v3059
    %v3124 = vmul.f32 %v372, %v3060
    %v3125 = vmul.f32 %v373, %v3061
    %v3126 = vmul.f32 %v374, %v3062
    %v3127 = vmul.f32 %v375, %v3063
    %v3128 = vmul.f32 %v376, %v3064
    %v3129 = vmul.f32 %v377, %v3065
    %v3130 = vmul.f32 %v378, %v3066
    %v3131 = vmul.f32 %v379, %v3067
    %v3132 = vmul.f32 %v380, %v3068
    %v3133 = vmul.f32 %v381, %v3069
    %v3134 = vmul.f32 %v382, %v3070
    %v3135 = vmul.f32 %v383, %v3071
    %v3136 = vmul.f32 %v384, %v3072
    %v3137 = vmul.f32 %v385, %v3073
    %v3138 = vmul.f32 %v386, %v3074
    %v3139 = vmul.f32 %v387, %v3075
    %v3140 = vmul.f32 %v388, %v3076
    %v3141 = vmul.f32 %v389, %v3077
    %v3142 = vmul.f32 %v390, %v3078
    %v3143 = vmul.f32 %v391, %v3079
    %v3144 = vmul.f32 %v392, %v3080
    %v3145 = vmul.f32 %v393, %v3081
    %v3146 = vmul.f32 %v394, %v3082
    %v3147 = vmul.f32 %v395, %v3083
    %v3148 = vmul.f32 %v396, %v3084
    %v3149 = vmul.f32 %v397, %v3085
    %v3150 = vmul.f32 %v398, %v3086
    %v3151 = vmul.f32 %v399, %v3087
    %v3152 = vmul.f32 %v400, %v3088
    %v3153 = vmul.f32 %v401, %v3089
    %v3154 = vmul.f32 %v402, %v3090
    %v3155 = vmul.f32 %v403, %v3091
    %v3156 = vmul.f32 %v404, %v3092
    %v3157 = vmul.f32 %v405, %v3093
    %v3158 = vmul.f32 %v406, %v3094
    %v3159 = vmul.f32 %v407, %v3095
    %v3160 = vmul.f32 %v408, %v3096
    %v3161 = vmul.f32 %v409, %v3097
    %v3162 = vmul.f32 %v410, %v3098
    %v3163 = vmul.f32 %v411, %v3099
    %v3164 = vmul.f32 %v412, %v3100
    %v3165 = vmul.f32 %v413, %v3101
    %v3166 = vmul.f32 %v414, %v3102
    %v3167 = vmul.f32 %v415, %v3103
    %v3168 = vld [vmem:[#allocation7] sm:$0xff]
    %v3169 = vld [vmem:[#allocation7 + $0x8] sm:$0xff]
    %v3170 = vld [vmem:[#allocation7 + $0x10] sm:$0xff]
    %v3171 = vld [vmem:[#allocation7 + $0x18] sm:$0xff]
    %v3172 = vld [vmem:[#allocation7 + $0x20] sm:$0xff]
    %v3173 = vld [vmem:[#allocation7 + $0x28] sm:$0xff]
    %v3174 = vld [vmem:[#allocation7 + $0x30] sm:$0xff]
    %v3175 = vld [vmem:[#allocation7 + $0x38] sm:$0xff]
    %v3176 = vld [vmem:[#allocation7 + $0x40] sm:$0xff]
    %v3177 = vld [vmem:[#allocation7 + $0x48] sm:$0xff]
    %v3178 = vld [vmem:[#allocation7 + $0x50] sm:$0xff]
    %v3179 = vld [vmem:[#allocation7 + $0x58] sm:$0xff]
    %v3180 = vld [vmem:[#allocation7 + $0x60] sm:$0xff]
    %v3181 = vld [vmem:[#allocation7 + $0x68] sm:$0xff]
    %v3182 = vld [vmem:[#allocation7 + $0x70] sm:$0xff]
    %v3183 = vld [vmem:[#allocation7 + $0x78] sm:$0xff]
    %v3184 = vld [vmem:[#allocation7 + $0x80] sm:$0xff]
    %v3185 = vld [vmem:[#allocation7 + $0x88] sm:$0xff]
    %v3186 = vld [vmem:[#allocation7 + $0x90] sm:$0xff]
    %v3187 = vld [vmem:[#allocation7 + $0x98] sm:$0xff]
    %v3188 = vld [vmem:[#allocation7 + $0xa0] sm:$0xff]
    %v3189 = vld [vmem:[#allocation7 + $0xa8] sm:$0xff]
    %v3190 = vld [vmem:[#allocation7 + $0xb0] sm:$0xff]
    %v3191 = vld [vmem:[#allocation7 + $0xb8] sm:$0xff]
    %v3192 = vld [vmem:[#allocation7 + $0xc0] sm:$0xff]
    %v3193 = vld [vmem:[#allocation7 + $0xc8] sm:$0xff]
    %v3194 = vld [vmem:[#allocation7 + $0xd0] sm:$0xff]
    %v3195 = vld [vmem:[#allocation7 + $0xd8] sm:$0xff]
    %v3196 = vld [vmem:[#allocation7 + $0xe0] sm:$0xff]
    %v3197 = vld [vmem:[#allocation7 + $0xe8] sm:$0xff]
    %v3198 = vld [vmem:[#allocation7 + $0xf0] sm:$0xff]
    %v3199 = vld [vmem:[#allocation7 + $0xf8] sm:$0xff]
    %3200 = vmatpush.msra.mxu0 %v3183
    %3201 = vmatpush.msra.mxu0 %v3182
    %3202 = vmatpush.msra.mxu0 %v3181
    %3203 = vmatpush.msra.mxu0 %v3180
    %3204 = vmatpush.msra.mxu0 %v3179
    %3205 = vmatpush.msra.mxu0 %v3178
    %3206 = vmatpush.msra.mxu0 %v3177
    %3207 = vmatpush.msra.mxu0 %v3176
    %3208 = vmatpush.msra.mxu0 %v3175
    %3209 = vmatpush.msra.mxu0 %v3174
    %3210 = vmatpush.msra.mxu0 %v3173
    %3211 = vmatpush.msra.mxu0 %v3172
    %3212 = vmatpush.msra.mxu0 %v3171
    %3213 = vmatpush.msra.mxu0 %v3170
    %3214 = vmatpush.msra.mxu0 %v3169
    %3215 = vmatpush.msra.mxu0 %v3168
    %3216 = vmatmul.f32.gmra.mxu0 %v3104
    %v3217 = vpop.f32.mrf.mxu0
    %v3218 = vadd.f32 0.0, %v3217
    %3219 = vmatmul.f32.gmra.mxu0 %v3106
    %v3220 = vpop.f32.mrf.mxu0
    %v3221 = vadd.f32 0.0, %v3220
    %3222 = vmatmul.f32.gmra.mxu0 %v3108
    %v3223 = vpop.f32.mrf.mxu0
    %v3224 = vadd.f32 0.0, %v3223
    %3225 = vmatmul.f32.gmra.mxu0 %v3110
    %v3226 = vpop.f32.mrf.mxu0
    %v3227 = vadd.f32 0.0, %v3226
    %3228 = vmatmul.f32.gmra.mxu0 %v3112
    %v3229 = vpop.f32.mrf.mxu0
    %v3230 = vadd.f32 0.0, %v3229
    %3231 = vmatmul.f32.gmra.mxu0 %v3114
    %v3232 = vpop.f32.mrf.mxu0
    %v3233 = vadd.f32 0.0, %v3232
    %3234 = vmatmul.f32.gmra.mxu0 %v3116
    %v3235 = vpop.f32.mrf.mxu0
    %v3236 = vadd.f32 0.0, %v3235
    %3237 = vmatmul.f32.gmra.mxu0 %v3118
    %v3238 = vpop.f32.mrf.mxu0
    %v3239 = vadd.f32 0.0, %v3238
    %3240 = vmatmul.f32.gmra.mxu0 %v3120
    %v3241 = vpop.f32.mrf.mxu0
    %v3242 = vadd.f32 0.0, %v3241
    %3243 = vmatmul.f32.gmra.mxu0 %v3122
    %v3244 = vpop.f32.mrf.mxu0
    %v3245 = vadd.f32 0.0, %v3244
    %3246 = vmatmul.f32.gmra.mxu0 %v3124
    %v3247 = vpop.f32.mrf.mxu0
    %v3248 = vadd.f32 0.0, %v3247
    %3249 = vmatmul.f32.gmra.mxu0 %v3126
    %v3250 = vpop.f32.mrf.mxu0
    %v3251 = vadd.f32 0.0, %v3250
    %3252 = vmatmul.f32.gmra.mxu0 %v3128
    %v3253 = vpop.f32.mrf.mxu0
    %v3254 = vadd.f32 0.0, %v3253
    %3255 = vmatmul.f32.gmra.mxu0 %v3130
    %v3256 = vpop.f32.mrf.mxu0
    %v3257 = vadd.f32 0.0, %v3256
    %3258 = vmatmul.f32.gmra.mxu0 %v3132
    %v3259 = vpop.f32.mrf.mxu0
    %v3260 = vadd.f32 0.0, %v3259
    %3261 = vmatmul.f32.gmra.mxu0 %v3134
    %v3262 = vpop.f32.mrf.mxu0
    %v3263 = vadd.f32 0.0, %v3262
    %3264 = vmatmul.f32.gmra.mxu0 %v3136
    %v3265 = vpop.f32.mrf.mxu0
    %v3266 = vadd.f32 0.0, %v3265
    %3267 = vmatmul.f32.gmra.mxu0 %v3138
    %v3268 = vpop.f32.mrf.mxu0
    %v3269 = vadd.f32 0.0, %v3268
    %3270 = vmatmul.f32.gmra.mxu0 %v3140
    %v3271 = vpop.f32.mrf.mxu0
    %v3272 = vadd.f32 0.0, %v3271
    %3273 = vmatmul.f32.gmra.mxu0 %v3142
    %v3274 = vpop.f32.mrf.mxu0
    %v3275 = vadd.f32 0.0, %v3274
    %3276 = vmatmul.f32.gmra.mxu0 %v3144
    %v3277 = vpop.f32.mrf.mxu0
    %v3278 = vadd.f32 0.0, %v3277
    %3279 = vmatmul.f32.gmra.mxu0 %v3146
    %v3280 = vpop.f32.mrf.mxu0
    %v3281 = vadd.f32 0.0, %v3280
    %3282 = vmatmul.f32.gmra.mxu0 %v3148
    %v3283 = vpop.f32.mrf.mxu0
    %v3284 = vadd.f32 0.0, %v3283
    %3285 = vmatmul.f32.gmra.mxu0 %v3150
    %v3286 = vpop.f32.mrf.mxu0
    %v3287 = vadd.f32 0.0, %v3286
    %3288 = vmatmul.f32.gmra.mxu0 %v3152
    %v3289 = vpop.f32.mrf.mxu0
    %v3290 = vadd.f32 0.0, %v3289
    %3291 = vmatmul.f32.gmra.mxu0 %v3154
    %v3292 = vpop.f32.mrf.mxu0
    %v3293 = vadd.f32 0.0, %v3292
    %3294 = vmatmul.f32.gmra.mxu0 %v3156
    %v3295 = vpop.f32.mrf.mxu0
    %v3296 = vadd.f32 0.0, %v3295
    %3297 = vmatmul.f32.gmra.mxu0 %v3158
    %v3298 = vpop.f32.mrf.mxu0
    %v3299 = vadd.f32 0.0, %v3298
    %3300 = vmatmul.f32.gmra.mxu0 %v3160
    %v3301 = vpop.f32.mrf.mxu0
    %v3302 = vadd.f32 0.0, %v3301
    %3303 = vmatmul.f32.gmra.mxu0 %v3162
    %v3304 = vpop.f32.mrf.mxu0
    %v3305 = vadd.f32 0.0, %v3304
    %3306 = vmatmul.f32.gmra.mxu0 %v3164
    %v3307 = vpop.f32.mrf.mxu0
    %v3308 = vadd.f32 0.0, %v3307
    %3309 = vmatmul.f32.gmra.mxu0 %v3166
    %v3310 = vpop.f32.mrf.mxu0
    %v3311 = vadd.f32 0.0, %v3310
    %3312 = vdwg.mxu0
    %3313 = vmatpush.msra.mxu0 %v3199
    %3314 = vmatpush.msra.mxu0 %v3198
    %3315 = vmatpush.msra.mxu0 %v3197
    %3316 = vmatpush.msra.mxu0 %v3196
    %3317 = vmatpush.msra.mxu0 %v3195
    %3318 = vmatpush.msra.mxu0 %v3194
    %3319 = vmatpush.msra.mxu0 %v3193
    %3320 = vmatpush.msra.mxu0 %v3192
    %3321 = vmatpush.msra.mxu0 %v3191
    %3322 = vmatpush.msra.mxu0 %v3190
    %3323 = vmatpush.msra.mxu0 %v3189
    %3324 = vmatpush.msra.mxu0 %v3188
    %3325 = vmatpush.msra.mxu0 %v3187
    %3326 = vmatpush.msra.mxu0 %v3186
    %3327 = vmatpush.msra.mxu0 %v3185
    %3328 = vmatpush.msra.mxu0 %v3184
    %3329 = vmatmul.f32.gmra.mxu0 %v3105
    %v3330 = vpop.f32.mrf.mxu0
    %v3331 = vadd.f32 %v3218, %v3330
    %3332 = vmatmul.f32.gmra.mxu0 %v3107
    %v3333 = vpop.f32.mrf.mxu0
    %v3334 = vadd.f32 %v3221, %v3333
    %3335 = vmatmul.f32.gmra.mxu0 %v3109
    %v3336 = vpop.f32.mrf.mxu0
    %v3337 = vadd.f32 %v3224, %v3336
    %3338 = vmatmul.f32.gmra.mxu0 %v3111
    %v3339 = vpop.f32.mrf.mxu0
    %v3340 = vadd.f32 %v3227, %v3339
    %3341 = vmatmul.f32.gmra.mxu0 %v3113
    %v3342 = vpop.f32.mrf.mxu0
    %v3343 = vadd.f32 %v3230, %v3342
    %3344 = vmatmul.f32.gmra.mxu0 %v3115
    %v3345 = vpop.f32.mrf.mxu0
    %v3346 = vadd.f32 %v3233, %v3345
    %3347 = vmatmul.f32.gmra.mxu0 %v3117
    %v3348 = vpop.f32.mrf.mxu0
    %v3349 = vadd.f32 %v3236, %v3348
    %3350 = vmatmul.f32.gmra.mxu0 %v3119
    %v3351 = vpop.f32.mrf.mxu0
    %v3352 = vadd.f32 %v3239, %v3351
    %3353 = vmatmul.f32.gmra.mxu0 %v3121
    %v3354 = vpop.f32.mrf.mxu0
    %v3355 = vadd.f32 %v3242, %v3354
    %3356 = vmatmul.f32.gmra.mxu0 %v3123
    %v3357 = vpop.f32.mrf.mxu0
    %v3358 = vadd.f32 %v3245, %v3357
    %3359 = vmatmul.f32.gmra.mxu0 %v3125
    %v3360 = vpop.f32.mrf.mxu0
    %v3361 = vadd.f32 %v3248, %v3360
    %3362 = vmatmul.f32.gmra.mxu0 %v3127
    %v3363 = vpop.f32.mrf.mxu0
    %v3364 = vadd.f32 %v3251, %v3363
    %3365 = vmatmul.f32.gmra.mxu0 %v3129
    %v3366 = vpop.f32.mrf.mxu0
    %v3367 = vadd.f32 %v3254, %v3366
    %3368 = vmatmul.f32.gmra.mxu0 %v3131
    %v3369 = vpop.f32.mrf.mxu0
    %v3370 = vadd.f32 %v3257, %v3369
    %3371 = vmatmul.f32.gmra.mxu0 %v3133
    %v3372 = vpop.f32.mrf.mxu0
    %v3373 = vadd.f32 %v3260, %v3372
    %3374 = vmatmul.f32.gmra.mxu0 %v3135
    %v3375 = vpop.f32.mrf.mxu0
    %v3376 = vadd.f32 %v3263, %v3375
    %3377 = vmatmul.f32.gmra.mxu0 %v3137
    %v3378 = vpop.f32.mrf.mxu0
    %v3379 = vadd.f32 %v3266, %v3378
    %3380 = vmatmul.f32.gmra.mxu0 %v3139
    %v3381 = vpop.f32.mrf.mxu0
    %v3382 = vadd.f32 %v3269, %v3381
    %3383 = vmatmul.f32.gmra.mxu0 %v3141
    %v3384 = vpop.f32.mrf.mxu0
    %v3385 = vadd.f32 %v3272, %v3384
    %3386 = vmatmul.f32.gmra.mxu0 %v3143
    %v3387 = vpop.f32.mrf.mxu0
    %v3388 = vadd.f32 %v3275, %v3387
    %3389 = vmatmul.f32.gmra.mxu0 %v3145
    %v3390 = vpop.f32.mrf.mxu0
    %v3391 = vadd.f32 %v3278, %v3390
    %3392 = vmatmul.f32.gmra.mxu0 %v3147
    %v3393 = vpop.f32.mrf.mxu0
    %v3394 = vadd.f32 %v3281, %v3393
    %3395 = vmatmul.f32.gmra.mxu0 %v3149
    %v3396 = vpop.f32.mrf.mxu0
    %v3397 = vadd.f32 %v3284, %v3396
    %3398 = vmatmul.f32.gmra.mxu0 %v3151
    %v3399 = vpop.f32.mrf.mxu0
    %v3400 = vadd.f32 %v3287, %v3399
    %3401 = vmatmul.f32.gmra.mxu0 %v3153
    %v3402 = vpop.f32.mrf.mxu0
    %v3403 = vadd.f32 %v3290, %v3402
    %3404 = vmatmul.f32.gmra.mxu0 %v3155
    %v3405 = vpop.f32.mrf.mxu0
    %v3406 = vadd.f32 %v3293, %v3405
    %3407 = vmatmul.f32.gmra.mxu0 %v3157
    %v3408 = vpop.f32.mrf.mxu0
    %v3409 = vadd.f32 %v3296, %v3408
    %3410 = vmatmul.f32.gmra.mxu0 %v3159
    %v3411 = vpop.f32.mrf.mxu0
    %v3412 = vadd.f32 %v3299, %v3411
    %3413 = vmatmul.f32.gmra.mxu0 %v3161
    %v3414 = vpop.f32.mrf.mxu0
    %v3415 = vadd.f32 %v3302, %v3414
    %3416 = vmatmul.f32.gmra.mxu0 %v3163
    %v3417 = vpop.f32.mrf.mxu0
    %v3418 = vadd.f32 %v3305, %v3417
    %3419 = vmatmul.f32.gmra.mxu0 %v3165
    %v3420 = vpop.f32.mrf.mxu0
    %v3421 = vadd.f32 %v3308, %v3420
    %3422 = vmatmul.f32.gmra.mxu0 %v3167
    %v3423 = vpop.f32.mrf.mxu0
    %v3424 = vadd.f32 %v3311, %v3423
    %3425 = vdwg.mxu0
    %3426 = vst [vmem:[#allocation8] sm:$0xff] %v3331
    %3427 = vst [vmem:[#allocation8 + $0x8] sm:$0xff] %v3334
    %3428 = vst [vmem:[#allocation8 + $0x10] sm:$0xff] %v3337
    %3429 = vst [vmem:[#allocation8 + $0x18] sm:$0xff] %v3340
    %3430 = vst [vmem:[#allocation8 + $0x20] sm:$0xff] %v3343
    %3431 = vst [vmem:[#allocation8 + $0x28] sm:$0xff] %v3346
    %3432 = vst [vmem:[#allocation8 + $0x30] sm:$0xff] %v3349
    %3433 = vst [vmem:[#allocation8 + $0x38] sm:$0xff] %v3352
    %3434 = vst [vmem:[#allocation8 + $0x40] sm:$0xff] %v3355
    %3435 = vst [vmem:[#allocation8 + $0x48] sm:$0xff] %v3358
    %3436 = vst [vmem:[#allocation8 + $0x50] sm:$0xff] %v3361
    %3437 = vst [vmem:[#allocation8 + $0x58] sm:$0xff] %v3364
    %3438 = vst [vmem:[#allocation8 + $0x60] sm:$0xff] %v3367
    %3439 = vst [vmem:[#allocation8 + $0x68] sm:$0xff] %v3370
    %3440 = vst [vmem:[#allocation8 + $0x70] sm:$0xff] %v3373
    %3441 = vst [vmem:[#allocation8 + $0x78] sm:$0xff] %v3376
    %3442 = vst [vmem:[#allocation8 + $0x80] sm:$0xff] %v3379
    %3443 = vst [vmem:[#allocation8 + $0x88] sm:$0xff] %v3382
    %3444 = vst [vmem:[#allocation8 + $0x90] sm:$0xff] %v3385
    %3445 = vst [vmem:[#allocation8 + $0x98] sm:$0xff] %v3388
    %3446 = vst [vmem:[#allocation8 + $0xa0] sm:$0xff] %v3391
    %3447 = vst [vmem:[#allocation8 + $0xa8] sm:$0xff] %v3394
    %3448 = vst [vmem:[#allocation8 + $0xb0] sm:$0xff] %v3397
    %3449 = vst [vmem:[#allocation8 + $0xb8] sm:$0xff] %v3400
    %3450 = vst [vmem:[#allocation8 + $0xc0] sm:$0xff] %v3403
    %3451 = vst [vmem:[#allocation8 + $0xc8] sm:$0xff] %v3406
    %3452 = vst [vmem:[#allocation8 + $0xd0] sm:$0xff] %v3409
    %3453 = vst [vmem:[#allocation8 + $0xd8] sm:$0xff] %v3412
    %3454 = vst [vmem:[#allocation8 + $0xe0] sm:$0xff] %v3415
    %3455 = vst [vmem:[#allocation8 + $0xe8] sm:$0xff] %v3418
    %3456 = vst [vmem:[#allocation8 + $0xf0] sm:$0xff] %v3421
    %3457 = vst [vmem:[#allocation8 + $0xf8] sm:$0xff] %v3424
    // Predicated region
    $region26: #{tpu_custom_call.1} parent=1 // pred_check
      _
    $region27: #{tpu_custom_call.1} parent=1 // pred_check_branch
      %3459 = sbr.rel (0) target = $region29
    $region28: #{tpu_custom_call.1} parent=1 // pred_region
      %3461 = vsyncadd [#allocation4], 0
      %s3462 = sshll.u32 [#allocation8], 4
      %s3463 = int_to_ptr.vmem [resolvable:$true] %s3462
      %s3464 = sshll.u32 %s3, 4
      %s3465 = int_to_ptr.hbm [resolvable:$true] %s3464
      %3470 = dma.vmem_to_hbm [thread:$0]  %s3463, 4096, %s3465, [#allocation4], 128, 128, 8
    $region29: #{tpu_custom_call.1} parent=1 // pred_fallthru
      _
    // Predicated region
    $region30: #{tpu_custom_call.1} parent=1 // pred_check
      _
    $region31: #{tpu_custom_call.1} parent=1 // pred_check_branch
      %3472 = sbr.rel (0) target = $region33
    $region32: #{tpu_custom_call.1} parent=1 // pred_region
      %3474 = dma.done [#allocation4], 4096
    $region33: #{tpu_custom_call.1} parent=1 // pred_fallthru
      _
    %3475 = vsyncpa [#allocation3], 1
    %3476 = vsyncpa [#allocation6], 1
    %3477 = vsyncpa [#allocation4], 1

</llo_original>
